<compile_context>
chip_gen: v7x
topology: tpu7x:2x2x1
jax: 0.10.0
libtpu: 0.0.40
codegen_flags: <defaults>
</compile_context>

<pallas_src>
import functools

import jax
import jax.numpy as jnp
from jax import lax
from jax.experimental import pallas as pl
from jax.experimental.pallas import tpu as pltpu

LSTM_UNITS = 8
BN_EPS = 1e-5


def _tree_sum(terms):
    """Balanced add tree (shorter dependence chain than a left fold)."""
    while len(terms) > 1:
        nxt = [terms[i] + terms[i + 1] for i in range(0, len(terms) - 1, 2)]
        if len(terms) % 2:
            nxt.append(terms[-1])
        terms = nxt
    return terms[0]


# ----------------------------------------------------------------------------
# Fused kernel
# ----------------------------------------------------------------------------
def _mlstm_fcn_kernel(
        # inputs
        xl_ref,     # (T*B, V)   time-major LSTM input
        wih_ref,    # (V, 4H)    LSTM input weights, gate order (i, f, g, o)
        whh_ref,    # (H, 4H)    LSTM recurrent weights
        bl_ref,     # (1, 4H)    LSTM bias (b_ih + b_hh folded)
        p1_ref,     # (B*T, K1*V) conv1 im2col patches (built host-side)
        cw1_ref, cs1_ref, cb1_ref,    # conv1 weight (K1*V,128), BN scale/shift
        sw1a_ref, sw1b_ref,           # SE1 fc weights (128,8), (8,128)
        cw2_hbm,                      # (K2*128, 256) conv2 weight, raw HBM ref
        cs2_ref, cb2_ref,
        sw2a_ref, sw2b_ref,           # SE2 (256,16), (16,256)
        cw3_hbm,                      # (K3*256, 128) conv3 weight, raw HBM ref
        cs3_ref, cb3_ref,
        fwl_ref,    # (H, nbc)   final FC rows acting on the LSTM features
        fwc_ref,    # (128, nbc) final FC rows acting on the pooled conv feats
        fb_ref,     # (1, nbc)
        # output
        o_ref,      # (B, nbc)
        # scratch
        cw2_v,      # VMEM copy of conv2 weight
        cw3_v,      # VMEM copy of conv3 weight
        a1p_ref,    # (B, 32, C1) halo-padded conv2 input
        a2p_ref,    # (B, 32, C2) halo-padded conv3 input
        ic2_ref,    # (B*T, K2*C1) conv2 im2col patches
        ic3_ref,    # (B*T, K3*C2) conv3 im2col patches
        sem,        # DMA semaphores (2,)
        *, B, T, H, K2, K3, C1, C2, OFF):
    f32 = jnp.float32

    # ---- Kick off the big conv-weight DMAs; they overlap LSTM/conv1/SE1 ----
    cp2 = pltpu.make_async_copy(cw2_hbm, cw2_v, sem.at[0])
    cp3 = pltpu.make_async_copy(cw3_hbm, cw3_v, sem.at[1])
    cp2.start()
    cp3.start()

    # ---- Zero only the halo rows of the padded activation buffers (once) ----
    tail1 = a1p_ref.shape[1] - OFF - T
    tail2 = a2p_ref.shape[1] - OFF - T
    for b in range(B):
        a1p_ref[b, 0:OFF, :] = jnp.zeros((OFF, C1), f32)
        a1p_ref[b, OFF + T:, :] = jnp.zeros((tail1, C1), f32)
        a2p_ref[b, 0:OFF, :] = jnp.zeros((OFF, C2), f32)
        a2p_ref[b, OFF + T:, :] = jnp.zeros((tail2, C2), f32)

    # ===================== LSTM branch (VPU recurrence) =====================
    # Hoisted input projection (+ bias) for all timesteps: one MXU call,
    # kept as a value so the per-step slices never round-trip through VMEM.
    xg = (jnp.dot(xl_ref[...], wih_ref[...], preferred_element_type=f32)
          + bl_ref[...])                                   # (T*B, 4H)
    whh = whh_ref[...]
    whh_rows = [jnp.broadcast_to(whh[j:j + 1, :], (B, 4 * H))
                for j in range(H)]                         # hoisted broadcasts
    h = jnp.zeros((B, H), f32)
    c = jnp.zeros((B, H), f32)
    for t in range(T):  # static trip count -> fully unrolled serial recurrence
        # h @ W_hh as H broadcast multiply-adds on the VPU (no MXU round trip)
        rec = _tree_sum([h[:, j:j + 1] * whh_rows[j] for j in range(H)])
        g = xg[t * B:(t + 1) * B, :] + rec                 # (B, 4H)
        sg = jax.nn.sigmoid(g)                             # one EUP pass
        tg = jnp.tanh(g)                                   # one EUP pass
        c = sg[:, H:2 * H] * c + sg[:, 0:H] * tg[:, 2 * H:3 * H]
        h = sg[:, 3 * H:4 * H] * jnp.tanh(c)
    # Dropout(0.8) on the LSTM output: identity in inference mode.

    # ===================== FCN branch =====================
    def block_means(y):       # (B*T, C) -> (B, C), per-batch time mean
        return jnp.concatenate(
            [jnp.mean(y[b * T:(b + 1) * T, :], axis=0, keepdims=True)
             for b in range(B)], axis=0)

    # ---- conv1 + BN + ReLU (patches prebuilt on host) ----
    y1 = jnp.dot(p1_ref[...], cw1_ref[...], preferred_element_type=f32)
    y1 = jnp.maximum(y1 * cs1_ref[...] + cb1_ref[...], 0.0)       # (B*T, C1)

    # ---- SE1 (batched over B) -> write into halo-padded conv2 input ----
    m1 = block_means(y1)
    z1 = jnp.maximum(jnp.dot(m1, sw1a_ref[...], preferred_element_type=f32), 0.0)
    s1 = jax.nn.sigmoid(jnp.dot(z1, sw1b_ref[...], preferred_element_type=f32))
    for b in range(B):
        a1p_ref[b, OFF:OFF + T, :] = y1[b * T:(b + 1) * T, :] * s1[b:b + 1, :]

    # ---- conv2: im2col from halo buffer (full-width aligned copies) ----
    left2 = (K2 - 1) // 2
    for b in range(B):
        for k in range(K2):
            src = OFF - left2 + k
            ic2_ref[b * T:(b + 1) * T, k * C1:(k + 1) * C1] = (
                a1p_ref[b, src:src + T, :])
    cp2.wait()
    y2 = jnp.dot(ic2_ref[...], cw2_v[...], preferred_element_type=f32)
    y2 = jnp.maximum(y2 * cs2_ref[...] + cb2_ref[...], 0.0)       # (B*T, C2)

    # ---- SE2 ----
    m2 = block_means(y2)
    z2 = jnp.maximum(jnp.dot(m2, sw2a_ref[...], preferred_element_type=f32), 0.0)
    s2 = jax.nn.sigmoid(jnp.dot(z2, sw2b_ref[...], preferred_element_type=f32))
    for b in range(B):
        a2p_ref[b, OFF:OFF + T, :] = y2[b * T:(b + 1) * T, :] * s2[b:b + 1, :]

    # ---- conv3 ----
    left3 = (K3 - 1) // 2
    for b in range(B):
        for k in range(K3):
            src = OFF - left3 + k
            ic3_ref[b * T:(b + 1) * T, k * C2:(k + 1) * C2] = (
                a2p_ref[b, src:src + T, :])
    cp3.wait()
    y3 = jnp.dot(ic3_ref[...], cw3_v[...], preferred_element_type=f32)
    y3 = jnp.maximum(y3 * cs3_ref[...] + cb3_ref[...], 0.0)       # (B*T, 128)

    # ---- Global average pool over time: per-batch sublane mean (XLU) ----
    pooled = block_means(y3)                                       # (B, 128)

    # ---- Final FC, fused: concat([h, pooled]) @ W == h@W[:H] + pooled@W[H:] ----
    o_ref[...] = (jnp.dot(h, fwl_ref[...], preferred_element_type=f32)
                  + jnp.dot(pooled, fwc_ref[...], preferred_element_type=f32)
                  + fb_ref[...])


# ----------------------------------------------------------------------------
# Host-side wrapper
# ----------------------------------------------------------------------------
def mlstm_fcn_forward(ip, kp):
    # ip: (B, V, T) — same axis convention as the PyTorch module.
    B, V, T = ip.shape
    H = kp["whh"].shape[0]
    nbc = kp["fb"].shape[-1]
    C1 = kp["cs1"].shape[-1]
    C2 = kp["cs2"].shape[-1]
    K1 = kp["cw1"].shape[0] // V
    K2 = kp["cw2"].shape[0] // C1
    K3 = kp["cw3"].shape[0] // C2

    x = ip.astype(jnp.float32)
    # LSTM input, time-major (T*B, V).
    x_lstm = jnp.transpose(x, (2, 0, 1)).reshape(T * B, V)
    # Conv1 im2col patches (tiny, pure layout work) built host-side.
    xc = jnp.transpose(x, (0, 2, 1))                         # (B, T, V)
    left1 = (K1 - 1) // 2
    xpad = jnp.pad(xc, ((0, 0), (left1, K1 - 1 - left1), (0, 0)))
    p1 = jnp.concatenate([xpad[:, k:k + T, :] for k in range(K1)],
                         axis=-1).reshape(B * T, K1 * V)     # (B*T, K1*V)

    OFF = 8                       # sublane-aligned halo offset (>= max pad)
    PADROWS = OFF + T + 8         # 32 rows per batch, halos on both sides

    inputs = [x_lstm, kp["wih"], kp["whh"], kp["bl"],
              p1, kp["cw1"], kp["cs1"], kp["cb1"], kp["sw1a"], kp["sw1b"],
              kp["cw2"], kp["cs2"], kp["cb2"], kp["sw2a"], kp["sw2b"],
              kp["cw3"], kp["cs3"], kp["cb3"],
              kp["fwl"], kp["fwc"], kp["fb"]]
    HBM_INPUTS = (10, 15)         # cw2, cw3 stay in HBM; DMA'd inside kernel

    kernel = functools.partial(_mlstm_fcn_kernel, B=B, T=T, H=H,
                               K2=K2, K3=K3, C1=C1, C2=C2, OFF=OFF)

    def vmem_full(a):
        return pl.BlockSpec(a.shape, lambda i, nd=a.ndim: (0,) * nd)

    in_specs = [pl.BlockSpec(memory_space=pl.ANY) if idx in HBM_INPUTS
                else vmem_full(a) for idx, a in enumerate(inputs)]

    scratch = [
        pltpu.VMEM(kp["cw2"].shape, jnp.float32),      # conv2 weight (VMEM copy)
        pltpu.VMEM(kp["cw3"].shape, jnp.float32),      # conv3 weight (VMEM copy)
        pltpu.VMEM((B, PADROWS, C1), jnp.float32),     # halo-padded conv2 input
        pltpu.VMEM((B, PADROWS, C2), jnp.float32),     # halo-padded conv3 input
        pltpu.VMEM((B * T, K2 * C1), jnp.float32),     # im2col conv2
        pltpu.VMEM((B * T, K3 * C2), jnp.float32),     # im2col conv3
        pltpu.SemaphoreType.DMA((2,)),                 # weight-DMA semaphores
    ]

    return pl.pallas_call(
        kernel,
        out_shape=jax.ShapeDtypeStruct((B, nbc), jnp.float32),
        grid=(1,),
        in_specs=in_specs,
        out_specs=pl.BlockSpec((B, nbc), lambda i: (0, 0)),
        scratch_shapes=scratch,
        compiler_params=pltpu.CompilerParams(
            dimension_semantics=("arbitrary",)),
    )(*inputs)


# ----------------------------------------------------------------------------
# Parameter setup (deterministic, synthetic) in "natural" PyTorch-like layout,
# plus a one-time repacking into the fused-kernel layout.
# ----------------------------------------------------------------------------
def init_params(key, V, nb_class, H=LSTM_UNITS):
    keys = iter(jax.random.split(key, 32))
    n = lambda s, scale=0.1: (jax.random.normal(next(keys), s) * scale).astype(jnp.float32)
    p = {}
    # LSTM: gate order (i, f, g, o); biases b_ih + b_hh folded together.
    p["w_ih"] = n((4, V, H), 0.2)
    p["w_hh"] = n((4, H, H), 0.2)
    p["b_lstm"] = n((4, 1, H), 0.1)
    # Conv stack: weights stored as (K, Cin, Cout); PyTorch bias init -> 0.
    p["w_conv1"] = n((8, V, 128));   p["b_conv1"] = jnp.zeros((128,), jnp.float32)
    p["w_conv2"] = n((5, 128, 256)); p["b_conv2"] = jnp.zeros((256,), jnp.float32)
    p["w_conv3"] = n((3, 256, 128)); p["b_conv3"] = jnp.zeros((128,), jnp.float32)
    # BatchNorm (inference): gamma, beta, running mean, running var.
    for i, c in ((1, 128), (2, 256), (3, 128)):
        p[f"g{i}"] = 1.0 + n((c,), 0.1)
        p[f"be{i}"] = n((c,), 0.1)
        p[f"m{i}"] = n((c,), 0.1)
        p[f"v{i}"] = jnp.abs(1.0 + n((c,), 0.1))
    # Squeeze-excite (no bias); stored already-transposed: (C, Cr), (Cr, C).
    p["se1_w1"] = n((128, 128 // 16)); p["se1_w2"] = n((128 // 16, 128))
    p["se2_w1"] = n((256, 256 // 16)); p["se2_w2"] = n((256 // 16, 256))
    # Output head (stored as (Din, Dout)); bias init -> 0.
    p["fc_w"] = n((H + 128, nb_class)); p["fc_b"] = jnp.zeros((nb_class,), jnp.float32)
    return p


def pack_params(p):
    """Re-layout parameters into the fused-kernel format (done once)."""
    H = p["w_hh"].shape[-1]
    kp = {}
    kp["wih"] = jnp.concatenate([p["w_ih"][g] for g in range(4)], axis=1)    # (V, 4H)
    kp["whh"] = jnp.concatenate([p["w_hh"][g] for g in range(4)], axis=1)    # (H, 4H)
    kp["bl"] = jnp.concatenate([p["b_lstm"][g] for g in range(4)], axis=1)   # (1, 4H)

    def fold_conv(w, b, g, be, m, v):
        K, cin, cout = w.shape
        scale = g / jnp.sqrt(v + BN_EPS)
        shift = be + (b - m) * scale          # conv bias folded into BN shift
        return (w.reshape(K * cin, cout),
                scale.reshape(1, cout).astype(jnp.float32),
                shift.reshape(1, cout).astype(jnp.float32))

    kp["cw1"], kp["cs1"], kp["cb1"] = fold_conv(p["w_conv1"], p["b_conv1"],
                                                p["g1"], p["be1"], p["m1"], p["v1"])
    kp["cw2"], kp["cs2"], kp["cb2"] = fold_conv(p["w_conv2"], p["b_conv2"],
                                                p["g2"], p["be2"], p["m2"], p["v2"])
    kp["cw3"], kp["cs3"], kp["cb3"] = fold_conv(p["w_conv3"], p["b_conv3"],
                                                p["g3"], p["be3"], p["m3"], p["v3"])
    kp["sw1a"], kp["sw1b"] = p["se1_w1"], p["se1_w2"]
    kp["sw2a"], kp["sw2b"] = p["se2_w1"], p["se2_w2"]
    kp["fwl"] = p["fc_w"][:H, :]
    kp["fwc"] = p["fc_w"][H:, :]
    kp["fb"] = p["fc_b"].reshape(1, -1)
    return kp


# ----------------------------------------------------------------------------
# Pure-JAX reference for numerical validation
# ----------------------------------------------------------------------------
def reference_forward(ip, p):
    B, V, T = ip.shape
    x = jnp.transpose(ip, (0, 2, 1))
    H = p["w_hh"].shape[-1]
    h = jnp.zeros((B, H), jnp.float32)
    c = jnp.zeros((B, H), jnp.float32)
    for t in range(T):
        xt = x[:, t, :]
        i = jax.nn.sigmoid(xt @ p["w_ih"][0] + h @ p["w_hh"][0] + p["b_lstm"][0])
        f = jax.nn.sigmoid(xt @ p["w_ih"][1] + h @ p["w_hh"][1] + p["b_lstm"][1])
        g = jnp.tanh(xt @ p["w_ih"][2] + h @ p["w_hh"][2] + p["b_lstm"][2])
        o = jax.nn.sigmoid(xt @ p["w_ih"][3] + h @ p["w_hh"][3] + p["b_lstm"][3])
        c = f * c + i * g
        h = o * jnp.tanh(c)

    def conv(xin, w, b):
        K = w.shape[0]
        left = (K - 1) // 2
        xp = jnp.pad(xin, ((0, 0), (left, K - 1 - left), (0, 0)))
        out = jnp.zeros((xin.shape[0], xin.shape[1], w.shape[-1]), jnp.float32)
        for k in range(K):
            out = out + jnp.einsum("btc,cd->btd", xp[:, k:k + xin.shape[1], :], w[k])
        return out + b

    bn = lambda xin, g_, b_, m_, v_: (xin - m_) / jnp.sqrt(v_ + BN_EPS) * g_ + b_

    def se(xin, w1, w2):
        s = jax.nn.sigmoid(jax.nn.relu(jnp.mean(xin, axis=1) @ w1) @ w2)
        return xin * s[:, None, :]

    y = x
    y = jax.nn.relu(bn(conv(y, p["w_conv1"], p["b_conv1"]), p["g1"], p["be1"], p["m1"], p["v1"]))
    y = se(y, p["se1_w1"], p["se1_w2"])
    y = jax.nn.relu(bn(conv(y, p["w_conv2"], p["b_conv2"]), p["g2"], p["be2"], p["m2"], p["v2"]))
    y = se(y, p["se2_w1"], p["se2_w2"])
    y = jax.nn.relu(bn(conv(y, p["w_conv3"], p["b_conv3"]), p["g3"], p["be3"], p["m3"], p["v3"]))
    y = jnp.mean(y, axis=1)
    return jnp.concatenate([h, y], axis=1) @ p["fc_w"] + p["fc_b"]


if __name__ == "__main__":
    B, V, T, NB_CLASS = 2, 4, 16, 3   # max_nb_variables=4, max_timesteps=16
    key = jax.random.PRNGKey(0)
    k_in, k_par = jax.random.split(key)
    ip = jax.random.normal(k_in, (B, V, T), dtype=jnp.float32)
    params = init_params(k_par, V, NB_CLASS)
    kparams = pack_params(params)

    out = mlstm_fcn_forward(ip, kparams)
    out = jax.block_until_ready(out)

    ref = jax.block_until_ready(reference_forward(ip, params))
    assert out.shape == (B, NB_CLASS)
    assert jnp.allclose(out, ref, atol=1e-3, rtol=1e-3), (out, ref)
    print("KERNEL_OK")
</pallas_src>

<mosaic_0001>
module attributes {stable_mosaic.version = 11 : i64} {
  func.func @_mlstm_fcn_kernel(%arg0: i32, %arg1: memref<32x4xf32, #tpu.memory_space<vmem>>, %arg2: memref<4x32xf32, #tpu.memory_space<vmem>>, %arg3: memref<8x32xf32, #tpu.memory_space<vmem>>, %arg4: memref<1x32xf32, #tpu.memory_space<vmem>>, %arg5: memref<32x32xf32, #tpu.memory_space<vmem>>, %arg6: memref<32x128xf32, #tpu.memory_space<vmem>>, %arg7: memref<1x128xf32, #tpu.memory_space<vmem>>, %arg8: memref<1x128xf32, #tpu.memory_space<vmem>>, %arg9: memref<128x8xf32, #tpu.memory_space<vmem>>, %arg10: memref<8x128xf32, #tpu.memory_space<vmem>>, %arg11: memref<640x256xf32, #tpu.memory_space<any>>, %arg12: memref<1x256xf32, #tpu.memory_space<vmem>>, %arg13: memref<1x256xf32, #tpu.memory_space<vmem>>, %arg14: memref<256x16xf32, #tpu.memory_space<vmem>>, %arg15: memref<16x256xf32, #tpu.memory_space<vmem>>, %arg16: memref<768x128xf32, #tpu.memory_space<any>>, %arg17: memref<1x128xf32, #tpu.memory_space<vmem>>, %arg18: memref<1x128xf32, #tpu.memory_space<vmem>>, %arg19: memref<8x3xf32, #tpu.memory_space<vmem>>, %arg20: memref<128x3xf32, #tpu.memory_space<vmem>>, %arg21: memref<1x3xf32, #tpu.memory_space<vmem>>, %arg22: memref<2x3xf32, #tpu.memory_space<vmem>>, %arg23: memref<640x256xf32, #tpu.memory_space<vmem>>, %arg24: memref<768x128xf32, #tpu.memory_space<vmem>>, %arg25: memref<2x32x128xf32, #tpu.memory_space<vmem>>, %arg26: memref<2x32x256xf32, #tpu.memory_space<vmem>>, %arg27: memref<32x640xf32, #tpu.memory_space<vmem>>, %arg28: memref<32x768xf32, #tpu.memory_space<vmem>>, %arg29: memref<2x!tpu.dma_semaphore, #tpu.memory_space<semaphore_mem>>) attributes {dimension_semantics = [#tpu.dimension_semantics<arbitrary>], iteration_bounds = array<i64: 1>, scalar_prefetch = 0 : i64, scratch_operands = 7 : i64, tpu.core_type = #tpu.core_type<tc>, window_params = [{pipeline_mode = #tpu.pipeline_mode<synchronous>, transform_indices = @transform_0, window_bounds = array<i64: 32, 4>}, {pipeline_mode = #tpu.pipeline_mode<synchronous>, transform_indices = @transform_1, window_bounds = array<i64: 4, 32>}, {pipeline_mode = #tpu.pipeline_mode<synchronous>, transform_indices = @transform_2, window_bounds = array<i64: 8, 32>}, {pipeline_mode = #tpu.pipeline_mode<synchronous>, transform_indices = @transform_3, window_bounds = array<i64: 1, 32>}, {pipeline_mode = #tpu.pipeline_mode<synchronous>, transform_indices = @transform_4, window_bounds = array<i64: 32, 32>}, {pipeline_mode = #tpu.pipeline_mode<synchronous>, transform_indices = @transform_5, window_bounds = array<i64: 32, 128>}, {pipeline_mode = #tpu.pipeline_mode<synchronous>, transform_indices = @transform_6, window_bounds = array<i64: 1, 128>}, {pipeline_mode = #tpu.pipeline_mode<synchronous>, transform_indices = @transform_7, window_bounds = array<i64: 1, 128>}, {pipeline_mode = #tpu.pipeline_mode<synchronous>, transform_indices = @transform_8, window_bounds = array<i64: 128, 8>}, {pipeline_mode = #tpu.pipeline_mode<synchronous>, transform_indices = @transform_9, window_bounds = array<i64: 8, 128>}, {}, {pipeline_mode = #tpu.pipeline_mode<synchronous>, transform_indices = @transform_11, window_bounds = array<i64: 1, 256>}, {pipeline_mode = #tpu.pipeline_mode<synchronous>, transform_indices = @transform_12, window_bounds = array<i64: 1, 256>}, {pipeline_mode = #tpu.pipeline_mode<synchronous>, transform_indices = @transform_13, window_bounds = array<i64: 256, 16>}, {pipeline_mode = #tpu.pipeline_mode<synchronous>, transform_indices = @transform_14, window_bounds = array<i64: 16, 256>}, {}, {pipeline_mode = #tpu.pipeline_mode<synchronous>, transform_indices = @transform_16, window_bounds = array<i64: 1, 128>}, {pipeline_mode = #tpu.pipeline_mode<synchronous>, transform_indices = @transform_17, window_bounds = array<i64: 1, 128>}, {pipeline_mode = #tpu.pipeline_mode<synchronous>, transform_indices = @transform_18, window_bounds = array<i64: 8, 3>}, {pipeline_mode = #tpu.pipeline_mode<synchronous>, transform_indices = @transform_19, window_bounds = array<i64: 128, 3>}, {pipeline_mode = #tpu.pipeline_mode<synchronous>, transform_indices = @transform_20, window_bounds = array<i64: 1, 3>}, {pipeline_mode = #tpu.pipeline_mode<synchronous>, transform_indices = @transform_21, window_bounds = array<i64: 2, 3>}]} {
    %c0_i32 = arith.constant 0 : i32
    %0 = tpu.memref_slice %arg29[%c0_i32] : memref<2x!tpu.dma_semaphore, #tpu.memory_space<semaphore_mem>> -> memref<1x!tpu.dma_semaphore, #tpu.memory_space<semaphore_mem>>
    %1 = tpu.memref_squeeze %0 : memref<1x!tpu.dma_semaphore, #tpu.memory_space<semaphore_mem>> -> memref<!tpu.dma_semaphore, #tpu.memory_space<semaphore_mem>>
    tpu.enqueue_dma source(%arg11 : memref<640x256xf32, #tpu.memory_space<any>>) target(%arg23 : memref<640x256xf32, #tpu.memory_space<vmem>>) target_semaphore(%1 : memref<!tpu.dma_semaphore, #tpu.memory_space<semaphore_mem>>)
    %c1_i32 = arith.constant 1 : i32
    %2 = tpu.memref_slice %arg29[%c1_i32] : memref<2x!tpu.dma_semaphore, #tpu.memory_space<semaphore_mem>> -> memref<1x!tpu.dma_semaphore, #tpu.memory_space<semaphore_mem>>
    %3 = tpu.memref_squeeze %2 : memref<1x!tpu.dma_semaphore, #tpu.memory_space<semaphore_mem>> -> memref<!tpu.dma_semaphore, #tpu.memory_space<semaphore_mem>>
    tpu.enqueue_dma source(%arg16 : memref<768x128xf32, #tpu.memory_space<any>>) target(%arg24 : memref<768x128xf32, #tpu.memory_space<vmem>>) target_semaphore(%3 : memref<!tpu.dma_semaphore, #tpu.memory_space<semaphore_mem>>)
    %cst = arith.constant 0.000000e+00 : f32
    %4 = vector.broadcast %cst : f32 to vector<8x128xf32>
    %c0 = arith.constant 0 : index
    %c0_0 = arith.constant 0 : index
    %c0_1 = arith.constant 0 : index
    %5 = vector.load %arg25[%c0, %c0_0, %c0_1] : memref<2x32x128xf32, #tpu.memory_space<vmem>>, vector<1x8x128xf32>
    %6 = vector.shape_cast %5 : vector<1x8x128xf32> to vector<8x128xf32>
    %7 = vector.shape_cast %4 : vector<8x128xf32> to vector<1x8x128xf32>
    tpu.vector_store %arg25[%c0, %c0_0, %c0_1], %7 {strides = array<i32>} : memref<2x32x128xf32, #tpu.memory_space<vmem>>, vector<1x8x128xf32>,
    %cst_2 = arith.constant 0.000000e+00 : f32
    %8 = vector.broadcast %cst_2 : f32 to vector<8x128xf32>
    %c0_3 = arith.constant 0 : index
    %c24 = arith.constant 24 : index
    %c0_4 = arith.constant 0 : index
    %9 = vector.load %arg25[%c0_3, %c24, %c0_4] : memref<2x32x128xf32, #tpu.memory_space<vmem>>, vector<1x8x128xf32>
    %10 = vector.shape_cast %9 : vector<1x8x128xf32> to vector<8x128xf32>
    %11 = vector.shape_cast %8 : vector<8x128xf32> to vector<1x8x128xf32>
    tpu.vector_store %arg25[%c0_3, %c24, %c0_4], %11 {strides = array<i32>} : memref<2x32x128xf32, #tpu.memory_space<vmem>>, vector<1x8x128xf32>,
    %cst_5 = arith.constant 0.000000e+00 : f32
    %12 = vector.broadcast %cst_5 : f32 to vector<8x256xf32>
    %c0_6 = arith.constant 0 : index
    %c0_7 = arith.constant 0 : index
    %c0_8 = arith.constant 0 : index
    %13 = vector.load %arg26[%c0_6, %c0_7, %c0_8] : memref<2x32x256xf32, #tpu.memory_space<vmem>>, vector<1x8x256xf32>
    %14 = vector.shape_cast %13 : vector<1x8x256xf32> to vector<8x256xf32>
    %15 = vector.shape_cast %12 : vector<8x256xf32> to vector<1x8x256xf32>
    tpu.vector_store %arg26[%c0_6, %c0_7, %c0_8], %15 {strides = array<i32>} : memref<2x32x256xf32, #tpu.memory_space<vmem>>, vector<1x8x256xf32>,
    %cst_9 = arith.constant 0.000000e+00 : f32
    %16 = vector.broadcast %cst_9 : f32 to vector<8x256xf32>
    %c0_10 = arith.constant 0 : index
    %c24_11 = arith.constant 24 : index
    %c0_12 = arith.constant 0 : index
    %17 = vector.load %arg26[%c0_10, %c24_11, %c0_12] : memref<2x32x256xf32, #tpu.memory_space<vmem>>, vector<1x8x256xf32>
    %18 = vector.shape_cast %17 : vector<1x8x256xf32> to vector<8x256xf32>
    %19 = vector.shape_cast %16 : vector<8x256xf32> to vector<1x8x256xf32>
    tpu.vector_store %arg26[%c0_10, %c24_11, %c0_12], %19 {strides = array<i32>} : memref<2x32x256xf32, #tpu.memory_space<vmem>>, vector<1x8x256xf32>,
    %cst_13 = arith.constant 0.000000e+00 : f32
    %20 = vector.broadcast %cst_13 : f32 to vector<8x128xf32>
    %c1 = arith.constant 1 : index
    %c0_14 = arith.constant 0 : index
    %c0_15 = arith.constant 0 : index
    %21 = vector.load %arg25[%c1, %c0_14, %c0_15] : memref<2x32x128xf32, #tpu.memory_space<vmem>>, vector<1x8x128xf32>
    %22 = vector.shape_cast %21 : vector<1x8x128xf32> to vector<8x128xf32>
    %23 = vector.shape_cast %20 : vector<8x128xf32> to vector<1x8x128xf32>
    tpu.vector_store %arg25[%c1, %c0_14, %c0_15], %23 {strides = array<i32>} : memref<2x32x128xf32, #tpu.memory_space<vmem>>, vector<1x8x128xf32>,
    %cst_16 = arith.constant 0.000000e+00 : f32
    %24 = vector.broadcast %cst_16 : f32 to vector<8x128xf32>
    %c1_17 = arith.constant 1 : index
    %c24_18 = arith.constant 24 : index
    %c0_19 = arith.constant 0 : index
    %25 = vector.load %arg25[%c1_17, %c24_18, %c0_19] : memref<2x32x128xf32, #tpu.memory_space<vmem>>, vector<1x8x128xf32>
    %26 = vector.shape_cast %25 : vector<1x8x128xf32> to vector<8x128xf32>
    %27 = vector.shape_cast %24 : vector<8x128xf32> to vector<1x8x128xf32>
    tpu.vector_store %arg25[%c1_17, %c24_18, %c0_19], %27 {strides = array<i32>} : memref<2x32x128xf32, #tpu.memory_space<vmem>>, vector<1x8x128xf32>,
    %cst_20 = arith.constant 0.000000e+00 : f32
    %28 = vector.broadcast %cst_20 : f32 to vector<8x256xf32>
    %c1_21 = arith.constant 1 : index
    %c0_22 = arith.constant 0 : index
    %c0_23 = arith.constant 0 : index
    %29 = vector.load %arg26[%c1_21, %c0_22, %c0_23] : memref<2x32x256xf32, #tpu.memory_space<vmem>>, vector<1x8x256xf32>
    %30 = vector.shape_cast %29 : vector<1x8x256xf32> to vector<8x256xf32>
    %31 = vector.shape_cast %28 : vector<8x256xf32> to vector<1x8x256xf32>
    tpu.vector_store %arg26[%c1_21, %c0_22, %c0_23], %31 {strides = array<i32>} : memref<2x32x256xf32, #tpu.memory_space<vmem>>, vector<1x8x256xf32>,
    %cst_24 = arith.constant 0.000000e+00 : f32
    %32 = vector.broadcast %cst_24 : f32 to vector<8x256xf32>
    %c1_25 = arith.constant 1 : index
    %c24_26 = arith.constant 24 : index
    %c0_27 = arith.constant 0 : index
    %33 = vector.load %arg26[%c1_25, %c24_26, %c0_27] : memref<2x32x256xf32, #tpu.memory_space<vmem>>, vector<1x8x256xf32>
    %34 = vector.shape_cast %33 : vector<1x8x256xf32> to vector<8x256xf32>
    %35 = vector.shape_cast %32 : vector<8x256xf32> to vector<1x8x256xf32>
    tpu.vector_store %arg26[%c1_25, %c24_26, %c0_27], %35 {strides = array<i32>} : memref<2x32x256xf32, #tpu.memory_space<vmem>>, vector<1x8x256xf32>,
    %c0_28 = arith.constant 0 : index
    %c0_29 = arith.constant 0 : index
    %36 = vector.load %arg1[%c0_28, %c0_29] : memref<32x4xf32, #tpu.memory_space<vmem>>, vector<32x4xf32>
    %c0_30 = arith.constant 0 : index
    %c0_31 = arith.constant 0 : index
    %37 = vector.load %arg2[%c0_30, %c0_31] : memref<4x32xf32, #tpu.memory_space<vmem>>, vector<4x32xf32>
    %cst_32 = arith.constant dense<0.000000e+00> : vector<32x32xf32>
    %38 = tpu.matmul %36, %37, %cst_32 {dimension_numbers = #tpu.dot_dimension_numbers<[1], [0], [0], [1], [0, 0, 1, 1], [], []>} : vector<32x4xf32>, vector<4x32xf32>, vector<32x32xf32> -> vector<32x32xf32>
    %c0_33 = arith.constant 0 : index
    %c0_34 = arith.constant 0 : index
    %39 = vector.load %arg4[%c0_33, %c0_34] : memref<1x32xf32, #tpu.memory_space<vmem>>, vector<1x32xf32>
    %40 = vector.broadcast %39 : vector<1x32xf32> to vector<32x32xf32>
    %41 = arith.addf %38, %40 : vector<32x32xf32>
    %c0_35 = arith.constant 0 : index
    %c0_36 = arith.constant 0 : index
    %42 = vector.load %arg3[%c0_35, %c0_36] : memref<8x32xf32, #tpu.memory_space<vmem>>, vector<8x32xf32>
    %43 = vector.extract_strided_slice %42 {offsets = [0, 0], sizes = [1, 32], strides = [1, 1]} : vector<8x32xf32> to vector<1x32xf32>
    %44 = vector.shape_cast %43 : vector<1x32xf32> to vector<1x32xf32>
    %45 = vector.broadcast %44 : vector<1x32xf32> to vector<2x32xf32>
    %46 = vector.extract_strided_slice %42 {offsets = [1, 0], sizes = [1, 32], strides = [1, 1]} : vector<8x32xf32> to vector<1x32xf32>
    %47 = vector.shape_cast %46 : vector<1x32xf32> to vector<1x32xf32>
    %48 = vector.broadcast %47 : vector<1x32xf32> to vector<2x32xf32>
    %49 = vector.extract_strided_slice %42 {offsets = [2, 0], sizes = [1, 32], strides = [1, 1]} : vector<8x32xf32> to vector<1x32xf32>
    %50 = vector.shape_cast %49 : vector<1x32xf32> to vector<1x32xf32>
    %51 = vector.broadcast %50 : vector<1x32xf32> to vector<2x32xf32>
    %52 = vector.extract_strided_slice %42 {offsets = [3, 0], sizes = [1, 32], strides = [1, 1]} : vector<8x32xf32> to vector<1x32xf32>
    %53 = vector.shape_cast %52 : vector<1x32xf32> to vector<1x32xf32>
    %54 = vector.broadcast %53 : vector<1x32xf32> to vector<2x32xf32>
    %55 = vector.extract_strided_slice %42 {offsets = [4, 0], sizes = [1, 32], strides = [1, 1]} : vector<8x32xf32> to vector<1x32xf32>
    %56 = vector.shape_cast %55 : vector<1x32xf32> to vector<1x32xf32>
    %57 = vector.broadcast %56 : vector<1x32xf32> to vector<2x32xf32>
    %58 = vector.extract_strided_slice %42 {offsets = [5, 0], sizes = [1, 32], strides = [1, 1]} : vector<8x32xf32> to vector<1x32xf32>
    %59 = vector.shape_cast %58 : vector<1x32xf32> to vector<1x32xf32>
    %60 = vector.broadcast %59 : vector<1x32xf32> to vector<2x32xf32>
    %61 = vector.extract_strided_slice %42 {offsets = [6, 0], sizes = [1, 32], strides = [1, 1]} : vector<8x32xf32> to vector<1x32xf32>
    %62 = vector.shape_cast %61 : vector<1x32xf32> to vector<1x32xf32>
    %63 = vector.broadcast %62 : vector<1x32xf32> to vector<2x32xf32>
    %64 = vector.extract_strided_slice %42 {offsets = [7, 0], sizes = [1, 32], strides = [1, 1]} : vector<8x32xf32> to vector<1x32xf32>
    %65 = vector.shape_cast %64 : vector<1x32xf32> to vector<1x32xf32>
    %66 = vector.broadcast %65 : vector<1x32xf32> to vector<2x32xf32>
    %cst_37 = arith.constant 0.000000e+00 : f32
    %67 = vector.broadcast %cst_37 : f32 to vector<2x8xf32>
    %cst_38 = arith.constant 0.000000e+00 : f32
    %68 = vector.broadcast %cst_38 : f32 to vector<2x8xf32>
    %69 = vector.extract_strided_slice %67 {offsets = [0, 0], sizes = [2, 1], strides = [1, 1]} : vector<2x8xf32> to vector<2x1xf32>
    %70 = vector.broadcast %69 : vector<2x1xf32> to vector<2x32xf32>
    %71 = arith.mulf %70, %45 : vector<2x32xf32>
    %72 = vector.extract_strided_slice %67 {offsets = [0, 1], sizes = [2, 1], strides = [1, 1]} : vector<2x8xf32> to vector<2x1xf32>
    %73 = vector.broadcast %72 : vector<2x1xf32> to vector<2x32xf32>
    %74 = arith.mulf %73, %48 : vector<2x32xf32>
    %75 = vector.extract_strided_slice %67 {offsets = [0, 2], sizes = [2, 1], strides = [1, 1]} : vector<2x8xf32> to vector<2x1xf32>
    %76 = vector.broadcast %75 : vector<2x1xf32> to vector<2x32xf32>
    %77 = arith.mulf %76, %51 : vector<2x32xf32>
    %78 = vector.extract_strided_slice %67 {offsets = [0, 3], sizes = [2, 1], strides = [1, 1]} : vector<2x8xf32> to vector<2x1xf32>
    %79 = vector.broadcast %78 : vector<2x1xf32> to vector<2x32xf32>
    %80 = arith.mulf %79, %54 : vector<2x32xf32>
    %81 = vector.extract_strided_slice %67 {offsets = [0, 4], sizes = [2, 1], strides = [1, 1]} : vector<2x8xf32> to vector<2x1xf32>
    %82 = vector.broadcast %81 : vector<2x1xf32> to vector<2x32xf32>
    %83 = arith.mulf %82, %57 : vector<2x32xf32>
    %84 = vector.extract_strided_slice %67 {offsets = [0, 5], sizes = [2, 1], strides = [1, 1]} : vector<2x8xf32> to vector<2x1xf32>
    %85 = vector.broadcast %84 : vector<2x1xf32> to vector<2x32xf32>
    %86 = arith.mulf %85, %60 : vector<2x32xf32>
    %87 = vector.extract_strided_slice %67 {offsets = [0, 6], sizes = [2, 1], strides = [1, 1]} : vector<2x8xf32> to vector<2x1xf32>
    %88 = vector.broadcast %87 : vector<2x1xf32> to vector<2x32xf32>
    %89 = arith.mulf %88, %63 : vector<2x32xf32>
    %90 = vector.extract_strided_slice %67 {offsets = [0, 7], sizes = [2, 1], strides = [1, 1]} : vector<2x8xf32> to vector<2x1xf32>
    %91 = vector.broadcast %90 : vector<2x1xf32> to vector<2x32xf32>
    %92 = arith.mulf %91, %66 : vector<2x32xf32>
    %93 = arith.addf %71, %74 : vector<2x32xf32>
    %94 = arith.addf %77, %80 : vector<2x32xf32>
    %95 = arith.addf %83, %86 : vector<2x32xf32>
    %96 = arith.addf %89, %92 : vector<2x32xf32>
    %97 = arith.addf %93, %94 : vector<2x32xf32>
    %98 = arith.addf %95, %96 : vector<2x32xf32>
    %99 = arith.addf %97, %98 : vector<2x32xf32>
    %100 = vector.extract_strided_slice %41 {offsets = [0, 0], sizes = [2, 32], strides = [1, 1]} : vector<32x32xf32> to vector<2x32xf32>
    %101 = arith.addf %100, %99 : vector<2x32xf32>
    %102 = arith.negf %101 : vector<2x32xf32>
    %103 = math.exp %102 : vector<2x32xf32>
    %cst_39 = arith.constant 1.000000e+00 : f32
    %104 = vector.broadcast %cst_39 : f32 to vector<2x32xf32>
    %105 = arith.addf %104, %103 : vector<2x32xf32>
    %106 = arith.divf %104, %105 : vector<2x32xf32>
    %107 = math.tanh %101 : vector<2x32xf32>
    %108 = vector.extract_strided_slice %106 {offsets = [0, 8], sizes = [2, 8], strides = [1, 1]} : vector<2x32xf32> to vector<2x8xf32>
    %109 = arith.mulf %108, %68 : vector<2x8xf32>
    %110 = vector.extract_strided_slice %106 {offsets = [0, 0], sizes = [2, 8], strides = [1, 1]} : vector<2x32xf32> to vector<2x8xf32>
    %111 = vector.extract_strided_slice %107 {offsets = [0, 16], sizes = [2, 8], strides = [1, 1]} : vector<2x32xf32> to vector<2x8xf32>
    %112 = arith.mulf %110, %111 : vector<2x8xf32>
    %113 = arith.addf %109, %112 : vector<2x8xf32>
    %114 = vector.extract_strided_slice %106 {offsets = [0, 24], sizes = [2, 8], strides = [1, 1]} : vector<2x32xf32> to vector<2x8xf32>
    %115 = math.tanh %113 : vector<2x8xf32>
    %116 = arith.mulf %114, %115 : vector<2x8xf32>
    %117 = vector.extract_strided_slice %116 {offsets = [0, 0], sizes = [2, 1], strides = [1, 1]} : vector<2x8xf32> to vector<2x1xf32>
    %118 = vector.broadcast %117 : vector<2x1xf32> to vector<2x32xf32>
    %119 = arith.mulf %118, %45 : vector<2x32xf32>
    %120 = vector.extract_strided_slice %116 {offsets = [0, 1], sizes = [2, 1], strides = [1, 1]} : vector<2x8xf32> to vector<2x1xf32>
    %121 = vector.broadcast %120 : vector<2x1xf32> to vector<2x32xf32>
    %122 = arith.mulf %121, %48 : vector<2x32xf32>
    %123 = vector.extract_strided_slice %116 {offsets = [0, 2], sizes = [2, 1], strides = [1, 1]} : vector<2x8xf32> to vector<2x1xf32>
    %124 = vector.broadcast %123 : vector<2x1xf32> to vector<2x32xf32>
    %125 = arith.mulf %124, %51 : vector<2x32xf32>
    %126 = vector.extract_strided_slice %116 {offsets = [0, 3], sizes = [2, 1], strides = [1, 1]} : vector<2x8xf32> to vector<2x1xf32>
    %127 = vector.broadcast %126 : vector<2x1xf32> to vector<2x32xf32>
    %128 = arith.mulf %127, %54 : vector<2x32xf32>
    %129 = vector.extract_strided_slice %116 {offsets = [0, 4], sizes = [2, 1], strides = [1, 1]} : vector<2x8xf32> to vector<2x1xf32>
    %130 = vector.broadcast %129 : vector<2x1xf32> to vector<2x32xf32>
    %131 = arith.mulf %130, %57 : vector<2x32xf32>
    %132 = vector.extract_strided_slice %116 {offsets = [0, 5], sizes = [2, 1], strides = [1, 1]} : vector<2x8xf32> to vector<2x1xf32>
    %133 = vector.broadcast %132 : vector<2x1xf32> to vector<2x32xf32>
    %134 = arith.mulf %133, %60 : vector<2x32xf32>
    %135 = vector.extract_strided_slice %116 {offsets = [0, 6], sizes = [2, 1], strides = [1, 1]} : vector<2x8xf32> to vector<2x1xf32>
    %136 = vector.broadcast %135 : vector<2x1xf32> to vector<2x32xf32>
    %137 = arith.mulf %136, %63 : vector<2x32xf32>
    %138 = vector.extract_strided_slice %116 {offsets = [0, 7], sizes = [2, 1], strides = [1, 1]} : vector<2x8xf32> to vector<2x1xf32>
    %139 = vector.broadcast %138 : vector<2x1xf32> to vector<2x32xf32>
    %140 = arith.mulf %139, %66 : vector<2x32xf32>
    %141 = arith.addf %119, %122 : vector<2x32xf32>
    %142 = arith.addf %125, %128 : vector<2x32xf32>
    %143 = arith.addf %131, %134 : vector<2x32xf32>
    %144 = arith.addf %137, %140 : vector<2x32xf32>
    %145 = arith.addf %141, %142 : vector<2x32xf32>
    %146 = arith.addf %143, %144 : vector<2x32xf32>
    %147 = arith.addf %145, %146 : vector<2x32xf32>
    %148 = vector.extract_strided_slice %41 {offsets = [2, 0], sizes = [2, 32], strides = [1, 1]} : vector<32x32xf32> to vector<2x32xf32>
    %149 = arith.addf %148, %147 : vector<2x32xf32>
    %150 = arith.negf %149 : vector<2x32xf32>
    %151 = math.exp %150 : vector<2x32xf32>
    %cst_40 = arith.constant 1.000000e+00 : f32
    %152 = vector.broadcast %cst_40 : f32 to vector<2x32xf32>
    %153 = arith.addf %152, %151 : vector<2x32xf32>
    %154 = arith.divf %152, %153 : vector<2x32xf32>
    %155 = math.tanh %149 : vector<2x32xf32>
    %156 = vector.extract_strided_slice %154 {offsets = [0, 8], sizes = [2, 8], strides = [1, 1]} : vector<2x32xf32> to vector<2x8xf32>
    %157 = arith.mulf %156, %113 : vector<2x8xf32>
    %158 = vector.extract_strided_slice %154 {offsets = [0, 0], sizes = [2, 8], strides = [1, 1]} : vector<2x32xf32> to vector<2x8xf32>
    %159 = vector.extract_strided_slice %155 {offsets = [0, 16], sizes = [2, 8], strides = [1, 1]} : vector<2x32xf32> to vector<2x8xf32>
    %160 = arith.mulf %158, %159 : vector<2x8xf32>
    %161 = arith.addf %157, %160 : vector<2x8xf32>
    %162 = vector.extract_strided_slice %154 {offsets = [0, 24], sizes = [2, 8], strides = [1, 1]} : vector<2x32xf32> to vector<2x8xf32>
    %163 = math.tanh %161 : vector<2x8xf32>
    %164 = arith.mulf %162, %163 : vector<2x8xf32>
    %165 = vector.extract_strided_slice %164 {offsets = [0, 0], sizes = [2, 1], strides = [1, 1]} : vector<2x8xf32> to vector<2x1xf32>
    %166 = vector.broadcast %165 : vector<2x1xf32> to vector<2x32xf32>
    %167 = arith.mulf %166, %45 : vector<2x32xf32>
    %168 = vector.extract_strided_slice %164 {offsets = [0, 1], sizes = [2, 1], strides = [1, 1]} : vector<2x8xf32> to vector<2x1xf32>
    %169 = vector.broadcast %168 : vector<2x1xf32> to vector<2x32xf32>
    %170 = arith.mulf %169, %48 : vector<2x32xf32>
    %171 = vector.extract_strided_slice %164 {offsets = [0, 2], sizes = [2, 1], strides = [1, 1]} : vector<2x8xf32> to vector<2x1xf32>
    %172 = vector.broadcast %171 : vector<2x1xf32> to vector<2x32xf32>
    %173 = arith.mulf %172, %51 : vector<2x32xf32>
    %174 = vector.extract_strided_slice %164 {offsets = [0, 3], sizes = [2, 1], strides = [1, 1]} : vector<2x8xf32> to vector<2x1xf32>
    %175 = vector.broadcast %174 : vector<2x1xf32> to vector<2x32xf32>
    %176 = arith.mulf %175, %54 : vector<2x32xf32>
    %177 = vector.extract_strided_slice %164 {offsets = [0, 4], sizes = [2, 1], strides = [1, 1]} : vector<2x8xf32> to vector<2x1xf32>
    %178 = vector.broadcast %177 : vector<2x1xf32> to vector<2x32xf32>
    %179 = arith.mulf %178, %57 : vector<2x32xf32>
    %180 = vector.extract_strided_slice %164 {offsets = [0, 5], sizes = [2, 1], strides = [1, 1]} : vector<2x8xf32> to vector<2x1xf32>
    %181 = vector.broadcast %180 : vector<2x1xf32> to vector<2x32xf32>
    %182 = arith.mulf %181, %60 : vector<2x32xf32>
    %183 = vector.extract_strided_slice %164 {offsets = [0, 6], sizes = [2, 1], strides = [1, 1]} : vector<2x8xf32> to vector<2x1xf32>
    %184 = vector.broadcast %183 : vector<2x1xf32> to vector<2x32xf32>
    %185 = arith.mulf %184, %63 : vector<2x32xf32>
    %186 = vector.extract_strided_slice %164 {offsets = [0, 7], sizes = [2, 1], strides = [1, 1]} : vector<2x8xf32> to vector<2x1xf32>
    %187 = vector.broadcast %186 : vector<2x1xf32> to vector<2x32xf32>
    %188 = arith.mulf %187, %66 : vector<2x32xf32>
    %189 = arith.addf %167, %170 : vector<2x32xf32>
    %190 = arith.addf %173, %176 : vector<2x32xf32>
    %191 = arith.addf %179, %182 : vector<2x32xf32>
    %192 = arith.addf %185, %188 : vector<2x32xf32>
    %193 = arith.addf %189, %190 : vector<2x32xf32>
    %194 = arith.addf %191, %192 : vector<2x32xf32>
    %195 = arith.addf %193, %194 : vector<2x32xf32>
    %196 = vector.extract_strided_slice %41 {offsets = [4, 0], sizes = [2, 32], strides = [1, 1]} : vector<32x32xf32> to vector<2x32xf32>
    %197 = arith.addf %196, %195 : vector<2x32xf32>
    %198 = arith.negf %197 : vector<2x32xf32>
    %199 = math.exp %198 : vector<2x32xf32>
    %cst_41 = arith.constant 1.000000e+00 : f32
    %200 = vector.broadcast %cst_41 : f32 to vector<2x32xf32>
    %201 = arith.addf %200, %199 : vector<2x32xf32>
    %202 = arith.divf %200, %201 : vector<2x32xf32>
    %203 = math.tanh %197 : vector<2x32xf32>
    %204 = vector.extract_strided_slice %202 {offsets = [0, 8], sizes = [2, 8], strides = [1, 1]} : vector<2x32xf32> to vector<2x8xf32>
    %205 = arith.mulf %204, %161 : vector<2x8xf32>
    %206 = vector.extract_strided_slice %202 {offsets = [0, 0], sizes = [2, 8], strides = [1, 1]} : vector<2x32xf32> to vector<2x8xf32>
    %207 = vector.extract_strided_slice %203 {offsets = [0, 16], sizes = [2, 8], strides = [1, 1]} : vector<2x32xf32> to vector<2x8xf32>
    %208 = arith.mulf %206, %207 : vector<2x8xf32>
    %209 = arith.addf %205, %208 : vector<2x8xf32>
    %210 = vector.extract_strided_slice %202 {offsets = [0, 24], sizes = [2, 8], strides = [1, 1]} : vector<2x32xf32> to vector<2x8xf32>
    %211 = math.tanh %209 : vector<2x8xf32>
    %212 = arith.mulf %210, %211 : vector<2x8xf32>
    %213 = vector.extract_strided_slice %212 {offsets = [0, 0], sizes = [2, 1], strides = [1, 1]} : vector<2x8xf32> to vector<2x1xf32>
    %214 = vector.broadcast %213 : vector<2x1xf32> to vector<2x32xf32>
    %215 = arith.mulf %214, %45 : vector<2x32xf32>
    %216 = vector.extract_strided_slice %212 {offsets = [0, 1], sizes = [2, 1], strides = [1, 1]} : vector<2x8xf32> to vector<2x1xf32>
    %217 = vector.broadcast %216 : vector<2x1xf32> to vector<2x32xf32>
    %218 = arith.mulf %217, %48 : vector<2x32xf32>
    %219 = vector.extract_strided_slice %212 {offsets = [0, 2], sizes = [2, 1], strides = [1, 1]} : vector<2x8xf32> to vector<2x1xf32>
    %220 = vector.broadcast %219 : vector<2x1xf32> to vector<2x32xf32>
    %221 = arith.mulf %220, %51 : vector<2x32xf32>
    %222 = vector.extract_strided_slice %212 {offsets = [0, 3], sizes = [2, 1], strides = [1, 1]} : vector<2x8xf32> to vector<2x1xf32>
    %223 = vector.broadcast %222 : vector<2x1xf32> to vector<2x32xf32>
    %224 = arith.mulf %223, %54 : vector<2x32xf32>
    %225 = vector.extract_strided_slice %212 {offsets = [0, 4], sizes = [2, 1], strides = [1, 1]} : vector<2x8xf32> to vector<2x1xf32>
    %226 = vector.broadcast %225 : vector<2x1xf32> to vector<2x32xf32>
    %227 = arith.mulf %226, %57 : vector<2x32xf32>
    %228 = vector.extract_strided_slice %212 {offsets = [0, 5], sizes = [2, 1], strides = [1, 1]} : vector<2x8xf32> to vector<2x1xf32>
    %229 = vector.broadcast %228 : vector<2x1xf32> to vector<2x32xf32>
    %230 = arith.mulf %229, %60 : vector<2x32xf32>
    %231 = vector.extract_strided_slice %212 {offsets = [0, 6], sizes = [2, 1], strides = [1, 1]} : vector<2x8xf32> to vector<2x1xf32>
    %232 = vector.broadcast %231 : vector<2x1xf32> to vector<2x32xf32>
    %233 = arith.mulf %232, %63 : vector<2x32xf32>
    %234 = vector.extract_strided_slice %212 {offsets = [0, 7], sizes = [2, 1], strides = [1, 1]} : vector<2x8xf32> to vector<2x1xf32>
    %235 = vector.broadcast %234 : vector<2x1xf32> to vector<2x32xf32>
    %236 = arith.mulf %235, %66 : vector<2x32xf32>
    %237 = arith.addf %215, %218 : vector<2x32xf32>
    %238 = arith.addf %221, %224 : vector<2x32xf32>
    %239 = arith.addf %227, %230 : vector<2x32xf32>
    %240 = arith.addf %233, %236 : vector<2x32xf32>
    %241 = arith.addf %237, %238 : vector<2x32xf32>
    %242 = arith.addf %239, %240 : vector<2x32xf32>
    %243 = arith.addf %241, %242 : vector<2x32xf32>
    %244 = vector.extract_strided_slice %41 {offsets = [6, 0], sizes = [2, 32], strides = [1, 1]} : vector<32x32xf32> to vector<2x32xf32>
    %245 = arith.addf %244, %243 : vector<2x32xf32>
    %246 = arith.negf %245 : vector<2x32xf32>
    %247 = math.exp %246 : vector<2x32xf32>
    %cst_42 = arith.constant 1.000000e+00 : f32
    %248 = vector.broadcast %cst_42 : f32 to vector<2x32xf32>
    %249 = arith.addf %248, %247 : vector<2x32xf32>
    %250 = arith.divf %248, %249 : vector<2x32xf32>
    %251 = math.tanh %245 : vector<2x32xf32>
    %252 = vector.extract_strided_slice %250 {offsets = [0, 8], sizes = [2, 8], strides = [1, 1]} : vector<2x32xf32> to vector<2x8xf32>
    %253 = arith.mulf %252, %209 : vector<2x8xf32>
    %254 = vector.extract_strided_slice %250 {offsets = [0, 0], sizes = [2, 8], strides = [1, 1]} : vector<2x32xf32> to vector<2x8xf32>
    %255 = vector.extract_strided_slice %251 {offsets = [0, 16], sizes = [2, 8], strides = [1, 1]} : vector<2x32xf32> to vector<2x8xf32>
    %256 = arith.mulf %254, %255 : vector<2x8xf32>
    %257 = arith.addf %253, %256 : vector<2x8xf32>
    %258 = vector.extract_strided_slice %250 {offsets = [0, 24], sizes = [2, 8], strides = [1, 1]} : vector<2x32xf32> to vector<2x8xf32>
    %259 = math.tanh %257 : vector<2x8xf32>
    %260 = arith.mulf %258, %259 : vector<2x8xf32>
    %261 = vector.extract_strided_slice %260 {offsets = [0, 0], sizes = [2, 1], strides = [1, 1]} : vector<2x8xf32> to vector<2x1xf32>
    %262 = vector.broadcast %261 : vector<2x1xf32> to vector<2x32xf32>
    %263 = arith.mulf %262, %45 : vector<2x32xf32>
    %264 = vector.extract_strided_slice %260 {offsets = [0, 1], sizes = [2, 1], strides = [1, 1]} : vector<2x8xf32> to vector<2x1xf32>
    %265 = vector.broadcast %264 : vector<2x1xf32> to vector<2x32xf32>
    %266 = arith.mulf %265, %48 : vector<2x32xf32>
    %267 = vector.extract_strided_slice %260 {offsets = [0, 2], sizes = [2, 1], strides = [1, 1]} : vector<2x8xf32> to vector<2x1xf32>
    %268 = vector.broadcast %267 : vector<2x1xf32> to vector<2x32xf32>
    %269 = arith.mulf %268, %51 : vector<2x32xf32>
    %270 = vector.extract_strided_slice %260 {offsets = [0, 3], sizes = [2, 1], strides = [1, 1]} : vector<2x8xf32> to vector<2x1xf32>
    %271 = vector.broadcast %270 : vector<2x1xf32> to vector<2x32xf32>
    %272 = arith.mulf %271, %54 : vector<2x32xf32>
    %273 = vector.extract_strided_slice %260 {offsets = [0, 4], sizes = [2, 1], strides = [1, 1]} : vector<2x8xf32> to vector<2x1xf32>
    %274 = vector.broadcast %273 : vector<2x1xf32> to vector<2x32xf32>
    %275 = arith.mulf %274, %57 : vector<2x32xf32>
    %276 = vector.extract_strided_slice %260 {offsets = [0, 5], sizes = [2, 1], strides = [1, 1]} : vector<2x8xf32> to vector<2x1xf32>
    %277 = vector.broadcast %276 : vector<2x1xf32> to vector<2x32xf32>
    %278 = arith.mulf %277, %60 : vector<2x32xf32>
    %279 = vector.extract_strided_slice %260 {offsets = [0, 6], sizes = [2, 1], strides = [1, 1]} : vector<2x8xf32> to vector<2x1xf32>
    %280 = vector.broadcast %279 : vector<2x1xf32> to vector<2x32xf32>
    %281 = arith.mulf %280, %63 : vector<2x32xf32>
    %282 = vector.extract_strided_slice %260 {offsets = [0, 7], sizes = [2, 1], strides = [1, 1]} : vector<2x8xf32> to vector<2x1xf32>
    %283 = vector.broadcast %282 : vector<2x1xf32> to vector<2x32xf32>
    %284 = arith.mulf %283, %66 : vector<2x32xf32>
    %285 = arith.addf %263, %266 : vector<2x32xf32>
    %286 = arith.addf %269, %272 : vector<2x32xf32>
    %287 = arith.addf %275, %278 : vector<2x32xf32>
    %288 = arith.addf %281, %284 : vector<2x32xf32>
    %289 = arith.addf %285, %286 : vector<2x32xf32>
    %290 = arith.addf %287, %288 : vector<2x32xf32>
    %291 = arith.addf %289, %290 : vector<2x32xf32>
    %292 = vector.extract_strided_slice %41 {offsets = [8, 0], sizes = [2, 32], strides = [1, 1]} : vector<32x32xf32> to vector<2x32xf32>
    %293 = arith.addf %292, %291 : vector<2x32xf32>
    %294 = arith.negf %293 : vector<2x32xf32>
    %295 = math.exp %294 : vector<2x32xf32>
    %cst_43 = arith.constant 1.000000e+00 : f32
    %296 = vector.broadcast %cst_43 : f32 to vector<2x32xf32>
    %297 = arith.addf %296, %295 : vector<2x32xf32>
    %298 = arith.divf %296, %297 : vector<2x32xf32>
    %299 = math.tanh %293 : vector<2x32xf32>
    %300 = vector.extract_strided_slice %298 {offsets = [0, 8], sizes = [2, 8], strides = [1, 1]} : vector<2x32xf32> to vector<2x8xf32>
    %301 = arith.mulf %300, %257 : vector<2x8xf32>
    %302 = vector.extract_strided_slice %298 {offsets = [0, 0], sizes = [2, 8], strides = [1, 1]} : vector<2x32xf32> to vector<2x8xf32>
    %303 = vector.extract_strided_slice %299 {offsets = [0, 16], sizes = [2, 8], strides = [1, 1]} : vector<2x32xf32> to vector<2x8xf32>
    %304 = arith.mulf %302, %303 : vector<2x8xf32>
    %305 = arith.addf %301, %304 : vector<2x8xf32>
    %306 = vector.extract_strided_slice %298 {offsets = [0, 24], sizes = [2, 8], strides = [1, 1]} : vector<2x32xf32> to vector<2x8xf32>
    %307 = math.tanh %305 : vector<2x8xf32>
    %308 = arith.mulf %306, %307 : vector<2x8xf32>
    %309 = vector.extract_strided_slice %308 {offsets = [0, 0], sizes = [2, 1], strides = [1, 1]} : vector<2x8xf32> to vector<2x1xf32>
    %310 = vector.broadcast %309 : vector<2x1xf32> to vector<2x32xf32>
    %311 = arith.mulf %310, %45 : vector<2x32xf32>
    %312 = vector.extract_strided_slice %308 {offsets = [0, 1], sizes = [2, 1], strides = [1, 1]} : vector<2x8xf32> to vector<2x1xf32>
    %313 = vector.broadcast %312 : vector<2x1xf32> to vector<2x32xf32>
    %314 = arith.mulf %313, %48 : vector<2x32xf32>
    %315 = vector.extract_strided_slice %308 {offsets = [0, 2], sizes = [2, 1], strides = [1, 1]} : vector<2x8xf32> to vector<2x1xf32>
    %316 = vector.broadcast %315 : vector<2x1xf32> to vector<2x32xf32>
    %317 = arith.mulf %316, %51 : vector<2x32xf32>
    %318 = vector.extract_strided_slice %308 {offsets = [0, 3], sizes = [2, 1], strides = [1, 1]} : vector<2x8xf32> to vector<2x1xf32>
    %319 = vector.broadcast %318 : vector<2x1xf32> to vector<2x32xf32>
    %320 = arith.mulf %319, %54 : vector<2x32xf32>
    %321 = vector.extract_strided_slice %308 {offsets = [0, 4], sizes = [2, 1], strides = [1, 1]} : vector<2x8xf32> to vector<2x1xf32>
    %322 = vector.broadcast %321 : vector<2x1xf32> to vector<2x32xf32>
    %323 = arith.mulf %322, %57 : vector<2x32xf32>
    %324 = vector.extract_strided_slice %308 {offsets = [0, 5], sizes = [2, 1], strides = [1, 1]} : vector<2x8xf32> to vector<2x1xf32>
    %325 = vector.broadcast %324 : vector<2x1xf32> to vector<2x32xf32>
    %326 = arith.mulf %325, %60 : vector<2x32xf32>
    %327 = vector.extract_strided_slice %308 {offsets = [0, 6], sizes = [2, 1], strides = [1, 1]} : vector<2x8xf32> to vector<2x1xf32>
    %328 = vector.broadcast %327 : vector<2x1xf32> to vector<2x32xf32>
    %329 = arith.mulf %328, %63 : vector<2x32xf32>
    %330 = vector.extract_strided_slice %308 {offsets = [0, 7], sizes = [2, 1], strides = [1, 1]} : vector<2x8xf32> to vector<2x1xf32>
    %331 = vector.broadcast %330 : vector<2x1xf32> to vector<2x32xf32>
    %332 = arith.mulf %331, %66 : vector<2x32xf32>
    %333 = arith.addf %311, %314 : vector<2x32xf32>
    %334 = arith.addf %317, %320 : vector<2x32xf32>
    %335 = arith.addf %323, %326 : vector<2x32xf32>
    %336 = arith.addf %329, %332 : vector<2x32xf32>
    %337 = arith.addf %333, %334 : vector<2x32xf32>
    %338 = arith.addf %335, %336 : vector<2x32xf32>
    %339 = arith.addf %337, %338 : vector<2x32xf32>
    %340 = vector.extract_strided_slice %41 {offsets = [10, 0], sizes = [2, 32], strides = [1, 1]} : vector<32x32xf32> to vector<2x32xf32>
    %341 = arith.addf %340, %339 : vector<2x32xf32>
    %342 = arith.negf %341 : vector<2x32xf32>
    %343 = math.exp %342 : vector<2x32xf32>
    %cst_44 = arith.constant 1.000000e+00 : f32
    %344 = vector.broadcast %cst_44 : f32 to vector<2x32xf32>
    %345 = arith.addf %344, %343 : vector<2x32xf32>
    %346 = arith.divf %344, %345 : vector<2x32xf32>
    %347 = math.tanh %341 : vector<2x32xf32>
    %348 = vector.extract_strided_slice %346 {offsets = [0, 8], sizes = [2, 8], strides = [1, 1]} : vector<2x32xf32> to vector<2x8xf32>
    %349 = arith.mulf %348, %305 : vector<2x8xf32>
    %350 = vector.extract_strided_slice %346 {offsets = [0, 0], sizes = [2, 8], strides = [1, 1]} : vector<2x32xf32> to vector<2x8xf32>
    %351 = vector.extract_strided_slice %347 {offsets = [0, 16], sizes = [2, 8], strides = [1, 1]} : vector<2x32xf32> to vector<2x8xf32>
    %352 = arith.mulf %350, %351 : vector<2x8xf32>
    %353 = arith.addf %349, %352 : vector<2x8xf32>
    %354 = vector.extract_strided_slice %346 {offsets = [0, 24], sizes = [2, 8], strides = [1, 1]} : vector<2x32xf32> to vector<2x8xf32>
    %355 = math.tanh %353 : vector<2x8xf32>
    %356 = arith.mulf %354, %355 : vector<2x8xf32>
    %357 = vector.extract_strided_slice %356 {offsets = [0, 0], sizes = [2, 1], strides = [1, 1]} : vector<2x8xf32> to vector<2x1xf32>
    %358 = vector.broadcast %357 : vector<2x1xf32> to vector<2x32xf32>
    %359 = arith.mulf %358, %45 : vector<2x32xf32>
    %360 = vector.extract_strided_slice %356 {offsets = [0, 1], sizes = [2, 1], strides = [1, 1]} : vector<2x8xf32> to vector<2x1xf32>
    %361 = vector.broadcast %360 : vector<2x1xf32> to vector<2x32xf32>
    %362 = arith.mulf %361, %48 : vector<2x32xf32>
    %363 = vector.extract_strided_slice %356 {offsets = [0, 2], sizes = [2, 1], strides = [1, 1]} : vector<2x8xf32> to vector<2x1xf32>
    %364 = vector.broadcast %363 : vector<2x1xf32> to vector<2x32xf32>
    %365 = arith.mulf %364, %51 : vector<2x32xf32>
    %366 = vector.extract_strided_slice %356 {offsets = [0, 3], sizes = [2, 1], strides = [1, 1]} : vector<2x8xf32> to vector<2x1xf32>
    %367 = vector.broadcast %366 : vector<2x1xf32> to vector<2x32xf32>
    %368 = arith.mulf %367, %54 : vector<2x32xf32>
    %369 = vector.extract_strided_slice %356 {offsets = [0, 4], sizes = [2, 1], strides = [1, 1]} : vector<2x8xf32> to vector<2x1xf32>
    %370 = vector.broadcast %369 : vector<2x1xf32> to vector<2x32xf32>
    %371 = arith.mulf %370, %57 : vector<2x32xf32>
    %372 = vector.extract_strided_slice %356 {offsets = [0, 5], sizes = [2, 1], strides = [1, 1]} : vector<2x8xf32> to vector<2x1xf32>
    %373 = vector.broadcast %372 : vector<2x1xf32> to vector<2x32xf32>
    %374 = arith.mulf %373, %60 : vector<2x32xf32>
    %375 = vector.extract_strided_slice %356 {offsets = [0, 6], sizes = [2, 1], strides = [1, 1]} : vector<2x8xf32> to vector<2x1xf32>
    %376 = vector.broadcast %375 : vector<2x1xf32> to vector<2x32xf32>
    %377 = arith.mulf %376, %63 : vector<2x32xf32>
    %378 = vector.extract_strided_slice %356 {offsets = [0, 7], sizes = [2, 1], strides = [1, 1]} : vector<2x8xf32> to vector<2x1xf32>
    %379 = vector.broadcast %378 : vector<2x1xf32> to vector<2x32xf32>
    %380 = arith.mulf %379, %66 : vector<2x32xf32>
    %381 = arith.addf %359, %362 : vector<2x32xf32>
    %382 = arith.addf %365, %368 : vector<2x32xf32>
    %383 = arith.addf %371, %374 : vector<2x32xf32>
    %384 = arith.addf %377, %380 : vector<2x32xf32>
    %385 = arith.addf %381, %382 : vector<2x32xf32>
    %386 = arith.addf %383, %384 : vector<2x32xf32>
    %387 = arith.addf %385, %386 : vector<2x32xf32>
    %388 = vector.extract_strided_slice %41 {offsets = [12, 0], sizes = [2, 32], strides = [1, 1]} : vector<32x32xf32> to vector<2x32xf32>
    %389 = arith.addf %388, %387 : vector<2x32xf32>
    %390 = arith.negf %389 : vector<2x32xf32>
    %391 = math.exp %390 : vector<2x32xf32>
    %cst_45 = arith.constant 1.000000e+00 : f32
    %392 = vector.broadcast %cst_45 : f32 to vector<2x32xf32>
    %393 = arith.addf %392, %391 : vector<2x32xf32>
    %394 = arith.divf %392, %393 : vector<2x32xf32>
    %395 = math.tanh %389 : vector<2x32xf32>
    %396 = vector.extract_strided_slice %394 {offsets = [0, 8], sizes = [2, 8], strides = [1, 1]} : vector<2x32xf32> to vector<2x8xf32>
    %397 = arith.mulf %396, %353 : vector<2x8xf32>
    %398 = vector.extract_strided_slice %394 {offsets = [0, 0], sizes = [2, 8], strides = [1, 1]} : vector<2x32xf32> to vector<2x8xf32>
    %399 = vector.extract_strided_slice %395 {offsets = [0, 16], sizes = [2, 8], strides = [1, 1]} : vector<2x32xf32> to vector<2x8xf32>
    %400 = arith.mulf %398, %399 : vector<2x8xf32>
    %401 = arith.addf %397, %400 : vector<2x8xf32>
    %402 = vector.extract_strided_slice %394 {offsets = [0, 24], sizes = [2, 8], strides = [1, 1]} : vector<2x32xf32> to vector<2x8xf32>
    %403 = math.tanh %401 : vector<2x8xf32>
    %404 = arith.mulf %402, %403 : vector<2x8xf32>
    %405 = vector.extract_strided_slice %404 {offsets = [0, 0], sizes = [2, 1], strides = [1, 1]} : vector<2x8xf32> to vector<2x1xf32>
    %406 = vector.broadcast %405 : vector<2x1xf32> to vector<2x32xf32>
    %407 = arith.mulf %406, %45 : vector<2x32xf32>
    %408 = vector.extract_strided_slice %404 {offsets = [0, 1], sizes = [2, 1], strides = [1, 1]} : vector<2x8xf32> to vector<2x1xf32>
    %409 = vector.broadcast %408 : vector<2x1xf32> to vector<2x32xf32>
    %410 = arith.mulf %409, %48 : vector<2x32xf32>
    %411 = vector.extract_strided_slice %404 {offsets = [0, 2], sizes = [2, 1], strides = [1, 1]} : vector<2x8xf32> to vector<2x1xf32>
    %412 = vector.broadcast %411 : vector<2x1xf32> to vector<2x32xf32>
    %413 = arith.mulf %412, %51 : vector<2x32xf32>
    %414 = vector.extract_strided_slice %404 {offsets = [0, 3], sizes = [2, 1], strides = [1, 1]} : vector<2x8xf32> to vector<2x1xf32>
    %415 = vector.broadcast %414 : vector<2x1xf32> to vector<2x32xf32>
    %416 = arith.mulf %415, %54 : vector<2x32xf32>
    %417 = vector.extract_strided_slice %404 {offsets = [0, 4], sizes = [2, 1], strides = [1, 1]} : vector<2x8xf32> to vector<2x1xf32>
    %418 = vector.broadcast %417 : vector<2x1xf32> to vector<2x32xf32>
    %419 = arith.mulf %418, %57 : vector<2x32xf32>
    %420 = vector.extract_strided_slice %404 {offsets = [0, 5], sizes = [2, 1], strides = [1, 1]} : vector<2x8xf32> to vector<2x1xf32>
    %421 = vector.broadcast %420 : vector<2x1xf32> to vector<2x32xf32>
    %422 = arith.mulf %421, %60 : vector<2x32xf32>
    %423 = vector.extract_strided_slice %404 {offsets = [0, 6], sizes = [2, 1], strides = [1, 1]} : vector<2x8xf32> to vector<2x1xf32>
    %424 = vector.broadcast %423 : vector<2x1xf32> to vector<2x32xf32>
    %425 = arith.mulf %424, %63 : vector<2x32xf32>
    %426 = vector.extract_strided_slice %404 {offsets = [0, 7], sizes = [2, 1], strides = [1, 1]} : vector<2x8xf32> to vector<2x1xf32>
    %427 = vector.broadcast %426 : vector<2x1xf32> to vector<2x32xf32>
    %428 = arith.mulf %427, %66 : vector<2x32xf32>
    %429 = arith.addf %407, %410 : vector<2x32xf32>
    %430 = arith.addf %413, %416 : vector<2x32xf32>
    %431 = arith.addf %419, %422 : vector<2x32xf32>
    %432 = arith.addf %425, %428 : vector<2x32xf32>
    %433 = arith.addf %429, %430 : vector<2x32xf32>
    %434 = arith.addf %431, %432 : vector<2x32xf32>
    %435 = arith.addf %433, %434 : vector<2x32xf32>
    %436 = vector.extract_strided_slice %41 {offsets = [14, 0], sizes = [2, 32], strides = [1, 1]} : vector<32x32xf32> to vector<2x32xf32>
    %437 = arith.addf %436, %435 : vector<2x32xf32>
    %438 = arith.negf %437 : vector<2x32xf32>
    %439 = math.exp %438 : vector<2x32xf32>
    %cst_46 = arith.constant 1.000000e+00 : f32
    %440 = vector.broadcast %cst_46 : f32 to vector<2x32xf32>
    %441 = arith.addf %440, %439 : vector<2x32xf32>
    %442 = arith.divf %440, %441 : vector<2x32xf32>
    %443 = math.tanh %437 : vector<2x32xf32>
    %444 = vector.extract_strided_slice %442 {offsets = [0, 8], sizes = [2, 8], strides = [1, 1]} : vector<2x32xf32> to vector<2x8xf32>
    %445 = arith.mulf %444, %401 : vector<2x8xf32>
    %446 = vector.extract_strided_slice %442 {offsets = [0, 0], sizes = [2, 8], strides = [1, 1]} : vector<2x32xf32> to vector<2x8xf32>
    %447 = vector.extract_strided_slice %443 {offsets = [0, 16], sizes = [2, 8], strides = [1, 1]} : vector<2x32xf32> to vector<2x8xf32>
    %448 = arith.mulf %446, %447 : vector<2x8xf32>
    %449 = arith.addf %445, %448 : vector<2x8xf32>
    %450 = vector.extract_strided_slice %442 {offsets = [0, 24], sizes = [2, 8], strides = [1, 1]} : vector<2x32xf32> to vector<2x8xf32>
    %451 = math.tanh %449 : vector<2x8xf32>
    %452 = arith.mulf %450, %451 : vector<2x8xf32>
    %453 = vector.extract_strided_slice %452 {offsets = [0, 0], sizes = [2, 1], strides = [1, 1]} : vector<2x8xf32> to vector<2x1xf32>
    %454 = vector.broadcast %453 : vector<2x1xf32> to vector<2x32xf32>
    %455 = arith.mulf %454, %45 : vector<2x32xf32>
    %456 = vector.extract_strided_slice %452 {offsets = [0, 1], sizes = [2, 1], strides = [1, 1]} : vector<2x8xf32> to vector<2x1xf32>
    %457 = vector.broadcast %456 : vector<2x1xf32> to vector<2x32xf32>
    %458 = arith.mulf %457, %48 : vector<2x32xf32>
    %459 = vector.extract_strided_slice %452 {offsets = [0, 2], sizes = [2, 1], strides = [1, 1]} : vector<2x8xf32> to vector<2x1xf32>
    %460 = vector.broadcast %459 : vector<2x1xf32> to vector<2x32xf32>
    %461 = arith.mulf %460, %51 : vector<2x32xf32>
    %462 = vector.extract_strided_slice %452 {offsets = [0, 3], sizes = [2, 1], strides = [1, 1]} : vector<2x8xf32> to vector<2x1xf32>
    %463 = vector.broadcast %462 : vector<2x1xf32> to vector<2x32xf32>
    %464 = arith.mulf %463, %54 : vector<2x32xf32>
    %465 = vector.extract_strided_slice %452 {offsets = [0, 4], sizes = [2, 1], strides = [1, 1]} : vector<2x8xf32> to vector<2x1xf32>
    %466 = vector.broadcast %465 : vector<2x1xf32> to vector<2x32xf32>
    %467 = arith.mulf %466, %57 : vector<2x32xf32>
    %468 = vector.extract_strided_slice %452 {offsets = [0, 5], sizes = [2, 1], strides = [1, 1]} : vector<2x8xf32> to vector<2x1xf32>
    %469 = vector.broadcast %468 : vector<2x1xf32> to vector<2x32xf32>
    %470 = arith.mulf %469, %60 : vector<2x32xf32>
    %471 = vector.extract_strided_slice %452 {offsets = [0, 6], sizes = [2, 1], strides = [1, 1]} : vector<2x8xf32> to vector<2x1xf32>
    %472 = vector.broadcast %471 : vector<2x1xf32> to vector<2x32xf32>
    %473 = arith.mulf %472, %63 : vector<2x32xf32>
    %474 = vector.extract_strided_slice %452 {offsets = [0, 7], sizes = [2, 1], strides = [1, 1]} : vector<2x8xf32> to vector<2x1xf32>
    %475 = vector.broadcast %474 : vector<2x1xf32> to vector<2x32xf32>
    %476 = arith.mulf %475, %66 : vector<2x32xf32>
    %477 = arith.addf %455, %458 : vector<2x32xf32>
    %478 = arith.addf %461, %464 : vector<2x32xf32>
    %479 = arith.addf %467, %470 : vector<2x32xf32>
    %480 = arith.addf %473, %476 : vector<2x32xf32>
    %481 = arith.addf %477, %478 : vector<2x32xf32>
    %482 = arith.addf %479, %480 : vector<2x32xf32>
    %483 = arith.addf %481, %482 : vector<2x32xf32>
    %484 = vector.extract_strided_slice %41 {offsets = [16, 0], sizes = [2, 32], strides = [1, 1]} : vector<32x32xf32> to vector<2x32xf32>
    %485 = arith.addf %484, %483 : vector<2x32xf32>
    %486 = arith.negf %485 : vector<2x32xf32>
    %487 = math.exp %486 : vector<2x32xf32>
    %cst_47 = arith.constant 1.000000e+00 : f32
    %488 = vector.broadcast %cst_47 : f32 to vector<2x32xf32>
    %489 = arith.addf %488, %487 : vector<2x32xf32>
    %490 = arith.divf %488, %489 : vector<2x32xf32>
    %491 = math.tanh %485 : vector<2x32xf32>
    %492 = vector.extract_strided_slice %490 {offsets = [0, 8], sizes = [2, 8], strides = [1, 1]} : vector<2x32xf32> to vector<2x8xf32>
    %493 = arith.mulf %492, %449 : vector<2x8xf32>
    %494 = vector.extract_strided_slice %490 {offsets = [0, 0], sizes = [2, 8], strides = [1, 1]} : vector<2x32xf32> to vector<2x8xf32>
    %495 = vector.extract_strided_slice %491 {offsets = [0, 16], sizes = [2, 8], strides = [1, 1]} : vector<2x32xf32> to vector<2x8xf32>
    %496 = arith.mulf %494, %495 : vector<2x8xf32>
    %497 = arith.addf %493, %496 : vector<2x8xf32>
    %498 = vector.extract_strided_slice %490 {offsets = [0, 24], sizes = [2, 8], strides = [1, 1]} : vector<2x32xf32> to vector<2x8xf32>
    %499 = math.tanh %497 : vector<2x8xf32>
    %500 = arith.mulf %498, %499 : vector<2x8xf32>
    %501 = vector.extract_strided_slice %500 {offsets = [0, 0], sizes = [2, 1], strides = [1, 1]} : vector<2x8xf32> to vector<2x1xf32>
    %502 = vector.broadcast %501 : vector<2x1xf32> to vector<2x32xf32>
    %503 = arith.mulf %502, %45 : vector<2x32xf32>
    %504 = vector.extract_strided_slice %500 {offsets = [0, 1], sizes = [2, 1], strides = [1, 1]} : vector<2x8xf32> to vector<2x1xf32>
    %505 = vector.broadcast %504 : vector<2x1xf32> to vector<2x32xf32>
    %506 = arith.mulf %505, %48 : vector<2x32xf32>
    %507 = vector.extract_strided_slice %500 {offsets = [0, 2], sizes = [2, 1], strides = [1, 1]} : vector<2x8xf32> to vector<2x1xf32>
    %508 = vector.broadcast %507 : vector<2x1xf32> to vector<2x32xf32>
    %509 = arith.mulf %508, %51 : vector<2x32xf32>
    %510 = vector.extract_strided_slice %500 {offsets = [0, 3], sizes = [2, 1], strides = [1, 1]} : vector<2x8xf32> to vector<2x1xf32>
    %511 = vector.broadcast %510 : vector<2x1xf32> to vector<2x32xf32>
    %512 = arith.mulf %511, %54 : vector<2x32xf32>
    %513 = vector.extract_strided_slice %500 {offsets = [0, 4], sizes = [2, 1], strides = [1, 1]} : vector<2x8xf32> to vector<2x1xf32>
    %514 = vector.broadcast %513 : vector<2x1xf32> to vector<2x32xf32>
    %515 = arith.mulf %514, %57 : vector<2x32xf32>
    %516 = vector.extract_strided_slice %500 {offsets = [0, 5], sizes = [2, 1], strides = [1, 1]} : vector<2x8xf32> to vector<2x1xf32>
    %517 = vector.broadcast %516 : vector<2x1xf32> to vector<2x32xf32>
    %518 = arith.mulf %517, %60 : vector<2x32xf32>
    %519 = vector.extract_strided_slice %500 {offsets = [0, 6], sizes = [2, 1], strides = [1, 1]} : vector<2x8xf32> to vector<2x1xf32>
    %520 = vector.broadcast %519 : vector<2x1xf32> to vector<2x32xf32>
    %521 = arith.mulf %520, %63 : vector<2x32xf32>
    %522 = vector.extract_strided_slice %500 {offsets = [0, 7], sizes = [2, 1], strides = [1, 1]} : vector<2x8xf32> to vector<2x1xf32>
    %523 = vector.broadcast %522 : vector<2x1xf32> to vector<2x32xf32>
    %524 = arith.mulf %523, %66 : vector<2x32xf32>
    %525 = arith.addf %503, %506 : vector<2x32xf32>
    %526 = arith.addf %509, %512 : vector<2x32xf32>
    %527 = arith.addf %515, %518 : vector<2x32xf32>
    %528 = arith.addf %521, %524 : vector<2x32xf32>
    %529 = arith.addf %525, %526 : vector<2x32xf32>
    %530 = arith.addf %527, %528 : vector<2x32xf32>
    %531 = arith.addf %529, %530 : vector<2x32xf32>
    %532 = vector.extract_strided_slice %41 {offsets = [18, 0], sizes = [2, 32], strides = [1, 1]} : vector<32x32xf32> to vector<2x32xf32>
    %533 = arith.addf %532, %531 : vector<2x32xf32>
    %534 = arith.negf %533 : vector<2x32xf32>
    %535 = math.exp %534 : vector<2x32xf32>
    %cst_48 = arith.constant 1.000000e+00 : f32
    %536 = vector.broadcast %cst_48 : f32 to vector<2x32xf32>
    %537 = arith.addf %536, %535 : vector<2x32xf32>
    %538 = arith.divf %536, %537 : vector<2x32xf32>
    %539 = math.tanh %533 : vector<2x32xf32>
    %540 = vector.extract_strided_slice %538 {offsets = [0, 8], sizes = [2, 8], strides = [1, 1]} : vector<2x32xf32> to vector<2x8xf32>
    %541 = arith.mulf %540, %497 : vector<2x8xf32>
    %542 = vector.extract_strided_slice %538 {offsets = [0, 0], sizes = [2, 8], strides = [1, 1]} : vector<2x32xf32> to vector<2x8xf32>
    %543 = vector.extract_strided_slice %539 {offsets = [0, 16], sizes = [2, 8], strides = [1, 1]} : vector<2x32xf32> to vector<2x8xf32>
    %544 = arith.mulf %542, %543 : vector<2x8xf32>
    %545 = arith.addf %541, %544 : vector<2x8xf32>
    %546 = vector.extract_strided_slice %538 {offsets = [0, 24], sizes = [2, 8], strides = [1, 1]} : vector<2x32xf32> to vector<2x8xf32>
    %547 = math.tanh %545 : vector<2x8xf32>
    %548 = arith.mulf %546, %547 : vector<2x8xf32>
    %549 = vector.extract_strided_slice %548 {offsets = [0, 0], sizes = [2, 1], strides = [1, 1]} : vector<2x8xf32> to vector<2x1xf32>
    %550 = vector.broadcast %549 : vector<2x1xf32> to vector<2x32xf32>
    %551 = arith.mulf %550, %45 : vector<2x32xf32>
    %552 = vector.extract_strided_slice %548 {offsets = [0, 1], sizes = [2, 1], strides = [1, 1]} : vector<2x8xf32> to vector<2x1xf32>
    %553 = vector.broadcast %552 : vector<2x1xf32> to vector<2x32xf32>
    %554 = arith.mulf %553, %48 : vector<2x32xf32>
    %555 = vector.extract_strided_slice %548 {offsets = [0, 2], sizes = [2, 1], strides = [1, 1]} : vector<2x8xf32> to vector<2x1xf32>
    %556 = vector.broadcast %555 : vector<2x1xf32> to vector<2x32xf32>
    %557 = arith.mulf %556, %51 : vector<2x32xf32>
    %558 = vector.extract_strided_slice %548 {offsets = [0, 3], sizes = [2, 1], strides = [1, 1]} : vector<2x8xf32> to vector<2x1xf32>
    %559 = vector.broadcast %558 : vector<2x1xf32> to vector<2x32xf32>
    %560 = arith.mulf %559, %54 : vector<2x32xf32>
    %561 = vector.extract_strided_slice %548 {offsets = [0, 4], sizes = [2, 1], strides = [1, 1]} : vector<2x8xf32> to vector<2x1xf32>
    %562 = vector.broadcast %561 : vector<2x1xf32> to vector<2x32xf32>
    %563 = arith.mulf %562, %57 : vector<2x32xf32>
    %564 = vector.extract_strided_slice %548 {offsets = [0, 5], sizes = [2, 1], strides = [1, 1]} : vector<2x8xf32> to vector<2x1xf32>
    %565 = vector.broadcast %564 : vector<2x1xf32> to vector<2x32xf32>
    %566 = arith.mulf %565, %60 : vector<2x32xf32>
    %567 = vector.extract_strided_slice %548 {offsets = [0, 6], sizes = [2, 1], strides = [1, 1]} : vector<2x8xf32> to vector<2x1xf32>
    %568 = vector.broadcast %567 : vector<2x1xf32> to vector<2x32xf32>
    %569 = arith.mulf %568, %63 : vector<2x32xf32>
    %570 = vector.extract_strided_slice %548 {offsets = [0, 7], sizes = [2, 1], strides = [1, 1]} : vector<2x8xf32> to vector<2x1xf32>
    %571 = vector.broadcast %570 : vector<2x1xf32> to vector<2x32xf32>
    %572 = arith.mulf %571, %66 : vector<2x32xf32>
    %573 = arith.addf %551, %554 : vector<2x32xf32>
    %574 = arith.addf %557, %560 : vector<2x32xf32>
    %575 = arith.addf %563, %566 : vector<2x32xf32>
    %576 = arith.addf %569, %572 : vector<2x32xf32>
    %577 = arith.addf %573, %574 : vector<2x32xf32>
    %578 = arith.addf %575, %576 : vector<2x32xf32>
    %579 = arith.addf %577, %578 : vector<2x32xf32>
    %580 = vector.extract_strided_slice %41 {offsets = [20, 0], sizes = [2, 32], strides = [1, 1]} : vector<32x32xf32> to vector<2x32xf32>
    %581 = arith.addf %580, %579 : vector<2x32xf32>
    %582 = arith.negf %581 : vector<2x32xf32>
    %583 = math.exp %582 : vector<2x32xf32>
    %cst_49 = arith.constant 1.000000e+00 : f32
    %584 = vector.broadcast %cst_49 : f32 to vector<2x32xf32>
    %585 = arith.addf %584, %583 : vector<2x32xf32>
    %586 = arith.divf %584, %585 : vector<2x32xf32>
    %587 = math.tanh %581 : vector<2x32xf32>
    %588 = vector.extract_strided_slice %586 {offsets = [0, 8], sizes = [2, 8], strides = [1, 1]} : vector<2x32xf32> to vector<2x8xf32>
    %589 = arith.mulf %588, %545 : vector<2x8xf32>
    %590 = vector.extract_strided_slice %586 {offsets = [0, 0], sizes = [2, 8], strides = [1, 1]} : vector<2x32xf32> to vector<2x8xf32>
    %591 = vector.extract_strided_slice %587 {offsets = [0, 16], sizes = [2, 8], strides = [1, 1]} : vector<2x32xf32> to vector<2x8xf32>
    %592 = arith.mulf %590, %591 : vector<2x8xf32>
    %593 = arith.addf %589, %592 : vector<2x8xf32>
    %594 = vector.extract_strided_slice %586 {offsets = [0, 24], sizes = [2, 8], strides = [1, 1]} : vector<2x32xf32> to vector<2x8xf32>
    %595 = math.tanh %593 : vector<2x8xf32>
    %596 = arith.mulf %594, %595 : vector<2x8xf32>
    %597 = vector.extract_strided_slice %596 {offsets = [0, 0], sizes = [2, 1], strides = [1, 1]} : vector<2x8xf32> to vector<2x1xf32>
    %598 = vector.broadcast %597 : vector<2x1xf32> to vector<2x32xf32>
    %599 = arith.mulf %598, %45 : vector<2x32xf32>
    %600 = vector.extract_strided_slice %596 {offsets = [0, 1], sizes = [2, 1], strides = [1, 1]} : vector<2x8xf32> to vector<2x1xf32>
    %601 = vector.broadcast %600 : vector<2x1xf32> to vector<2x32xf32>
    %602 = arith.mulf %601, %48 : vector<2x32xf32>
    %603 = vector.extract_strided_slice %596 {offsets = [0, 2], sizes = [2, 1], strides = [1, 1]} : vector<2x8xf32> to vector<2x1xf32>
    %604 = vector.broadcast %603 : vector<2x1xf32> to vector<2x32xf32>
    %605 = arith.mulf %604, %51 : vector<2x32xf32>
    %606 = vector.extract_strided_slice %596 {offsets = [0, 3], sizes = [2, 1], strides = [1, 1]} : vector<2x8xf32> to vector<2x1xf32>
    %607 = vector.broadcast %606 : vector<2x1xf32> to vector<2x32xf32>
    %608 = arith.mulf %607, %54 : vector<2x32xf32>
    %609 = vector.extract_strided_slice %596 {offsets = [0, 4], sizes = [2, 1], strides = [1, 1]} : vector<2x8xf32> to vector<2x1xf32>
    %610 = vector.broadcast %609 : vector<2x1xf32> to vector<2x32xf32>
    %611 = arith.mulf %610, %57 : vector<2x32xf32>
    %612 = vector.extract_strided_slice %596 {offsets = [0, 5], sizes = [2, 1], strides = [1, 1]} : vector<2x8xf32> to vector<2x1xf32>
    %613 = vector.broadcast %612 : vector<2x1xf32> to vector<2x32xf32>
    %614 = arith.mulf %613, %60 : vector<2x32xf32>
    %615 = vector.extract_strided_slice %596 {offsets = [0, 6], sizes = [2, 1], strides = [1, 1]} : vector<2x8xf32> to vector<2x1xf32>
    %616 = vector.broadcast %615 : vector<2x1xf32> to vector<2x32xf32>
    %617 = arith.mulf %616, %63 : vector<2x32xf32>
    %618 = vector.extract_strided_slice %596 {offsets = [0, 7], sizes = [2, 1], strides = [1, 1]} : vector<2x8xf32> to vector<2x1xf32>
    %619 = vector.broadcast %618 : vector<2x1xf32> to vector<2x32xf32>
    %620 = arith.mulf %619, %66 : vector<2x32xf32>
    %621 = arith.addf %599, %602 : vector<2x32xf32>
    %622 = arith.addf %605, %608 : vector<2x32xf32>
    %623 = arith.addf %611, %614 : vector<2x32xf32>
    %624 = arith.addf %617, %620 : vector<2x32xf32>
    %625 = arith.addf %621, %622 : vector<2x32xf32>
    %626 = arith.addf %623, %624 : vector<2x32xf32>
    %627 = arith.addf %625, %626 : vector<2x32xf32>
    %628 = vector.extract_strided_slice %41 {offsets = [22, 0], sizes = [2, 32], strides = [1, 1]} : vector<32x32xf32> to vector<2x32xf32>
    %629 = arith.addf %628, %627 : vector<2x32xf32>
    %630 = arith.negf %629 : vector<2x32xf32>
    %631 = math.exp %630 : vector<2x32xf32>
    %cst_50 = arith.constant 1.000000e+00 : f32
    %632 = vector.broadcast %cst_50 : f32 to vector<2x32xf32>
    %633 = arith.addf %632, %631 : vector<2x32xf32>
    %634 = arith.divf %632, %633 : vector<2x32xf32>
    %635 = math.tanh %629 : vector<2x32xf32>
    %636 = vector.extract_strided_slice %634 {offsets = [0, 8], sizes = [2, 8], strides = [1, 1]} : vector<2x32xf32> to vector<2x8xf32>
    %637 = arith.mulf %636, %593 : vector<2x8xf32>
    %638 = vector.extract_strided_slice %634 {offsets = [0, 0], sizes = [2, 8], strides = [1, 1]} : vector<2x32xf32> to vector<2x8xf32>
    %639 = vector.extract_strided_slice %635 {offsets = [0, 16], sizes = [2, 8], strides = [1, 1]} : vector<2x32xf32> to vector<2x8xf32>
    %640 = arith.mulf %638, %639 : vector<2x8xf32>
    %641 = arith.addf %637, %640 : vector<2x8xf32>
    %642 = vector.extract_strided_slice %634 {offsets = [0, 24], sizes = [2, 8], strides = [1, 1]} : vector<2x32xf32> to vector<2x8xf32>
    %643 = math.tanh %641 : vector<2x8xf32>
    %644 = arith.mulf %642, %643 : vector<2x8xf32>
    %645 = vector.extract_strided_slice %644 {offsets = [0, 0], sizes = [2, 1], strides = [1, 1]} : vector<2x8xf32> to vector<2x1xf32>
    %646 = vector.broadcast %645 : vector<2x1xf32> to vector<2x32xf32>
    %647 = arith.mulf %646, %45 : vector<2x32xf32>
    %648 = vector.extract_strided_slice %644 {offsets = [0, 1], sizes = [2, 1], strides = [1, 1]} : vector<2x8xf32> to vector<2x1xf32>
    %649 = vector.broadcast %648 : vector<2x1xf32> to vector<2x32xf32>
    %650 = arith.mulf %649, %48 : vector<2x32xf32>
    %651 = vector.extract_strided_slice %644 {offsets = [0, 2], sizes = [2, 1], strides = [1, 1]} : vector<2x8xf32> to vector<2x1xf32>
    %652 = vector.broadcast %651 : vector<2x1xf32> to vector<2x32xf32>
    %653 = arith.mulf %652, %51 : vector<2x32xf32>
    %654 = vector.extract_strided_slice %644 {offsets = [0, 3], sizes = [2, 1], strides = [1, 1]} : vector<2x8xf32> to vector<2x1xf32>
    %655 = vector.broadcast %654 : vector<2x1xf32> to vector<2x32xf32>
    %656 = arith.mulf %655, %54 : vector<2x32xf32>
    %657 = vector.extract_strided_slice %644 {offsets = [0, 4], sizes = [2, 1], strides = [1, 1]} : vector<2x8xf32> to vector<2x1xf32>
    %658 = vector.broadcast %657 : vector<2x1xf32> to vector<2x32xf32>
    %659 = arith.mulf %658, %57 : vector<2x32xf32>
    %660 = vector.extract_strided_slice %644 {offsets = [0, 5], sizes = [2, 1], strides = [1, 1]} : vector<2x8xf32> to vector<2x1xf32>
    %661 = vector.broadcast %660 : vector<2x1xf32> to vector<2x32xf32>
    %662 = arith.mulf %661, %60 : vector<2x32xf32>
    %663 = vector.extract_strided_slice %644 {offsets = [0, 6], sizes = [2, 1], strides = [1, 1]} : vector<2x8xf32> to vector<2x1xf32>
    %664 = vector.broadcast %663 : vector<2x1xf32> to vector<2x32xf32>
    %665 = arith.mulf %664, %63 : vector<2x32xf32>
    %666 = vector.extract_strided_slice %644 {offsets = [0, 7], sizes = [2, 1], strides = [1, 1]} : vector<2x8xf32> to vector<2x1xf32>
    %667 = vector.broadcast %666 : vector<2x1xf32> to vector<2x32xf32>
    %668 = arith.mulf %667, %66 : vector<2x32xf32>
    %669 = arith.addf %647, %650 : vector<2x32xf32>
    %670 = arith.addf %653, %656 : vector<2x32xf32>
    %671 = arith.addf %659, %662 : vector<2x32xf32>
    %672 = arith.addf %665, %668 : vector<2x32xf32>
    %673 = arith.addf %669, %670 : vector<2x32xf32>
    %674 = arith.addf %671, %672 : vector<2x32xf32>
    %675 = arith.addf %673, %674 : vector<2x32xf32>
    %676 = vector.extract_strided_slice %41 {offsets = [24, 0], sizes = [2, 32], strides = [1, 1]} : vector<32x32xf32> to vector<2x32xf32>
    %677 = arith.addf %676, %675 : vector<2x32xf32>
    %678 = arith.negf %677 : vector<2x32xf32>
    %679 = math.exp %678 : vector<2x32xf32>
    %cst_51 = arith.constant 1.000000e+00 : f32
    %680 = vector.broadcast %cst_51 : f32 to vector<2x32xf32>
    %681 = arith.addf %680, %679 : vector<2x32xf32>
    %682 = arith.divf %680, %681 : vector<2x32xf32>
    %683 = math.tanh %677 : vector<2x32xf32>
    %684 = vector.extract_strided_slice %682 {offsets = [0, 8], sizes = [2, 8], strides = [1, 1]} : vector<2x32xf32> to vector<2x8xf32>
    %685 = arith.mulf %684, %641 : vector<2x8xf32>
    %686 = vector.extract_strided_slice %682 {offsets = [0, 0], sizes = [2, 8], strides = [1, 1]} : vector<2x32xf32> to vector<2x8xf32>
    %687 = vector.extract_strided_slice %683 {offsets = [0, 16], sizes = [2, 8], strides = [1, 1]} : vector<2x32xf32> to vector<2x8xf32>
    %688 = arith.mulf %686, %687 : vector<2x8xf32>
    %689 = arith.addf %685, %688 : vector<2x8xf32>
    %690 = vector.extract_strided_slice %682 {offsets = [0, 24], sizes = [2, 8], strides = [1, 1]} : vector<2x32xf32> to vector<2x8xf32>
    %691 = math.tanh %689 : vector<2x8xf32>
    %692 = arith.mulf %690, %691 : vector<2x8xf32>
    %693 = vector.extract_strided_slice %692 {offsets = [0, 0], sizes = [2, 1], strides = [1, 1]} : vector<2x8xf32> to vector<2x1xf32>
    %694 = vector.broadcast %693 : vector<2x1xf32> to vector<2x32xf32>
    %695 = arith.mulf %694, %45 : vector<2x32xf32>
    %696 = vector.extract_strided_slice %692 {offsets = [0, 1], sizes = [2, 1], strides = [1, 1]} : vector<2x8xf32> to vector<2x1xf32>
    %697 = vector.broadcast %696 : vector<2x1xf32> to vector<2x32xf32>
    %698 = arith.mulf %697, %48 : vector<2x32xf32>
    %699 = vector.extract_strided_slice %692 {offsets = [0, 2], sizes = [2, 1], strides = [1, 1]} : vector<2x8xf32> to vector<2x1xf32>
    %700 = vector.broadcast %699 : vector<2x1xf32> to vector<2x32xf32>
    %701 = arith.mulf %700, %51 : vector<2x32xf32>
    %702 = vector.extract_strided_slice %692 {offsets = [0, 3], sizes = [2, 1], strides = [1, 1]} : vector<2x8xf32> to vector<2x1xf32>
    %703 = vector.broadcast %702 : vector<2x1xf32> to vector<2x32xf32>
    %704 = arith.mulf %703, %54 : vector<2x32xf32>
    %705 = vector.extract_strided_slice %692 {offsets = [0, 4], sizes = [2, 1], strides = [1, 1]} : vector<2x8xf32> to vector<2x1xf32>
    %706 = vector.broadcast %705 : vector<2x1xf32> to vector<2x32xf32>
    %707 = arith.mulf %706, %57 : vector<2x32xf32>
    %708 = vector.extract_strided_slice %692 {offsets = [0, 5], sizes = [2, 1], strides = [1, 1]} : vector<2x8xf32> to vector<2x1xf32>
    %709 = vector.broadcast %708 : vector<2x1xf32> to vector<2x32xf32>
    %710 = arith.mulf %709, %60 : vector<2x32xf32>
    %711 = vector.extract_strided_slice %692 {offsets = [0, 6], sizes = [2, 1], strides = [1, 1]} : vector<2x8xf32> to vector<2x1xf32>
    %712 = vector.broadcast %711 : vector<2x1xf32> to vector<2x32xf32>
    %713 = arith.mulf %712, %63 : vector<2x32xf32>
    %714 = vector.extract_strided_slice %692 {offsets = [0, 7], sizes = [2, 1], strides = [1, 1]} : vector<2x8xf32> to vector<2x1xf32>
    %715 = vector.broadcast %714 : vector<2x1xf32> to vector<2x32xf32>
    %716 = arith.mulf %715, %66 : vector<2x32xf32>
    %717 = arith.addf %695, %698 : vector<2x32xf32>
    %718 = arith.addf %701, %704 : vector<2x32xf32>
    %719 = arith.addf %707, %710 : vector<2x32xf32>
    %720 = arith.addf %713, %716 : vector<2x32xf32>
    %721 = arith.addf %717, %718 : vector<2x32xf32>
    %722 = arith.addf %719, %720 : vector<2x32xf32>
    %723 = arith.addf %721, %722 : vector<2x32xf32>
    %724 = vector.extract_strided_slice %41 {offsets = [26, 0], sizes = [2, 32], strides = [1, 1]} : vector<32x32xf32> to vector<2x32xf32>
    %725 = arith.addf %724, %723 : vector<2x32xf32>
    %726 = arith.negf %725 : vector<2x32xf32>
    %727 = math.exp %726 : vector<2x32xf32>
    %cst_52 = arith.constant 1.000000e+00 : f32
    %728 = vector.broadcast %cst_52 : f32 to vector<2x32xf32>
    %729 = arith.addf %728, %727 : vector<2x32xf32>
    %730 = arith.divf %728, %729 : vector<2x32xf32>
    %731 = math.tanh %725 : vector<2x32xf32>
    %732 = vector.extract_strided_slice %730 {offsets = [0, 8], sizes = [2, 8], strides = [1, 1]} : vector<2x32xf32> to vector<2x8xf32>
    %733 = arith.mulf %732, %689 : vector<2x8xf32>
    %734 = vector.extract_strided_slice %730 {offsets = [0, 0], sizes = [2, 8], strides = [1, 1]} : vector<2x32xf32> to vector<2x8xf32>
    %735 = vector.extract_strided_slice %731 {offsets = [0, 16], sizes = [2, 8], strides = [1, 1]} : vector<2x32xf32> to vector<2x8xf32>
    %736 = arith.mulf %734, %735 : vector<2x8xf32>
    %737 = arith.addf %733, %736 : vector<2x8xf32>
    %738 = vector.extract_strided_slice %730 {offsets = [0, 24], sizes = [2, 8], strides = [1, 1]} : vector<2x32xf32> to vector<2x8xf32>
    %739 = math.tanh %737 : vector<2x8xf32>
    %740 = arith.mulf %738, %739 : vector<2x8xf32>
    %741 = vector.extract_strided_slice %740 {offsets = [0, 0], sizes = [2, 1], strides = [1, 1]} : vector<2x8xf32> to vector<2x1xf32>
    %742 = vector.broadcast %741 : vector<2x1xf32> to vector<2x32xf32>
    %743 = arith.mulf %742, %45 : vector<2x32xf32>
    %744 = vector.extract_strided_slice %740 {offsets = [0, 1], sizes = [2, 1], strides = [1, 1]} : vector<2x8xf32> to vector<2x1xf32>
    %745 = vector.broadcast %744 : vector<2x1xf32> to vector<2x32xf32>
    %746 = arith.mulf %745, %48 : vector<2x32xf32>
    %747 = vector.extract_strided_slice %740 {offsets = [0, 2], sizes = [2, 1], strides = [1, 1]} : vector<2x8xf32> to vector<2x1xf32>
    %748 = vector.broadcast %747 : vector<2x1xf32> to vector<2x32xf32>
    %749 = arith.mulf %748, %51 : vector<2x32xf32>
    %750 = vector.extract_strided_slice %740 {offsets = [0, 3], sizes = [2, 1], strides = [1, 1]} : vector<2x8xf32> to vector<2x1xf32>
    %751 = vector.broadcast %750 : vector<2x1xf32> to vector<2x32xf32>
    %752 = arith.mulf %751, %54 : vector<2x32xf32>
    %753 = vector.extract_strided_slice %740 {offsets = [0, 4], sizes = [2, 1], strides = [1, 1]} : vector<2x8xf32> to vector<2x1xf32>
    %754 = vector.broadcast %753 : vector<2x1xf32> to vector<2x32xf32>
    %755 = arith.mulf %754, %57 : vector<2x32xf32>
    %756 = vector.extract_strided_slice %740 {offsets = [0, 5], sizes = [2, 1], strides = [1, 1]} : vector<2x8xf32> to vector<2x1xf32>
    %757 = vector.broadcast %756 : vector<2x1xf32> to vector<2x32xf32>
    %758 = arith.mulf %757, %60 : vector<2x32xf32>
    %759 = vector.extract_strided_slice %740 {offsets = [0, 6], sizes = [2, 1], strides = [1, 1]} : vector<2x8xf32> to vector<2x1xf32>
    %760 = vector.broadcast %759 : vector<2x1xf32> to vector<2x32xf32>
    %761 = arith.mulf %760, %63 : vector<2x32xf32>
    %762 = vector.extract_strided_slice %740 {offsets = [0, 7], sizes = [2, 1], strides = [1, 1]} : vector<2x8xf32> to vector<2x1xf32>
    %763 = vector.broadcast %762 : vector<2x1xf32> to vector<2x32xf32>
    %764 = arith.mulf %763, %66 : vector<2x32xf32>
    %765 = arith.addf %743, %746 : vector<2x32xf32>
    %766 = arith.addf %749, %752 : vector<2x32xf32>
    %767 = arith.addf %755, %758 : vector<2x32xf32>
    %768 = arith.addf %761, %764 : vector<2x32xf32>
    %769 = arith.addf %765, %766 : vector<2x32xf32>
    %770 = arith.addf %767, %768 : vector<2x32xf32>
    %771 = arith.addf %769, %770 : vector<2x32xf32>
    %772 = vector.extract_strided_slice %41 {offsets = [28, 0], sizes = [2, 32], strides = [1, 1]} : vector<32x32xf32> to vector<2x32xf32>
    %773 = arith.addf %772, %771 : vector<2x32xf32>
    %774 = arith.negf %773 : vector<2x32xf32>
    %775 = math.exp %774 : vector<2x32xf32>
    %cst_53 = arith.constant 1.000000e+00 : f32
    %776 = vector.broadcast %cst_53 : f32 to vector<2x32xf32>
    %777 = arith.addf %776, %775 : vector<2x32xf32>
    %778 = arith.divf %776, %777 : vector<2x32xf32>
    %779 = math.tanh %773 : vector<2x32xf32>
    %780 = vector.extract_strided_slice %778 {offsets = [0, 8], sizes = [2, 8], strides = [1, 1]} : vector<2x32xf32> to vector<2x8xf32>
    %781 = arith.mulf %780, %737 : vector<2x8xf32>
    %782 = vector.extract_strided_slice %778 {offsets = [0, 0], sizes = [2, 8], strides = [1, 1]} : vector<2x32xf32> to vector<2x8xf32>
    %783 = vector.extract_strided_slice %779 {offsets = [0, 16], sizes = [2, 8], strides = [1, 1]} : vector<2x32xf32> to vector<2x8xf32>
    %784 = arith.mulf %782, %783 : vector<2x8xf32>
    %785 = arith.addf %781, %784 : vector<2x8xf32>
    %786 = vector.extract_strided_slice %778 {offsets = [0, 24], sizes = [2, 8], strides = [1, 1]} : vector<2x32xf32> to vector<2x8xf32>
    %787 = math.tanh %785 : vector<2x8xf32>
    %788 = arith.mulf %786, %787 : vector<2x8xf32>
    %789 = vector.extract_strided_slice %788 {offsets = [0, 0], sizes = [2, 1], strides = [1, 1]} : vector<2x8xf32> to vector<2x1xf32>
    %790 = vector.broadcast %789 : vector<2x1xf32> to vector<2x32xf32>
    %791 = arith.mulf %790, %45 : vector<2x32xf32>
    %792 = vector.extract_strided_slice %788 {offsets = [0, 1], sizes = [2, 1], strides = [1, 1]} : vector<2x8xf32> to vector<2x1xf32>
    %793 = vector.broadcast %792 : vector<2x1xf32> to vector<2x32xf32>
    %794 = arith.mulf %793, %48 : vector<2x32xf32>
    %795 = vector.extract_strided_slice %788 {offsets = [0, 2], sizes = [2, 1], strides = [1, 1]} : vector<2x8xf32> to vector<2x1xf32>
    %796 = vector.broadcast %795 : vector<2x1xf32> to vector<2x32xf32>
    %797 = arith.mulf %796, %51 : vector<2x32xf32>
    %798 = vector.extract_strided_slice %788 {offsets = [0, 3], sizes = [2, 1], strides = [1, 1]} : vector<2x8xf32> to vector<2x1xf32>
    %799 = vector.broadcast %798 : vector<2x1xf32> to vector<2x32xf32>
    %800 = arith.mulf %799, %54 : vector<2x32xf32>
    %801 = vector.extract_strided_slice %788 {offsets = [0, 4], sizes = [2, 1], strides = [1, 1]} : vector<2x8xf32> to vector<2x1xf32>
    %802 = vector.broadcast %801 : vector<2x1xf32> to vector<2x32xf32>
    %803 = arith.mulf %802, %57 : vector<2x32xf32>
    %804 = vector.extract_strided_slice %788 {offsets = [0, 5], sizes = [2, 1], strides = [1, 1]} : vector<2x8xf32> to vector<2x1xf32>
    %805 = vector.broadcast %804 : vector<2x1xf32> to vector<2x32xf32>
    %806 = arith.mulf %805, %60 : vector<2x32xf32>
    %807 = vector.extract_strided_slice %788 {offsets = [0, 6], sizes = [2, 1], strides = [1, 1]} : vector<2x8xf32> to vector<2x1xf32>
    %808 = vector.broadcast %807 : vector<2x1xf32> to vector<2x32xf32>
    %809 = arith.mulf %808, %63 : vector<2x32xf32>
    %810 = vector.extract_strided_slice %788 {offsets = [0, 7], sizes = [2, 1], strides = [1, 1]} : vector<2x8xf32> to vector<2x1xf32>
    %811 = vector.broadcast %810 : vector<2x1xf32> to vector<2x32xf32>
    %812 = arith.mulf %811, %66 : vector<2x32xf32>
    %813 = arith.addf %791, %794 : vector<2x32xf32>
    %814 = arith.addf %797, %800 : vector<2x32xf32>
    %815 = arith.addf %803, %806 : vector<2x32xf32>
    %816 = arith.addf %809, %812 : vector<2x32xf32>
    %817 = arith.addf %813, %814 : vector<2x32xf32>
    %818 = arith.addf %815, %816 : vector<2x32xf32>
    %819 = arith.addf %817, %818 : vector<2x32xf32>
    %820 = vector.extract_strided_slice %41 {offsets = [30, 0], sizes = [2, 32], strides = [1, 1]} : vector<32x32xf32> to vector<2x32xf32>
    %821 = arith.addf %820, %819 : vector<2x32xf32>
    %822 = arith.negf %821 : vector<2x32xf32>
    %823 = math.exp %822 : vector<2x32xf32>
    %cst_54 = arith.constant 1.000000e+00 : f32
    %824 = vector.broadcast %cst_54 : f32 to vector<2x32xf32>
    %825 = arith.addf %824, %823 : vector<2x32xf32>
    %826 = arith.divf %824, %825 : vector<2x32xf32>
    %827 = math.tanh %821 : vector<2x32xf32>
    %828 = vector.extract_strided_slice %826 {offsets = [0, 8], sizes = [2, 8], strides = [1, 1]} : vector<2x32xf32> to vector<2x8xf32>
    %829 = arith.mulf %828, %785 : vector<2x8xf32>
    %830 = vector.extract_strided_slice %826 {offsets = [0, 0], sizes = [2, 8], strides = [1, 1]} : vector<2x32xf32> to vector<2x8xf32>
    %831 = vector.extract_strided_slice %827 {offsets = [0, 16], sizes = [2, 8], strides = [1, 1]} : vector<2x32xf32> to vector<2x8xf32>
    %832 = arith.mulf %830, %831 : vector<2x8xf32>
    %833 = arith.addf %829, %832 : vector<2x8xf32>
    %834 = vector.extract_strided_slice %826 {offsets = [0, 24], sizes = [2, 8], strides = [1, 1]} : vector<2x32xf32> to vector<2x8xf32>
    %835 = math.tanh %833 : vector<2x8xf32>
    %836 = arith.mulf %834, %835 : vector<2x8xf32>
    %c0_55 = arith.constant 0 : index
    %c0_56 = arith.constant 0 : index
    %837 = vector.load %arg5[%c0_55, %c0_56] : memref<32x32xf32, #tpu.memory_space<vmem>>, vector<32x32xf32>
    %c0_57 = arith.constant 0 : index
    %c0_58 = arith.constant 0 : index
    %838 = vector.load %arg6[%c0_57, %c0_58] : memref<32x128xf32, #tpu.memory_space<vmem>>, vector<32x128xf32>
    %cst_59 = arith.constant dense<0.000000e+00> : vector<32x128xf32>
    %839 = tpu.matmul %837, %838, %cst_59 {dimension_numbers = #tpu.dot_dimension_numbers<[1], [0], [0], [1], [0, 0, 1, 1], [], []>} : vector<32x32xf32>, vector<32x128xf32>, vector<32x128xf32> -> vector<32x128xf32>
    %c0_60 = arith.constant 0 : index
    %c0_61 = arith.constant 0 : index
    %840 = vector.load %arg7[%c0_60, %c0_61] : memref<1x128xf32, #tpu.memory_space<vmem>>, vector<1x128xf32>
    %841 = vector.broadcast %840 : vector<1x128xf32> to vector<32x128xf32>
    %842 = arith.mulf %839, %841 : vector<32x128xf32>
    %c0_62 = arith.constant 0 : index
    %c0_63 = arith.constant 0 : index
    %843 = vector.load %arg8[%c0_62, %c0_63] : memref<1x128xf32, #tpu.memory_space<vmem>>, vector<1x128xf32>
    %844 = vector.broadcast %843 : vector<1x128xf32> to vector<32x128xf32>
    %845 = arith.addf %842, %844 : vector<32x128xf32>
    %cst_64 = arith.constant 0.000000e+00 : f32
    %846 = vector.broadcast %cst_64 : f32 to vector<32x128xf32>
    %847 = arith.maximumf %845, %846 : vector<32x128xf32>
    %848 = vector.extract_strided_slice %847 {offsets = [0, 0], sizes = [16, 128], strides = [1, 1]} : vector<32x128xf32> to vector<16x128xf32>
    %cst_65 = arith.constant dense<0.000000e+00> : vector<128xf32>
    %849 = vector.multi_reduction <add>, %848, %cst_65 [0] : vector<16x128xf32> to vector<128xf32>
    %850 = vector.shape_cast %849 : vector<128xf32> to vector<1x128xf32>
    %cst_66 = arith.constant 1.600000e+01 : f32
    %851 = vector.broadcast %cst_66 : f32 to vector<1x128xf32>
    %852 = arith.divf %850, %851 : vector<1x128xf32>
    %853 = vector.extract_strided_slice %847 {offsets = [16, 0], sizes = [16, 128], strides = [1, 1]} : vector<32x128xf32> to vector<16x128xf32>
    %cst_67 = arith.constant dense<0.000000e+00> : vector<128xf32>
    %854 = vector.multi_reduction <add>, %853, %cst_67 [0] : vector<16x128xf32> to vector<128xf32>
    %855 = vector.shape_cast %854 : vector<128xf32> to vector<1x128xf32>
    %cst_68 = arith.constant 1.600000e+01 : f32
    %856 = vector.broadcast %cst_68 : f32 to vector<1x128xf32>
    %857 = arith.divf %855, %856 : vector<1x128xf32>
    %858 = tpu.concatenate %852, %857 in 0 : vector<1x128xf32>, vector<1x128xf32> -> vector<2x128xf32>
    %c0_69 = arith.constant 0 : index
    %c0_70 = arith.constant 0 : index
    %859 = vector.load %arg9[%c0_69, %c0_70] : memref<128x8xf32, #tpu.memory_space<vmem>>, vector<128x8xf32>
    %cst_71 = arith.constant dense<0.000000e+00> : vector<2x8xf32>
    %860 = tpu.matmul %858, %859, %cst_71 {dimension_numbers = #tpu.dot_dimension_numbers<[1], [0], [0], [1], [0, 0, 1, 1], [], []>} : vector<2x128xf32>, vector<128x8xf32>, vector<2x8xf32> -> vector<2x8xf32>
    %cst_72 = arith.constant 0.000000e+00 : f32
    %861 = vector.broadcast %cst_72 : f32 to vector<2x8xf32>
    %862 = arith.maximumf %860, %861 : vector<2x8xf32>
    %c0_73 = arith.constant 0 : index
    %c0_74 = arith.constant 0 : index
    %863 = vector.load %arg10[%c0_73, %c0_74] : memref<8x128xf32, #tpu.memory_space<vmem>>, vector<8x128xf32>
    %cst_75 = arith.constant dense<0.000000e+00> : vector<2x128xf32>
    %864 = tpu.matmul %862, %863, %cst_75 {dimension_numbers = #tpu.dot_dimension_numbers<[1], [0], [0], [1], [0, 0, 1, 1], [], []>} : vector<2x8xf32>, vector<8x128xf32>, vector<2x128xf32> -> vector<2x128xf32>
    %865 = arith.negf %864 : vector<2x128xf32>
    %866 = math.exp %865 : vector<2x128xf32>
    %cst_76 = arith.constant 1.000000e+00 : f32
    %867 = vector.broadcast %cst_76 : f32 to vector<2x128xf32>
    %868 = arith.addf %867, %866 : vector<2x128xf32>
    %869 = arith.divf %867, %868 : vector<2x128xf32>
    %870 = vector.extract_strided_slice %847 {offsets = [0, 0], sizes = [16, 128], strides = [1, 1]} : vector<32x128xf32> to vector<16x128xf32>
    %871 = vector.extract_strided_slice %869 {offsets = [0, 0], sizes = [1, 128], strides = [1, 1]} : vector<2x128xf32> to vector<1x128xf32>
    %872 = vector.broadcast %871 : vector<1x128xf32> to vector<16x128xf32>
    %873 = arith.mulf %870, %872 : vector<16x128xf32>
    %c0_77 = arith.constant 0 : index
    %c8 = arith.constant 8 : index
    %c0_78 = arith.constant 0 : index
    %874 = vector.load %arg25[%c0_77, %c8, %c0_78] : memref<2x32x128xf32, #tpu.memory_space<vmem>>, vector<1x16x128xf32>
    %875 = vector.shape_cast %874 : vector<1x16x128xf32> to vector<16x128xf32>
    %876 = vector.shape_cast %873 : vector<16x128xf32> to vector<1x16x128xf32>
    tpu.vector_store %arg25[%c0_77, %c8, %c0_78], %876 {strides = array<i32>} : memref<2x32x128xf32, #tpu.memory_space<vmem>>, vector<1x16x128xf32>,
    %877 = vector.extract_strided_slice %847 {offsets = [16, 0], sizes = [16, 128], strides = [1, 1]} : vector<32x128xf32> to vector<16x128xf32>
    %878 = vector.extract_strided_slice %869 {offsets = [1, 0], sizes = [1, 128], strides = [1, 1]} : vector<2x128xf32> to vector<1x128xf32>
    %879 = vector.broadcast %878 : vector<1x128xf32> to vector<16x128xf32>
    %880 = arith.mulf %877, %879 : vector<16x128xf32>
    %c1_79 = arith.constant 1 : index
    %c8_80 = arith.constant 8 : index
    %c0_81 = arith.constant 0 : index
    %881 = vector.load %arg25[%c1_79, %c8_80, %c0_81] : memref<2x32x128xf32, #tpu.memory_space<vmem>>, vector<1x16x128xf32>
    %882 = vector.shape_cast %881 : vector<1x16x128xf32> to vector<16x128xf32>
    %883 = vector.shape_cast %880 : vector<16x128xf32> to vector<1x16x128xf32>
    tpu.vector_store %arg25[%c1_79, %c8_80, %c0_81], %883 {strides = array<i32>} : memref<2x32x128xf32, #tpu.memory_space<vmem>>, vector<1x16x128xf32>,
    %c0_82 = arith.constant 0 : index
    %c6 = arith.constant 6 : index
    %c0_83 = arith.constant 0 : index
    %884 = vector.load %arg25[%c0_82, %c6, %c0_83] : memref<2x32x128xf32, #tpu.memory_space<vmem>>, vector<1x16x128xf32>
    %885 = vector.shape_cast %884 : vector<1x16x128xf32> to vector<16x128xf32>
    %c0_84 = arith.constant 0 : index
    %c0_85 = arith.constant 0 : index
    %886 = vector.load %arg27[%c0_84, %c0_85] : memref<32x640xf32, #tpu.memory_space<vmem>>, vector<16x128xf32>
    tpu.vector_store %arg27[%c0_84, %c0_85], %885 {strides = array<i32>} : memref<32x640xf32, #tpu.memory_space<vmem>>, vector<16x128xf32>,
    %c0_86 = arith.constant 0 : index
    %c7 = arith.constant 7 : index
    %c0_87 = arith.constant 0 : index
    %887 = vector.load %arg25[%c0_86, %c7, %c0_87] : memref<2x32x128xf32, #tpu.memory_space<vmem>>, vector<1x16x128xf32>
    %888 = vector.shape_cast %887 : vector<1x16x128xf32> to vector<16x128xf32>
    %c0_88 = arith.constant 0 : index
    %c128 = arith.constant 128 : index
    %889 = vector.load %arg27[%c0_88, %c128] : memref<32x640xf32, #tpu.memory_space<vmem>>, vector<16x128xf32>
    tpu.vector_store %arg27[%c0_88, %c128], %888 {strides = array<i32>} : memref<32x640xf32, #tpu.memory_space<vmem>>, vector<16x128xf32>,
    %c0_89 = arith.constant 0 : index
    %c8_90 = arith.constant 8 : index
    %c0_91 = arith.constant 0 : index
    %890 = vector.load %arg25[%c0_89, %c8_90, %c0_91] : memref<2x32x128xf32, #tpu.memory_space<vmem>>, vector<1x16x128xf32>
    %891 = vector.shape_cast %890 : vector<1x16x128xf32> to vector<16x128xf32>
    %c0_92 = arith.constant 0 : index
    %c256 = arith.constant 256 : index
    %892 = vector.load %arg27[%c0_92, %c256] : memref<32x640xf32, #tpu.memory_space<vmem>>, vector<16x128xf32>
    tpu.vector_store %arg27[%c0_92, %c256], %891 {strides = array<i32>} : memref<32x640xf32, #tpu.memory_space<vmem>>, vector<16x128xf32>,
    %c0_93 = arith.constant 0 : index
    %c9 = arith.constant 9 : index
    %c0_94 = arith.constant 0 : index
    %893 = vector.load %arg25[%c0_93, %c9, %c0_94] : memref<2x32x128xf32, #tpu.memory_space<vmem>>, vector<1x16x128xf32>
    %894 = vector.shape_cast %893 : vector<1x16x128xf32> to vector<16x128xf32>
    %c0_95 = arith.constant 0 : index
    %c384 = arith.constant 384 : index
    %895 = vector.load %arg27[%c0_95, %c384] : memref<32x640xf32, #tpu.memory_space<vmem>>, vector<16x128xf32>
    tpu.vector_store %arg27[%c0_95, %c384], %894 {strides = array<i32>} : memref<32x640xf32, #tpu.memory_space<vmem>>, vector<16x128xf32>,
    %c0_96 = arith.constant 0 : index
    %c10 = arith.constant 10 : index
    %c0_97 = arith.constant 0 : index
    %896 = vector.load %arg25[%c0_96, %c10, %c0_97] : memref<2x32x128xf32, #tpu.memory_space<vmem>>, vector<1x16x128xf32>
    %897 = vector.shape_cast %896 : vector<1x16x128xf32> to vector<16x128xf32>
    %c0_98 = arith.constant 0 : index
    %c512 = arith.constant 512 : index
    %898 = vector.load %arg27[%c0_98, %c512] : memref<32x640xf32, #tpu.memory_space<vmem>>, vector<16x128xf32>
    tpu.vector_store %arg27[%c0_98, %c512], %897 {strides = array<i32>} : memref<32x640xf32, #tpu.memory_space<vmem>>, vector<16x128xf32>,
    %c1_99 = arith.constant 1 : index
    %c6_100 = arith.constant 6 : index
    %c0_101 = arith.constant 0 : index
    %899 = vector.load %arg25[%c1_99, %c6_100, %c0_101] : memref<2x32x128xf32, #tpu.memory_space<vmem>>, vector<1x16x128xf32>
    %900 = vector.shape_cast %899 : vector<1x16x128xf32> to vector<16x128xf32>
    %c16 = arith.constant 16 : index
    %c0_102 = arith.constant 0 : index
    %901 = vector.load %arg27[%c16, %c0_102] : memref<32x640xf32, #tpu.memory_space<vmem>>, vector<16x128xf32>
    tpu.vector_store %arg27[%c16, %c0_102], %900 {strides = array<i32>} : memref<32x640xf32, #tpu.memory_space<vmem>>, vector<16x128xf32>,
    %c1_103 = arith.constant 1 : index
    %c7_104 = arith.constant 7 : index
    %c0_105 = arith.constant 0 : index
    %902 = vector.load %arg25[%c1_103, %c7_104, %c0_105] : memref<2x32x128xf32, #tpu.memory_space<vmem>>, vector<1x16x128xf32>
    %903 = vector.shape_cast %902 : vector<1x16x128xf32> to vector<16x128xf32>
    %c16_106 = arith.constant 16 : index
    %c128_107 = arith.constant 128 : index
    %904 = vector.load %arg27[%c16_106, %c128_107] : memref<32x640xf32, #tpu.memory_space<vmem>>, vector<16x128xf32>
    tpu.vector_store %arg27[%c16_106, %c128_107], %903 {strides = array<i32>} : memref<32x640xf32, #tpu.memory_space<vmem>>, vector<16x128xf32>,
    %c1_108 = arith.constant 1 : index
    %c8_109 = arith.constant 8 : index
    %c0_110 = arith.constant 0 : index
    %905 = vector.load %arg25[%c1_108, %c8_109, %c0_110] : memref<2x32x128xf32, #tpu.memory_space<vmem>>, vector<1x16x128xf32>
    %906 = vector.shape_cast %905 : vector<1x16x128xf32> to vector<16x128xf32>
    %c16_111 = arith.constant 16 : index
    %c256_112 = arith.constant 256 : index
    %907 = vector.load %arg27[%c16_111, %c256_112] : memref<32x640xf32, #tpu.memory_space<vmem>>, vector<16x128xf32>
    tpu.vector_store %arg27[%c16_111, %c256_112], %906 {strides = array<i32>} : memref<32x640xf32, #tpu.memory_space<vmem>>, vector<16x128xf32>,
    %c1_113 = arith.constant 1 : index
    %c9_114 = arith.constant 9 : index
    %c0_115 = arith.constant 0 : index
    %908 = vector.load %arg25[%c1_113, %c9_114, %c0_115] : memref<2x32x128xf32, #tpu.memory_space<vmem>>, vector<1x16x128xf32>
    %909 = vector.shape_cast %908 : vector<1x16x128xf32> to vector<16x128xf32>
    %c16_116 = arith.constant 16 : index
    %c384_117 = arith.constant 384 : index
    %910 = vector.load %arg27[%c16_116, %c384_117] : memref<32x640xf32, #tpu.memory_space<vmem>>, vector<16x128xf32>
    tpu.vector_store %arg27[%c16_116, %c384_117], %909 {strides = array<i32>} : memref<32x640xf32, #tpu.memory_space<vmem>>, vector<16x128xf32>,
    %c1_118 = arith.constant 1 : index
    %c10_119 = arith.constant 10 : index
    %c0_120 = arith.constant 0 : index
    %911 = vector.load %arg25[%c1_118, %c10_119, %c0_120] : memref<2x32x128xf32, #tpu.memory_space<vmem>>, vector<1x16x128xf32>
    %912 = vector.shape_cast %911 : vector<1x16x128xf32> to vector<16x128xf32>
    %c16_121 = arith.constant 16 : index
    %c512_122 = arith.constant 512 : index
    %913 = vector.load %arg27[%c16_121, %c512_122] : memref<32x640xf32, #tpu.memory_space<vmem>>, vector<16x128xf32>
    tpu.vector_store %arg27[%c16_121, %c512_122], %912 {strides = array<i32>} : memref<32x640xf32, #tpu.memory_space<vmem>>, vector<16x128xf32>,
    %c0_i32_123 = arith.constant 0 : i32
    %914 = tpu.memref_slice %arg29[%c0_i32_123] : memref<2x!tpu.dma_semaphore, #tpu.memory_space<semaphore_mem>> -> memref<1x!tpu.dma_semaphore, #tpu.memory_space<semaphore_mem>>
    %915 = tpu.memref_squeeze %914 : memref<1x!tpu.dma_semaphore, #tpu.memory_space<semaphore_mem>> -> memref<!tpu.dma_semaphore, #tpu.memory_space<semaphore_mem>>
    tpu.wait_dma2 semaphore(%915 : memref<!tpu.dma_semaphore, #tpu.memory_space<semaphore_mem>>) src(%arg11 : memref<640x256xf32, #tpu.memory_space<any>>) dst(%arg23 : memref<640x256xf32, #tpu.memory_space<vmem>>)
    %c0_124 = arith.constant 0 : index
    %c0_125 = arith.constant 0 : index
    %916 = vector.load %arg27[%c0_124, %c0_125] : memref<32x640xf32, #tpu.memory_space<vmem>>, vector<32x640xf32>
    %c0_126 = arith.constant 0 : index
    %c0_127 = arith.constant 0 : index
    %917 = vector.load %arg23[%c0_126, %c0_127] : memref<640x256xf32, #tpu.memory_space<vmem>>, vector<640x256xf32>
    %cst_128 = arith.constant dense<0.000000e+00> : vector<32x256xf32>
    %918 = tpu.matmul %916, %917, %cst_128 {dimension_numbers = #tpu.dot_dimension_numbers<[1], [0], [0], [1], [0, 0, 1, 1], [], []>} : vector<32x640xf32>, vector<640x256xf32>, vector<32x256xf32> -> vector<32x256xf32>
    %c0_129 = arith.constant 0 : index
    %c0_130 = arith.constant 0 : index
    %919 = vector.load %arg12[%c0_129, %c0_130] : memref<1x256xf32, #tpu.memory_space<vmem>>, vector<1x256xf32>
    %920 = vector.broadcast %919 : vector<1x256xf32> to vector<32x256xf32>
    %921 = arith.mulf %918, %920 : vector<32x256xf32>
    %c0_131 = arith.constant 0 : index
    %c0_132 = arith.constant 0 : index
    %922 = vector.load %arg13[%c0_131, %c0_132] : memref<1x256xf32, #tpu.memory_space<vmem>>, vector<1x256xf32>
    %923 = vector.broadcast %922 : vector<1x256xf32> to vector<32x256xf32>
    %924 = arith.addf %921, %923 : vector<32x256xf32>
    %cst_133 = arith.constant 0.000000e+00 : f32
    %925 = vector.broadcast %cst_133 : f32 to vector<32x256xf32>
    %926 = arith.maximumf %924, %925 : vector<32x256xf32>
    %927 = vector.extract_strided_slice %926 {offsets = [0, 0], sizes = [16, 256], strides = [1, 1]} : vector<32x256xf32> to vector<16x256xf32>
    %cst_134 = arith.constant dense<0.000000e+00> : vector<256xf32>
    %928 = vector.multi_reduction <add>, %927, %cst_134 [0] : vector<16x256xf32> to vector<256xf32>
    %929 = vector.shape_cast %928 : vector<256xf32> to vector<1x256xf32>
    %cst_135 = arith.constant 1.600000e+01 : f32
    %930 = vector.broadcast %cst_135 : f32 to vector<1x256xf32>
    %931 = arith.divf %929, %930 : vector<1x256xf32>
    %932 = vector.extract_strided_slice %926 {offsets = [16, 0], sizes = [16, 256], strides = [1, 1]} : vector<32x256xf32> to vector<16x256xf32>
    %cst_136 = arith.constant dense<0.000000e+00> : vector<256xf32>
    %933 = vector.multi_reduction <add>, %932, %cst_136 [0] : vector<16x256xf32> to vector<256xf32>
    %934 = vector.shape_cast %933 : vector<256xf32> to vector<1x256xf32>
    %cst_137 = arith.constant 1.600000e+01 : f32
    %935 = vector.broadcast %cst_137 : f32 to vector<1x256xf32>
    %936 = arith.divf %934, %935 : vector<1x256xf32>
    %937 = tpu.concatenate %931, %936 in 0 : vector<1x256xf32>, vector<1x256xf32> -> vector<2x256xf32>
    %c0_138 = arith.constant 0 : index
    %c0_139 = arith.constant 0 : index
    %938 = vector.load %arg14[%c0_138, %c0_139] : memref<256x16xf32, #tpu.memory_space<vmem>>, vector<256x16xf32>
    %cst_140 = arith.constant dense<0.000000e+00> : vector<2x16xf32>
    %939 = tpu.matmul %937, %938, %cst_140 {dimension_numbers = #tpu.dot_dimension_numbers<[1], [0], [0], [1], [0, 0, 1, 1], [], []>} : vector<2x256xf32>, vector<256x16xf32>, vector<2x16xf32> -> vector<2x16xf32>
    %cst_141 = arith.constant 0.000000e+00 : f32
    %940 = vector.broadcast %cst_141 : f32 to vector<2x16xf32>
    %941 = arith.maximumf %939, %940 : vector<2x16xf32>
    %c0_142 = arith.constant 0 : index
    %c0_143 = arith.constant 0 : index
    %942 = vector.load %arg15[%c0_142, %c0_143] : memref<16x256xf32, #tpu.memory_space<vmem>>, vector<16x256xf32>
    %cst_144 = arith.constant dense<0.000000e+00> : vector<2x256xf32>
    %943 = tpu.matmul %941, %942, %cst_144 {dimension_numbers = #tpu.dot_dimension_numbers<[1], [0], [0], [1], [0, 0, 1, 1], [], []>} : vector<2x16xf32>, vector<16x256xf32>, vector<2x256xf32> -> vector<2x256xf32>
    %944 = arith.negf %943 : vector<2x256xf32>
    %945 = math.exp %944 : vector<2x256xf32>
    %cst_145 = arith.constant 1.000000e+00 : f32
    %946 = vector.broadcast %cst_145 : f32 to vector<2x256xf32>
    %947 = arith.addf %946, %945 : vector<2x256xf32>
    %948 = arith.divf %946, %947 : vector<2x256xf32>
    %949 = vector.extract_strided_slice %926 {offsets = [0, 0], sizes = [16, 256], strides = [1, 1]} : vector<32x256xf32> to vector<16x256xf32>
    %950 = vector.extract_strided_slice %948 {offsets = [0, 0], sizes = [1, 256], strides = [1, 1]} : vector<2x256xf32> to vector<1x256xf32>
    %951 = vector.broadcast %950 : vector<1x256xf32> to vector<16x256xf32>
    %952 = arith.mulf %949, %951 : vector<16x256xf32>
    %c0_146 = arith.constant 0 : index
    %c8_147 = arith.constant 8 : index
    %c0_148 = arith.constant 0 : index
    %953 = vector.load %arg26[%c0_146, %c8_147, %c0_148] : memref<2x32x256xf32, #tpu.memory_space<vmem>>, vector<1x16x256xf32>
    %954 = vector.shape_cast %953 : vector<1x16x256xf32> to vector<16x256xf32>
    %955 = vector.shape_cast %952 : vector<16x256xf32> to vector<1x16x256xf32>
    tpu.vector_store %arg26[%c0_146, %c8_147, %c0_148], %955 {strides = array<i32>} : memref<2x32x256xf32, #tpu.memory_space<vmem>>, vector<1x16x256xf32>,
    %956 = vector.extract_strided_slice %926 {offsets = [16, 0], sizes = [16, 256], strides = [1, 1]} : vector<32x256xf32> to vector<16x256xf32>
    %957 = vector.extract_strided_slice %948 {offsets = [1, 0], sizes = [1, 256], strides = [1, 1]} : vector<2x256xf32> to vector<1x256xf32>
    %958 = vector.broadcast %957 : vector<1x256xf32> to vector<16x256xf32>
    %959 = arith.mulf %956, %958 : vector<16x256xf32>
    %c1_149 = arith.constant 1 : index
    %c8_150 = arith.constant 8 : index
    %c0_151 = arith.constant 0 : index
    %960 = vector.load %arg26[%c1_149, %c8_150, %c0_151] : memref<2x32x256xf32, #tpu.memory_space<vmem>>, vector<1x16x256xf32>
    %961 = vector.shape_cast %960 : vector<1x16x256xf32> to vector<16x256xf32>
    %962 = vector.shape_cast %959 : vector<16x256xf32> to vector<1x16x256xf32>
    tpu.vector_store %arg26[%c1_149, %c8_150, %c0_151], %962 {strides = array<i32>} : memref<2x32x256xf32, #tpu.memory_space<vmem>>, vector<1x16x256xf32>,
    %c0_152 = arith.constant 0 : index
    %c7_153 = arith.constant 7 : index
    %c0_154 = arith.constant 0 : index
    %963 = vector.load %arg26[%c0_152, %c7_153, %c0_154] : memref<2x32x256xf32, #tpu.memory_space<vmem>>, vector<1x16x256xf32>
    %964 = vector.shape_cast %963 : vector<1x16x256xf32> to vector<16x256xf32>
    %c0_155 = arith.constant 0 : index
    %c0_156 = arith.constant 0 : index
    %965 = vector.load %arg28[%c0_155, %c0_156] : memref<32x768xf32, #tpu.memory_space<vmem>>, vector<16x256xf32>
    tpu.vector_store %arg28[%c0_155, %c0_156], %964 {strides = array<i32>} : memref<32x768xf32, #tpu.memory_space<vmem>>, vector<16x256xf32>,
    %c0_157 = arith.constant 0 : index
    %c8_158 = arith.constant 8 : index
    %c0_159 = arith.constant 0 : index
    %966 = vector.load %arg26[%c0_157, %c8_158, %c0_159] : memref<2x32x256xf32, #tpu.memory_space<vmem>>, vector<1x16x256xf32>
    %967 = vector.shape_cast %966 : vector<1x16x256xf32> to vector<16x256xf32>
    %c0_160 = arith.constant 0 : index
    %c256_161 = arith.constant 256 : index
    %968 = vector.load %arg28[%c0_160, %c256_161] : memref<32x768xf32, #tpu.memory_space<vmem>>, vector<16x256xf32>
    tpu.vector_store %arg28[%c0_160, %c256_161], %967 {strides = array<i32>} : memref<32x768xf32, #tpu.memory_space<vmem>>, vector<16x256xf32>,
    %c0_162 = arith.constant 0 : index
    %c9_163 = arith.constant 9 : index
    %c0_164 = arith.constant 0 : index
    %969 = vector.load %arg26[%c0_162, %c9_163, %c0_164] : memref<2x32x256xf32, #tpu.memory_space<vmem>>, vector<1x16x256xf32>
    %970 = vector.shape_cast %969 : vector<1x16x256xf32> to vector<16x256xf32>
    %c0_165 = arith.constant 0 : index
    %c512_166 = arith.constant 512 : index
    %971 = vector.load %arg28[%c0_165, %c512_166] : memref<32x768xf32, #tpu.memory_space<vmem>>, vector<16x256xf32>
    tpu.vector_store %arg28[%c0_165, %c512_166], %970 {strides = array<i32>} : memref<32x768xf32, #tpu.memory_space<vmem>>, vector<16x256xf32>,
    %c1_167 = arith.constant 1 : index
    %c7_168 = arith.constant 7 : index
    %c0_169 = arith.constant 0 : index
    %972 = vector.load %arg26[%c1_167, %c7_168, %c0_169] : memref<2x32x256xf32, #tpu.memory_space<vmem>>, vector<1x16x256xf32>
    %973 = vector.shape_cast %972 : vector<1x16x256xf32> to vector<16x256xf32>
    %c16_170 = arith.constant 16 : index
    %c0_171 = arith.constant 0 : index
    %974 = vector.load %arg28[%c16_170, %c0_171] : memref<32x768xf32, #tpu.memory_space<vmem>>, vector<16x256xf32>
    tpu.vector_store %arg28[%c16_170, %c0_171], %973 {strides = array<i32>} : memref<32x768xf32, #tpu.memory_space<vmem>>, vector<16x256xf32>,
    %c1_172 = arith.constant 1 : index
    %c8_173 = arith.constant 8 : index
    %c0_174 = arith.constant 0 : index
    %975 = vector.load %arg26[%c1_172, %c8_173, %c0_174] : memref<2x32x256xf32, #tpu.memory_space<vmem>>, vector<1x16x256xf32>
    %976 = vector.shape_cast %975 : vector<1x16x256xf32> to vector<16x256xf32>
    %c16_175 = arith.constant 16 : index
    %c256_176 = arith.constant 256 : index
    %977 = vector.load %arg28[%c16_175, %c256_176] : memref<32x768xf32, #tpu.memory_space<vmem>>, vector<16x256xf32>
    tpu.vector_store %arg28[%c16_175, %c256_176], %976 {strides = array<i32>} : memref<32x768xf32, #tpu.memory_space<vmem>>, vector<16x256xf32>,
    %c1_177 = arith.constant 1 : index
    %c9_178 = arith.constant 9 : index
    %c0_179 = arith.constant 0 : index
    %978 = vector.load %arg26[%c1_177, %c9_178, %c0_179] : memref<2x32x256xf32, #tpu.memory_space<vmem>>, vector<1x16x256xf32>
    %979 = vector.shape_cast %978 : vector<1x16x256xf32> to vector<16x256xf32>
    %c16_180 = arith.constant 16 : index
    %c512_181 = arith.constant 512 : index
    %980 = vector.load %arg28[%c16_180, %c512_181] : memref<32x768xf32, #tpu.memory_space<vmem>>, vector<16x256xf32>
    tpu.vector_store %arg28[%c16_180, %c512_181], %979 {strides = array<i32>} : memref<32x768xf32, #tpu.memory_space<vmem>>, vector<16x256xf32>,
    %c1_i32_182 = arith.constant 1 : i32
    %981 = tpu.memref_slice %arg29[%c1_i32_182] : memref<2x!tpu.dma_semaphore, #tpu.memory_space<semaphore_mem>> -> memref<1x!tpu.dma_semaphore, #tpu.memory_space<semaphore_mem>>
    %982 = tpu.memref_squeeze %981 : memref<1x!tpu.dma_semaphore, #tpu.memory_space<semaphore_mem>> -> memref<!tpu.dma_semaphore, #tpu.memory_space<semaphore_mem>>
    tpu.wait_dma2 semaphore(%982 : memref<!tpu.dma_semaphore, #tpu.memory_space<semaphore_mem>>) src(%arg16 : memref<768x128xf32, #tpu.memory_space<any>>) dst(%arg24 : memref<768x128xf32, #tpu.memory_space<vmem>>)
    %c0_183 = arith.constant 0 : index
    %c0_184 = arith.constant 0 : index
    %983 = vector.load %arg28[%c0_183, %c0_184] : memref<32x768xf32, #tpu.memory_space<vmem>>, vector<32x768xf32>
    %c0_185 = arith.constant 0 : index
    %c0_186 = arith.constant 0 : index
    %984 = vector.load %arg24[%c0_185, %c0_186] : memref<768x128xf32, #tpu.memory_space<vmem>>, vector<768x128xf32>
    %cst_187 = arith.constant dense<0.000000e+00> : vector<32x128xf32>
    %985 = tpu.matmul %983, %984, %cst_187 {dimension_numbers = #tpu.dot_dimension_numbers<[1], [0], [0], [1], [0, 0, 1, 1], [], []>} : vector<32x768xf32>, vector<768x128xf32>, vector<32x128xf32> -> vector<32x128xf32>
    %c0_188 = arith.constant 0 : index
    %c0_189 = arith.constant 0 : index
    %986 = vector.load %arg17[%c0_188, %c0_189] : memref<1x128xf32, #tpu.memory_space<vmem>>, vector<1x128xf32>
    %987 = vector.broadcast %986 : vector<1x128xf32> to vector<32x128xf32>
    %988 = arith.mulf %985, %987 : vector<32x128xf32>
    %c0_190 = arith.constant 0 : index
    %c0_191 = arith.constant 0 : index
    %989 = vector.load %arg18[%c0_190, %c0_191] : memref<1x128xf32, #tpu.memory_space<vmem>>, vector<1x128xf32>
    %990 = vector.broadcast %989 : vector<1x128xf32> to vector<32x128xf32>
    %991 = arith.addf %988, %990 : vector<32x128xf32>
    %cst_192 = arith.constant 0.000000e+00 : f32
    %992 = vector.broadcast %cst_192 : f32 to vector<32x128xf32>
    %993 = arith.maximumf %991, %992 : vector<32x128xf32>
    %994 = vector.extract_strided_slice %993 {offsets = [0, 0], sizes = [16, 128], strides = [1, 1]} : vector<32x128xf32> to vector<16x128xf32>
    %cst_193 = arith.constant dense<0.000000e+00> : vector<128xf32>
    %995 = vector.multi_reduction <add>, %994, %cst_193 [0] : vector<16x128xf32> to vector<128xf32>
    %996 = vector.shape_cast %995 : vector<128xf32> to vector<1x128xf32>
    %cst_194 = arith.constant 1.600000e+01 : f32
    %997 = vector.broadcast %cst_194 : f32 to vector<1x128xf32>
    %998 = arith.divf %996, %997 : vector<1x128xf32>
    %999 = vector.extract_strided_slice %993 {offsets = [16, 0], sizes = [16, 128], strides = [1, 1]} : vector<32x128xf32> to vector<16x128xf32>
    %cst_195 = arith.constant dense<0.000000e+00> : vector<128xf32>
    %1000 = vector.multi_reduction <add>, %999, %cst_195 [0] : vector<16x128xf32> to vector<128xf32>
    %1001 = vector.shape_cast %1000 : vector<128xf32> to vector<1x128xf32>
    %cst_196 = arith.constant 1.600000e+01 : f32
    %1002 = vector.broadcast %cst_196 : f32 to vector<1x128xf32>
    %1003 = arith.divf %1001, %1002 : vector<1x128xf32>
    %1004 = tpu.concatenate %998, %1003 in 0 : vector<1x128xf32>, vector<1x128xf32> -> vector<2x128xf32>
    %c0_197 = arith.constant 0 : index
    %c0_198 = arith.constant 0 : index
    %1005 = vector.load %arg19[%c0_197, %c0_198] : memref<8x3xf32, #tpu.memory_space<vmem>>, vector<8x3xf32>
    %cst_199 = arith.constant dense<0.000000e+00> : vector<2x3xf32>
    %1006 = tpu.matmul %836, %1005, %cst_199 {dimension_numbers = #tpu.dot_dimension_numbers<[1], [0], [0], [1], [0, 0, 1, 1], [], []>} : vector<2x8xf32>, vector<8x3xf32>, vector<2x3xf32> -> vector<2x3xf32>
    %c0_200 = arith.constant 0 : index
    %c0_201 = arith.constant 0 : index
    %1007 = vector.load %arg20[%c0_200, %c0_201] : memref<128x3xf32, #tpu.memory_space<vmem>>, vector<128x3xf32>
    %cst_202 = arith.constant dense<0.000000e+00> : vector<2x3xf32>
    %1008 = tpu.matmul %1004, %1007, %cst_202 {dimension_numbers = #tpu.dot_dimension_numbers<[1], [0], [0], [1], [0, 0, 1, 1], [], []>} : vector<2x128xf32>, vector<128x3xf32>, vector<2x3xf32> -> vector<2x3xf32>
    %1009 = arith.addf %1006, %1008 : vector<2x3xf32>
    %c0_203 = arith.constant 0 : index
    %c0_204 = arith.constant 0 : index
    %1010 = vector.load %arg21[%c0_203, %c0_204] : memref<1x3xf32, #tpu.memory_space<vmem>>, vector<1x3xf32>
    %1011 = vector.broadcast %1010 : vector<1x3xf32> to vector<2x3xf32>
    %1012 = arith.addf %1009, %1011 : vector<2x3xf32>
    %c0_205 = arith.constant 0 : index
    %c0_206 = arith.constant 0 : index
    %1013 = vector.load %arg22[%c0_205, %c0_206] : memref<2x3xf32, #tpu.memory_space<vmem>>, vector<2x3xf32>
    tpu.vector_store %arg22[%c0_205, %c0_206], %1012 {strides = array<i32>} : memref<2x3xf32, #tpu.memory_space<vmem>>, vector<2x3xf32>,
    return
  }
  func.func @transform_0(%arg0: i32) -> (i32, i32) {
    %c0_i32 = arith.constant 0 : i32
    %c0_i32_0 = arith.constant 0 : i32
    %c0_i32_1 = arith.constant 0 : i32
    return %c0_i32, %c0_i32_0 : i32, i32
  }
  func.func @transform_1(%arg0: i32) -> (i32, i32) {
    %c0_i32 = arith.constant 0 : i32
    %c0_i32_0 = arith.constant 0 : i32
    %c0_i32_1 = arith.constant 0 : i32
    return %c0_i32, %c0_i32_0 : i32, i32
  }
  func.func @transform_2(%arg0: i32) -> (i32, i32) {
    %c0_i32 = arith.constant 0 : i32
    %c0_i32_0 = arith.constant 0 : i32
    %c0_i32_1 = arith.constant 0 : i32
    return %c0_i32, %c0_i32_0 : i32, i32
  }
  func.func @transform_3(%arg0: i32) -> (i32, i32) {
    %c0_i32 = arith.constant 0 : i32
    %c0_i32_0 = arith.constant 0 : i32
    %c0_i32_1 = arith.constant 0 : i32
    return %c0_i32, %c0_i32_0 : i32, i32
  }
  func.func @transform_4(%arg0: i32) -> (i32, i32) {
    %c0_i32 = arith.constant 0 : i32
    %c0_i32_0 = arith.constant 0 : i32
    %c0_i32_1 = arith.constant 0 : i32
    return %c0_i32, %c0_i32_0 : i32, i32
  }
  func.func @transform_5(%arg0: i32) -> (i32, i32) {
    %c0_i32 = arith.constant 0 : i32
    %c0_i32_0 = arith.constant 0 : i32
    %c0_i32_1 = arith.constant 0 : i32
    return %c0_i32, %c0_i32_0 : i32, i32
  }
  func.func @transform_6(%arg0: i32) -> (i32, i32) {
    %c0_i32 = arith.constant 0 : i32
    %c0_i32_0 = arith.constant 0 : i32
    %c0_i32_1 = arith.constant 0 : i32
    return %c0_i32, %c0_i32_0 : i32, i32
  }
  func.func @transform_7(%arg0: i32) -> (i32, i32) {
    %c0_i32 = arith.constant 0 : i32
    %c0_i32_0 = arith.constant 0 : i32
    %c0_i32_1 = arith.constant 0 : i32
    return %c0_i32, %c0_i32_0 : i32, i32
  }
  func.func @transform_8(%arg0: i32) -> (i32, i32) {
    %c0_i32 = arith.constant 0 : i32
    %c0_i32_0 = arith.constant 0 : i32
    %c0_i32_1 = arith.constant 0 : i32
    return %c0_i32, %c0_i32_0 : i32, i32
  }
  func.func @transform_9(%arg0: i32) -> (i32, i32) {
    %c0_i32 = arith.constant 0 : i32
    %c0_i32_0 = arith.constant 0 : i32
    %c0_i32_1 = arith.constant 0 : i32
    return %c0_i32, %c0_i32_0 : i32, i32
  }
  func.func @transform_11(%arg0: i32) -> (i32, i32) {
    %c0_i32 = arith.constant 0 : i32
    %c0_i32_0 = arith.constant 0 : i32
    %c0_i32_1 = arith.constant 0 : i32
    return %c0_i32, %c0_i32_0 : i32, i32
  }
  func.func @transform_12(%arg0: i32) -> (i32, i32) {
    %c0_i32 = arith.constant 0 : i32
    %c0_i32_0 = arith.constant 0 : i32
    %c0_i32_1 = arith.constant 0 : i32
    return %c0_i32, %c0_i32_0 : i32, i32
  }
  func.func @transform_13(%arg0: i32) -> (i32, i32) {
    %c0_i32 = arith.constant 0 : i32
    %c0_i32_0 = arith.constant 0 : i32
    %c0_i32_1 = arith.constant 0 : i32
    return %c0_i32, %c0_i32_0 : i32, i32
  }
  func.func @transform_14(%arg0: i32) -> (i32, i32) {
    %c0_i32 = arith.constant 0 : i32
    %c0_i32_0 = arith.constant 0 : i32
    %c0_i32_1 = arith.constant 0 : i32
    return %c0_i32, %c0_i32_0 : i32, i32
  }
  func.func @transform_16(%arg0: i32) -> (i32, i32) {
    %c0_i32 = arith.constant 0 : i32
    %c0_i32_0 = arith.constant 0 : i32
    %c0_i32_1 = arith.constant 0 : i32
    return %c0_i32, %c0_i32_0 : i32, i32
  }
  func.func @transform_17(%arg0: i32) -> (i32, i32) {
    %c0_i32 = arith.constant 0 : i32
    %c0_i32_0 = arith.constant 0 : i32
    %c0_i32_1 = arith.constant 0 : i32
    return %c0_i32, %c0_i32_0 : i32, i32
  }
  func.func @transform_18(%arg0: i32) -> (i32, i32) {
    %c0_i32 = arith.constant 0 : i32
    %c0_i32_0 = arith.constant 0 : i32
    %c0_i32_1 = arith.constant 0 : i32
    return %c0_i32, %c0_i32_0 : i32, i32
  }
  func.func @transform_19(%arg0: i32) -> (i32, i32) {
    %c0_i32 = arith.constant 0 : i32
    %c0_i32_0 = arith.constant 0 : i32
    %c0_i32_1 = arith.constant 0 : i32
    return %c0_i32, %c0_i32_0 : i32, i32
  }
  func.func @transform_20(%arg0: i32) -> (i32, i32) {
    %c0_i32 = arith.constant 0 : i32
    %c0_i32_0 = arith.constant 0 : i32
    %c0_i32_1 = arith.constant 0 : i32
    return %c0_i32, %c0_i32_0 : i32, i32
  }
  func.func @transform_21(%arg0: i32) -> (i32, i32) {
    %c0_i32 = arith.constant 0 : i32
    %c0_i32_0 = arith.constant 0 : i32
    %c0_i32_1 = arith.constant 0 : i32
    return %c0_i32, %c0_i32_0 : i32, i32
  }
}

</mosaic_0001>

<llo_original>
// kernel: tpu_custom_call.1
$region0: #{tpu_custom_call.1}
  #allocation0 [shape = 'u32[]', space=smem, size = 0x4, offset = 0x4, fixed_abs, tag = 'smem constant byte address 0x4 - core index']
  #allocation1 [shape = 'u32[144,128]{1,0:T(1,128)}', space=vmem, size = 0x12000, scoped, tag = 'internal scratch']
  #allocation2 [shape = 'f32[640,256]{1,0:T(8,128)}', space=vmem, size = 0xa0000, scoped, tag = 'scratch operand']
  #allocation3 [shape = 'f32[768,128]{1,0:T(8,128)}', space=vmem, size = 0x60000, scoped, tag = 'scratch operand']
  #allocation4 [shape = 'f32[2,32,128]{2,1,0:T(8,128)}', space=vmem, size = 0x8000, scoped, tag = 'scratch operand']
  #allocation5 [shape = 'f32[2,32,256]{2,1,0:T(8,128)}', space=vmem, size = 0x10000, scoped, tag = 'scratch operand']
  #allocation6 [shape = 'f32[32,640]{1,0:T(8,128)}', space=vmem, size = 0x14000, scoped, tag = 'scratch operand']
  #allocation7 [shape = 'f32[32,768]{1,0:T(8,128)}', space=vmem, size = 0x18000, scoped, tag = 'scratch operand']
  #allocation8 [shape = 's32[2]{0}', space=sflag, size = 0x8, scoped, tag = 'scratch operand']
  #allocation11 [shape = 's32[]', space=sflag, size = 0x4, offset = 0, fixed_abs, tag = 'sflag constant byte address 0x0 - dummy sync flag']
  #allocation12 [shape = 's32[]', space=sflag, size = 0x4, offset = 0, fixed_abs, tag = 'sflag constant byte address 0x0 - dummy sync flag']
  #allocation13 [shape = 'u32[]', space=smem, size = 0x4, offset = 0x44, fixed_abs, tag = 'smem constant byte address 0x44 - assertion arg 0']
  #allocation14 [shape = 'u32[]', space=smem, size = 0x4, offset = 0x48, fixed_abs, tag = 'smem constant byte address 0x48 - assertion arg 1']
  #allocation15 [shape = 's32[]', space=sflag, size = 0x4, offset = 0, fixed_abs, tag = 'sflag constant byte address 0x0 - dummy sync flag']
  #allocation16 [shape = 's32[]', space=sflag, size = 0x4, offset = 0, fixed_abs, tag = 'sflag constant byte address 0x0 - dummy sync flag']
  %s0 = inlined_call_operand.vmem [shape: f32[32,4], index: 0, kind: input, shape index: {}]
  %s1 = inlined_call_operand.vmem [shape: f32[4,32], index: 1, kind: input, shape index: {}]
  %s2 = inlined_call_operand.vmem [shape: f32[8,32], index: 2, kind: input, shape index: {}]
  %s3 = inlined_call_operand.vmem [shape: f32[1,32], index: 3, kind: input, shape index: {}]
  %s4 = inlined_call_operand.vmem [shape: f32[32,32], index: 4, kind: input, shape index: {}]
  %s5 = inlined_call_operand.vmem [shape: f32[32,128], index: 5, kind: input, shape index: {}]
  %s6 = inlined_call_operand.vmem [shape: f32[1,128], index: 6, kind: input, shape index: {}]
  %s7 = inlined_call_operand.vmem [shape: f32[1,128], index: 7, kind: input, shape index: {}]
  %s8 = inlined_call_operand.vmem [shape: f32[128,8], index: 8, kind: input, shape index: {}]
  %s9 = inlined_call_operand.vmem [shape: f32[8,128], index: 9, kind: input, shape index: {}]
  %s10 = inlined_call_operand.hbm [shape: f32[640,256], index: 10, kind: input, shape index: {}]
  %s11 = inlined_call_operand.vmem [shape: f32[1,256], index: 11, kind: input, shape index: {}]
  %s12 = inlined_call_operand.vmem [shape: f32[1,256], index: 12, kind: input, shape index: {}]
  %s13 = inlined_call_operand.vmem [shape: f32[256,16], index: 13, kind: input, shape index: {}]
  %s14 = inlined_call_operand.vmem [shape: f32[16,256], index: 14, kind: input, shape index: {}]
  %s15 = inlined_call_operand.hbm [shape: f32[768,128], index: 15, kind: input, shape index: {}]
  %s16 = inlined_call_operand.vmem [shape: f32[1,128], index: 16, kind: input, shape index: {}]
  %s17 = inlined_call_operand.vmem [shape: f32[1,128], index: 17, kind: input, shape index: {}]
  %s18 = inlined_call_operand.vmem [shape: f32[8,3], index: 18, kind: input, shape index: {}]
  %s19 = inlined_call_operand.vmem [shape: f32[128,3], index: 19, kind: input, shape index: {}]
  %s20 = inlined_call_operand.vmem [shape: f32[1,3], index: 20, kind: input, shape index: {}]
  %s21 = inlined_call_operand.hbm [shape: f32[2,3], index: 21, kind: output, shape index: {}]
  %s22 = sld [smem:[#allocation0]]
  $region94: #{tpu_custom_call.1} parent=0
    _
  %s24 = ssub.s32 1, %s22
  %s25 = scalar_select 0, %s24, %s22
  $region1: #{tpu_custom_call.1} parent=0
    #allocation9 [shape = 'u8[1024]{0}', space=vmem, size = 0x400, scoped, tag = 'output window, operand 0, single buffered']
    #allocation10 [shape = 's32[1]{0}', space=sflag, size = 0x4, scoped, tag = 'scoped memory for tpu_custom_call.1']
    %26 = vsyncpa [#allocation10], 0
    // Predicated region
    $region2: #{tpu_custom_call.1} parent=1 // pred_check
      _
    $region3: #{tpu_custom_call.1} parent=1 // pred_check_branch
      %28 = sbr.rel (0) target = $region5
    $region4: #{tpu_custom_call.1} parent=1 // pred_region
      _
    $region5: #{tpu_custom_call.1} parent=1 // pred_fallthru
      _
    // Predicated region
    $region6: #{tpu_custom_call.1} parent=1 // pred_check
      _
    $region7: #{tpu_custom_call.1} parent=1 // pred_check_branch
      %30 = sbr.rel (0) target = $region9
    $region8: #{tpu_custom_call.1} parent=1 // pred_region
      _
    $region9: #{tpu_custom_call.1} parent=1 // pred_fallthru
      _
    // Predicated region
    $region10: #{tpu_custom_call.1} parent=1 // pred_check
      _
    $region11: #{tpu_custom_call.1} parent=1 // pred_check_branch
      %32 = sbr.rel (0) target = $region13
    $region12: #{tpu_custom_call.1} parent=1 // pred_region
      _
    $region13: #{tpu_custom_call.1} parent=1 // pred_fallthru
      _
    // Predicated region
    $region14: #{tpu_custom_call.1} parent=1 // pred_check
      _
    $region15: #{tpu_custom_call.1} parent=1 // pred_check_branch
      %34 = sbr.rel (0) target = $region17
    $region16: #{tpu_custom_call.1} parent=1 // pred_region
      _
    $region17: #{tpu_custom_call.1} parent=1 // pred_fallthru
      _
    // Predicated region
    $region18: #{tpu_custom_call.1} parent=1 // pred_check
      _
    $region19: #{tpu_custom_call.1} parent=1 // pred_check_branch
      %36 = sbr.rel (0) target = $region21
    $region20: #{tpu_custom_call.1} parent=1 // pred_region
      _
    $region21: #{tpu_custom_call.1} parent=1 // pred_fallthru
      _
    // Predicated region
    $region22: #{tpu_custom_call.1} parent=1 // pred_check
      _
    $region23: #{tpu_custom_call.1} parent=1 // pred_check_branch
      %38 = sbr.rel (0) target = $region25
    $region24: #{tpu_custom_call.1} parent=1 // pred_region
      _
    $region25: #{tpu_custom_call.1} parent=1 // pred_fallthru
      _
    // Predicated region
    $region26: #{tpu_custom_call.1} parent=1 // pred_check
      _
    $region27: #{tpu_custom_call.1} parent=1 // pred_check_branch
      %40 = sbr.rel (0) target = $region29
    $region28: #{tpu_custom_call.1} parent=1 // pred_region
      _
    $region29: #{tpu_custom_call.1} parent=1 // pred_fallthru
      _
    // Predicated region
    $region30: #{tpu_custom_call.1} parent=1 // pred_check
      _
    $region31: #{tpu_custom_call.1} parent=1 // pred_check_branch
      %42 = sbr.rel (0) target = $region33
    $region32: #{tpu_custom_call.1} parent=1 // pred_region
      _
    $region33: #{tpu_custom_call.1} parent=1 // pred_fallthru
      _
    // Predicated region
    $region34: #{tpu_custom_call.1} parent=1 // pred_check
      _
    $region35: #{tpu_custom_call.1} parent=1 // pred_check_branch
      %44 = sbr.rel (0) target = $region37
    $region36: #{tpu_custom_call.1} parent=1 // pred_region
      _
    $region37: #{tpu_custom_call.1} parent=1 // pred_fallthru
      _
    // Predicated region
    $region38: #{tpu_custom_call.1} parent=1 // pred_check
      _
    $region39: #{tpu_custom_call.1} parent=1 // pred_check_branch
      %46 = sbr.rel (0) target = $region41
    $region40: #{tpu_custom_call.1} parent=1 // pred_region
      _
    $region41: #{tpu_custom_call.1} parent=1 // pred_fallthru
      _
    // Predicated region
    $region42: #{tpu_custom_call.1} parent=1 // pred_check
      _
    $region43: #{tpu_custom_call.1} parent=1 // pred_check_branch
      %48 = sbr.rel (0) target = $region45
    $region44: #{tpu_custom_call.1} parent=1 // pred_region
      _
    $region45: #{tpu_custom_call.1} parent=1 // pred_fallthru
      _
    // Predicated region
    $region46: #{tpu_custom_call.1} parent=1 // pred_check
      _
    $region47: #{tpu_custom_call.1} parent=1 // pred_check_branch
      %50 = sbr.rel (0) target = $region49
    $region48: #{tpu_custom_call.1} parent=1 // pred_region
      _
    $region49: #{tpu_custom_call.1} parent=1 // pred_fallthru
      _
    // Predicated region
    $region50: #{tpu_custom_call.1} parent=1 // pred_check
      _
    $region51: #{tpu_custom_call.1} parent=1 // pred_check_branch
      %52 = sbr.rel (0) target = $region53
    $region52: #{tpu_custom_call.1} parent=1 // pred_region
      _
    $region53: #{tpu_custom_call.1} parent=1 // pred_fallthru
      _
    // Predicated region
    $region54: #{tpu_custom_call.1} parent=1 // pred_check
      _
    $region55: #{tpu_custom_call.1} parent=1 // pred_check_branch
      %54 = sbr.rel (0) target = $region57
    $region56: #{tpu_custom_call.1} parent=1 // pred_region
      _
    $region57: #{tpu_custom_call.1} parent=1 // pred_fallthru
      _
    // Predicated region
    $region58: #{tpu_custom_call.1} parent=1 // pred_check
      _
    $region59: #{tpu_custom_call.1} parent=1 // pred_check_branch
      %56 = sbr.rel (0) target = $region61
    $region60: #{tpu_custom_call.1} parent=1 // pred_region
      _
    $region61: #{tpu_custom_call.1} parent=1 // pred_fallthru
      _
    // Predicated region
    $region62: #{tpu_custom_call.1} parent=1 // pred_check
      _
    $region63: #{tpu_custom_call.1} parent=1 // pred_check_branch
      %58 = sbr.rel (0) target = $region65
    $region64: #{tpu_custom_call.1} parent=1 // pred_region
      _
    $region65: #{tpu_custom_call.1} parent=1 // pred_fallthru
      _
    // Predicated region
    $region66: #{tpu_custom_call.1} parent=1 // pred_check
      _
    $region67: #{tpu_custom_call.1} parent=1 // pred_check_branch
      %60 = sbr.rel (0) target = $region69
    $region68: #{tpu_custom_call.1} parent=1 // pred_region
      _
    $region69: #{tpu_custom_call.1} parent=1 // pred_fallthru
      _
    // Predicated region
    $region70: #{tpu_custom_call.1} parent=1 // pred_check
      _
    $region71: #{tpu_custom_call.1} parent=1 // pred_check_branch
      %62 = sbr.rel (0) target = $region73
    $region72: #{tpu_custom_call.1} parent=1 // pred_region
      _
    $region73: #{tpu_custom_call.1} parent=1 // pred_fallthru
      _
    // Predicated region
    $region74: #{tpu_custom_call.1} parent=1 // pred_check
      _
    $region75: #{tpu_custom_call.1} parent=1 // pred_check_branch
      %64 = sbr.rel (0) target = $region77
    $region76: #{tpu_custom_call.1} parent=1 // pred_region
      _
    $region77: #{tpu_custom_call.1} parent=1 // pred_fallthru
      _
    // Predicated region
    $region78: #{tpu_custom_call.1} parent=1 // pred_check
      _
    $region79: #{tpu_custom_call.1} parent=1 // pred_check_branch
      %66 = sbr.rel target = $region81
    $region80: #{tpu_custom_call.1} parent=1 // pred_region
      %67 = sst [smem:[#allocation13]] [#allocation12]
      %68 = sst [smem:[#allocation14]] [#allocation11]
    $region81: #{tpu_custom_call.1} parent=1 // pred_fallthru
      _
    %70 = shalt.err (0)
    %s72 = sshll.u32 [#allocation2], 4
    %s73 = int_to_ptr.vmem [resolvable:$true] %s72
    %75 = dma.hbm_to_vmem [thread:$0]  %s10, 20480, %s73, [#allocation8]
    %s76 = scalar_lea.sflag [#allocation8], 1
    // Predicated region
    $region82: #{tpu_custom_call.1} parent=1 // pred_check
      _
    $region83: #{tpu_custom_call.1} parent=1 // pred_check_branch
      %78 = sbr.rel target = $region85
    $region84: #{tpu_custom_call.1} parent=1 // pred_region
      %79 = sst [smem:[#allocation13]] [#allocation16]
      %80 = sst [smem:[#allocation14]] [#allocation15]
    $region85: #{tpu_custom_call.1} parent=1 // pred_fallthru
      _
    %82 = shalt.err (0)
    %s84 = sshll.u32 [#allocation3], 4
    %s85 = int_to_ptr.vmem [resolvable:$true] %s84
    %87 = dma.hbm_to_vmem [thread:$0]  %s15, 12288, %s85, %s76
    %88 = vst [vmem:[#allocation4] sm:$0xff] 0.0
    %89 = vst [vmem:[#allocation4 + $0x18] sm:$0xff] 0.0
    %90 = vst [vmem:[#allocation5] sm:$0xff] 0.0
    %91 = vst [vmem:[#allocation5 + $0x8] sm:$0xff] 0.0
    %92 = vst [vmem:[#allocation5 + $0x30] sm:$0xff] 0.0
    %93 = vst [vmem:[#allocation5 + $0x38] sm:$0xff] 0.0
    %s94 = scalar_lea.vmem [#allocation4], 32
    %95 = vst [vmem:[%s94] sm:$0xff] 0.0
    %96 = vst [vmem:[%s94 + $0x18] sm:$0xff] 0.0
    %s97 = scalar_lea.vmem [#allocation5], 64
    %98 = vst [vmem:[%s97] sm:$0xff] 0.0
    %99 = vst [vmem:[%s97 + $0x8] sm:$0xff] 0.0
    %100 = vst [vmem:[%s97 + $0x30] sm:$0xff] 0.0
    %101 = vst [vmem:[%s97 + $0x38] sm:$0xff] 0.0
    %v102 = vld [vmem:[%s0] sm:$0xff]
    %v103 = vld [vmem:[%s0 + $0x8] sm:$0xff]
    %v104 = vld [vmem:[%s0 + $0x10] sm:$0xff]
    %v105 = vld [vmem:[%s0 + $0x18] sm:$0xff]
    %v106 = vld [vmem:[%s1] sm:$0xf]
    %v107 = vld [vmem:[%s3] sm:$0x1]
    %v109 = vlaneseq
    %v110 = vshrl.u32 %v109, 7
    %v111 = vsub.s32 0, %v110
    %v112 = vrot.slane %v107, %v111
    %vm114 = vcmask 31744
    %v116 = vsel %vm114, %v102, 0
    %v119 = vsel %vm114, %v103, 0
    %v122 = vsel %vm114, %v104, 0
    %v125 = vsel %vm114, %v105, 0
    %vm127 = vcmask 1043456
    %v129 = vsel %vm127, %v106, 0
    %131 = vmatprep.subr.mxu0 0.0
    %132 = vmatpush1.msra.mxu0 %v129
    %133 = vmatprep.subr.mxu0 0.0
    %134 = vmatpush1.msra.mxu0 0.0
    %135 = vmatprep.subr.mxu0 0.0
    %136 = vmatpush1.msra.mxu0 0.0
    %137 = vmatprep.subr.mxu0 0.0
    %138 = vmatpush1.msra.mxu0 0.0
    %139 = vmatprep.subr.mxu0 0.0
    %140 = vmatpush1.msra.mxu0 0.0
    %141 = vmatprep.subr.mxu0 0.0
    %142 = vmatpush1.msra.mxu0 0.0
    %143 = vmatprep.subr.mxu0 0.0
    %144 = vmatpush1.msra.mxu0 0.0
    %145 = vmatprep.subr.mxu0 0.0
    %146 = vmatpush1.msra.mxu0 0.0
    %147 = vmatprep.subr.mxu0 0.0
    %148 = vmatpush1.msra.mxu0 0.0
    %149 = vmatprep.subr.mxu0 0.0
    %150 = vmatpush1.msra.mxu0 0.0
    %151 = vmatprep.subr.mxu0 0.0
    %152 = vmatpush1.msra.mxu0 0.0
    %153 = vmatprep.subr.mxu0 0.0
    %154 = vmatpush1.msra.mxu0 0.0
    %155 = vmatprep.subr.mxu0 0.0
    %156 = vmatpush1.msra.mxu0 0.0
    %157 = vmatprep.subr.mxu0 0.0
    %158 = vmatpush1.msra.mxu0 0.0
    %159 = vmatprep.subr.mxu0 0.0
    %160 = vmatpush1.msra.mxu0 0.0
    %161 = vmatprep.subr.mxu0 0.0
    %162 = vmatpush1.msra.mxu0 0.0
    %163 = vmatprep.subr.mxu0 0.0
    %164 = vmatpush1.msra.mxu0 0.0
    %165 = vmatprep.subr.mxu0 0.0
    %166 = vmatpush1.msra.mxu0 0.0
    %167 = vmatprep.subr.mxu0 0.0
    %168 = vmatpush1.msra.mxu0 0.0
    %169 = vmatprep.subr.mxu0 0.0
    %170 = vmatpush1.msra.mxu0 0.0
    %171 = vmatprep.subr.mxu0 0.0
    %172 = vmatpush1.msra.mxu0 0.0
    %173 = vmatprep.subr.mxu0 0.0
    %174 = vmatpush1.msra.mxu0 0.0
    %175 = vmatprep.subr.mxu0 0.0
    %176 = vmatpush1.msra.mxu0 0.0
    %177 = vmatprep.subr.mxu0 0.0
    %178 = vmatpush1.msra.mxu0 0.0
    %179 = vmatprep.subr.mxu0 0.0
    %180 = vmatpush1.msra.mxu0 0.0
    %181 = vmatprep.subr.mxu0 0.0
    %182 = vmatpush1.msra.mxu0 0.0
    %183 = vmatprep.subr.mxu0 0.0
    %184 = vmatpush1.msra.mxu0 0.0
    %185 = vmatprep.subr.mxu0 0.0
    %186 = vmatpush1.msra.mxu0 0.0
    %187 = vmatprep.subr.mxu0 0.0
    %188 = vmatpush1.msra.mxu0 0.0
    %189 = vmatprep.subr.mxu0 0.0
    %190 = vmatpush1.msra.mxu0 0.0
    %191 = vmatprep.subr.mxu0 0.0
    %192 = vmatpush1.msra.mxu0 0.0
    %193 = vmatprep.subr.mxu0 0.0
    %194 = vmatpush1.msra.mxu0 0.0
    %195 = vmatprep.mubr.f32.mxu0 0.0
    %196 = vmatmul.mubr.f32.gmra.mrb[0].mxu0 %v116
    %v197 = vpop.f32.mrb[0].mxu0
    %v198 = vadd.f32 %v112, %v197
    %v199 = vpop.f32.mrb[0].mxu0
    %200 = vmatprep.mubr.f32.mxu0 0.0
    %201 = vmatmul.mubr.f32.gmra.mrb[0].mxu0 %v119
    %v202 = vpop.f32.mrb[0].mxu0
    %v203 = vadd.f32 %v112, %v202
    %v204 = vpop.f32.mrb[0].mxu0
    %205 = vmatprep.mubr.f32.mxu0 0.0
    %206 = vmatmul.mubr.f32.gmra.mrb[0].mxu0 %v122
    %v207 = vpop.f32.mrb[0].mxu0
    %v208 = vadd.f32 %v112, %v207
    %v209 = vpop.f32.mrb[0].mxu0
    %210 = vmatprep.mubr.f32.mxu0 0.0
    %211 = vmatmul.mubr.f32.gmra.mrb[0].mxu0 %v125
    %v212 = vpop.f32.mrb[0].mxu0
    %v213 = vadd.f32 %v112, %v212
    %v214 = vpop.f32.mrb[0].mxu0
    %215 = vdwg.mxu0
    %v216 = vld [vmem:[%s2] sm:$0xff]
    %v217 = vlaneseq
    %v218 = vshrl.u32 %v217, 7
    %v219 = vsub.s32 0, %v218
    %v220 = vrot.slane %v216, %v219
    %v221 = vlaneseq
    %v222 = vshrl.u32 %v221, 7
    %v223 = vsub.s32 1, %v222
    %v224 = vrot.slane %v216, %v223
    %v225 = vlaneseq
    %v226 = vshrl.u32 %v225, 7
    %v227 = vsub.s32 2, %v226
    %v228 = vrot.slane %v216, %v227
    %v229 = vlaneseq
    %v230 = vshrl.u32 %v229, 7
    %v231 = vsub.s32 3, %v230
    %v232 = vrot.slane %v216, %v231
    %v233 = vlaneseq
    %v234 = vshrl.u32 %v233, 7
    %v235 = vsub.s32 4, %v234
    %v236 = vrot.slane %v216, %v235
    %v237 = vlaneseq
    %v238 = vshrl.u32 %v237, 7
    %v239 = vsub.s32 5, %v238
    %v240 = vrot.slane %v216, %v239
    %v241 = vlaneseq
    %v242 = vshrl.u32 %v241, 7
    %v243 = vsub.s32 6, %v242
    %v244 = vrot.slane %v216, %v243
    %v245 = vlaneseq
    %v246 = vshrl.u32 %v245, 7
    %v247 = vsub.s32 7, %v246
    %v248 = vrot.slane %v216, %v247
    %v249 = vmul.f32 %v220, 0.0
    %v250 = vmul.f32 %v224, 0.0
    %v251 = vmul.f32 %v228, 0.0
    %v252 = vmul.f32 %v232, 0.0
    %v253 = vmul.f32 %v236, 0.0
    %v254 = vmul.f32 %v240, 0.0
    %v255 = vmul.f32 %v244, 0.0
    %v256 = vmul.f32 %v248, 0.0
    %v257 = vadd.f32 %v249, %v250
    %v258 = vadd.f32 %v251, %v252
    %v259 = vadd.f32 %v253, %v254
    %v260 = vadd.f32 %v255, %v256
    %v261 = vadd.f32 %v257, %v258
    %v262 = vadd.f32 %v259, %v260
    %v263 = vadd.f32 %v261, %v262
    %v264 = vadd.f32 %v198, %v263
    %v265 = vxor.u32 %v264, 2147483648
    %v266 = vmul.f32 %v265, 1.442695
    %v267 = vpow.pop %v266
    %v268 = vadd.f32 %v267, 1.0
    %v269 = vrcp.pop %v268
    %v270 = vmul.f32 1.0, %v269
    %v271 = vtanh.pop %v264
    %v272 = vmul.f32 %v270, 0.0
    %274 = vrot.lane.b32.xlu0 %v271, 112
    %v275 = vpop.permute.xlu0 %274
    %v277 = vmul.f32 %v270, %v275
    %279 = vrot.lane.b32.xlu0 %v277, 8
    %v280 = vpop.permute.xlu0 %279
    %v282 = vadd.f32 %v272, %v280
    %v283 = vtanh.pop %v282
    %285 = vrot.lane.b32.xlu0 %v283, 16
    %v286 = vpop.permute.xlu0 %285
    %v288 = vmul.f32 %v270, %v286
    %290 = vset.pattern.permute.xlu0 24
    %291 = vperm.xlu0 %290, %v288
    %v292 = vpop.permute.xlu0 %291
    %v294 = vmul.f32 %v292, %v220
    %295 = vset.pattern.permute.xlu0 25
    %296 = vperm.xlu0 %295, %v288
    %v297 = vpop.permute.xlu0 %296
    %v299 = vmul.f32 %v297, %v224
    %300 = vset.pattern.permute.xlu0 26
    %301 = vperm.xlu0 %300, %v288
    %v302 = vpop.permute.xlu0 %301
    %v304 = vmul.f32 %v302, %v228
    %305 = vset.pattern.permute.xlu0 27
    %306 = vperm.xlu0 %305, %v288
    %v307 = vpop.permute.xlu0 %306
    %v309 = vmul.f32 %v307, %v232
    %310 = vset.pattern.permute.xlu0 28
    %311 = vperm.xlu0 %310, %v288
    %v312 = vpop.permute.xlu0 %311
    %v314 = vmul.f32 %v312, %v236
    %315 = vset.pattern.permute.xlu0 29
    %316 = vperm.xlu0 %315, %v288
    %v317 = vpop.permute.xlu0 %316
    %v319 = vmul.f32 %v317, %v240
    %320 = vset.pattern.permute.xlu0 30
    %321 = vperm.xlu0 %320, %v288
    %v322 = vpop.permute.xlu0 %321
    %v324 = vmul.f32 %v322, %v244
    %325 = vset.pattern.permute.xlu0 31
    %326 = vperm.xlu0 %325, %v288
    %v327 = vpop.permute.xlu0 %326
    %v329 = vmul.f32 %v327, %v248
    %v330 = vadd.f32 %v294, %v299
    %v331 = vadd.f32 %v304, %v309
    %v332 = vadd.f32 %v314, %v319
    %v333 = vadd.f32 %v324, %v329
    %v334 = vadd.f32 %v330, %v331
    %v335 = vadd.f32 %v332, %v333
    %v336 = vadd.f32 %v334, %v335
    %v338 = vrot.slane %v336, 6
    %v340 = vadd.f32 %v198, %v338
    %v341 = vxor.u32 %v340, 2147483648
    %v342 = vmul.f32 %v341, 1.442695
    %v343 = vpow.pop %v342
    %v344 = vadd.f32 %v343, 1.0
    %v345 = vrcp.pop %v344
    %v346 = vmul.f32 1.0, %v345
    %v347 = vtanh.pop %v340
    %v349 = vrot.slane %v282, 6
    %v351 = vmul.f32 %v346, %v349
    %353 = vrot.lane.b32.xlu0 %v347, 112
    %v354 = vpop.permute.xlu0 %353
    %v356 = vmul.f32 %v346, %v354
    %358 = vrot.lane.b32.xlu0 %v356, 8
    %v359 = vpop.permute.xlu0 %358
    %v361 = vadd.f32 %v351, %v359
    %v362 = vtanh.pop %v361
    %364 = vrot.lane.b32.xlu0 %v362, 16
    %v365 = vpop.permute.xlu0 %364
    %v367 = vmul.f32 %v346, %v365
    %369 = vset.pattern.permute.xlu0 24
    %370 = vperm.xlu0 %369, %v367
    %v371 = vpop.permute.xlu0 %370
    %v373 = vmul.f32 %v371, %v220
    %374 = vset.pattern.permute.xlu0 25
    %375 = vperm.xlu0 %374, %v367
    %v376 = vpop.permute.xlu0 %375
    %v378 = vmul.f32 %v376, %v224
    %379 = vset.pattern.permute.xlu0 26
    %380 = vperm.xlu0 %379, %v367
    %v381 = vpop.permute.xlu0 %380
    %v383 = vmul.f32 %v381, %v228
    %384 = vset.pattern.permute.xlu0 27
    %385 = vperm.xlu0 %384, %v367
    %v386 = vpop.permute.xlu0 %385
    %v388 = vmul.f32 %v386, %v232
    %389 = vset.pattern.permute.xlu0 28
    %390 = vperm.xlu0 %389, %v367
    %v391 = vpop.permute.xlu0 %390
    %v393 = vmul.f32 %v391, %v236
    %394 = vset.pattern.permute.xlu0 29
    %395 = vperm.xlu0 %394, %v367
    %v396 = vpop.permute.xlu0 %395
    %v398 = vmul.f32 %v396, %v240
    %399 = vset.pattern.permute.xlu0 30
    %400 = vperm.xlu0 %399, %v367
    %v401 = vpop.permute.xlu0 %400
    %v403 = vmul.f32 %v401, %v244
    %404 = vset.pattern.permute.xlu0 31
    %405 = vperm.xlu0 %404, %v367
    %v406 = vpop.permute.xlu0 %405
    %v408 = vmul.f32 %v406, %v248
    %v409 = vadd.f32 %v373, %v378
    %v410 = vadd.f32 %v383, %v388
    %v411 = vadd.f32 %v393, %v398
    %v412 = vadd.f32 %v403, %v408
    %v413 = vadd.f32 %v409, %v410
    %v414 = vadd.f32 %v411, %v412
    %v415 = vadd.f32 %v413, %v414
    %v417 = vrot.slane %v415, 6
    %v419 = vadd.f32 %v198, %v417
    %v420 = vxor.u32 %v419, 2147483648
    %v421 = vmul.f32 %v420, 1.442695
    %v422 = vpow.pop %v421
    %v423 = vadd.f32 %v422, 1.0
    %v424 = vrcp.pop %v423
    %v425 = vmul.f32 1.0, %v424
    %v426 = vtanh.pop %v419
    %v428 = vrot.slane %v361, 6
    %v430 = vmul.f32 %v425, %v428
    %432 = vrot.lane.b32.xlu0 %v426, 112
    %v433 = vpop.permute.xlu0 %432
    %v435 = vmul.f32 %v425, %v433
    %437 = vrot.lane.b32.xlu0 %v435, 8
    %v438 = vpop.permute.xlu0 %437
    %v440 = vadd.f32 %v430, %v438
    %v441 = vtanh.pop %v440
    %443 = vrot.lane.b32.xlu0 %v441, 16
    %v444 = vpop.permute.xlu0 %443
    %v446 = vmul.f32 %v425, %v444
    %448 = vset.pattern.permute.xlu0 24
    %449 = vperm.xlu0 %448, %v446
    %v450 = vpop.permute.xlu0 %449
    %v452 = vmul.f32 %v450, %v220
    %453 = vset.pattern.permute.xlu0 25
    %454 = vperm.xlu0 %453, %v446
    %v455 = vpop.permute.xlu0 %454
    %v457 = vmul.f32 %v455, %v224
    %458 = vset.pattern.permute.xlu0 26
    %459 = vperm.xlu0 %458, %v446
    %v460 = vpop.permute.xlu0 %459
    %v462 = vmul.f32 %v460, %v228
    %463 = vset.pattern.permute.xlu0 27
    %464 = vperm.xlu0 %463, %v446
    %v465 = vpop.permute.xlu0 %464
    %v467 = vmul.f32 %v465, %v232
    %468 = vset.pattern.permute.xlu0 28
    %469 = vperm.xlu0 %468, %v446
    %v470 = vpop.permute.xlu0 %469
    %v472 = vmul.f32 %v470, %v236
    %473 = vset.pattern.permute.xlu0 29
    %474 = vperm.xlu0 %473, %v446
    %v475 = vpop.permute.xlu0 %474
    %v477 = vmul.f32 %v475, %v240
    %478 = vset.pattern.permute.xlu0 30
    %479 = vperm.xlu0 %478, %v446
    %v480 = vpop.permute.xlu0 %479
    %v482 = vmul.f32 %v480, %v244
    %483 = vset.pattern.permute.xlu0 31
    %484 = vperm.xlu0 %483, %v446
    %v485 = vpop.permute.xlu0 %484
    %v487 = vmul.f32 %v485, %v248
    %v488 = vadd.f32 %v452, %v457
    %v489 = vadd.f32 %v462, %v467
    %v490 = vadd.f32 %v472, %v477
    %v491 = vadd.f32 %v482, %v487
    %v492 = vadd.f32 %v488, %v489
    %v493 = vadd.f32 %v490, %v491
    %v494 = vadd.f32 %v492, %v493
    %v496 = vrot.slane %v494, 6
    %v498 = vadd.f32 %v198, %v496
    %v499 = vxor.u32 %v498, 2147483648
    %v500 = vmul.f32 %v499, 1.442695
    %v501 = vpow.pop %v500
    %v502 = vadd.f32 %v501, 1.0
    %v503 = vrcp.pop %v502
    %v504 = vmul.f32 1.0, %v503
    %v505 = vtanh.pop %v498
    %v507 = vrot.slane %v440, 6
    %v509 = vmul.f32 %v504, %v507
    %511 = vrot.lane.b32.xlu0 %v505, 112
    %v512 = vpop.permute.xlu0 %511
    %v514 = vmul.f32 %v504, %v512
    %516 = vrot.lane.b32.xlu0 %v514, 8
    %v517 = vpop.permute.xlu0 %516
    %v519 = vadd.f32 %v509, %v517
    %v520 = vtanh.pop %v519
    %522 = vrot.lane.b32.xlu0 %v520, 16
    %v523 = vpop.permute.xlu0 %522
    %v525 = vmul.f32 %v504, %v523
    %527 = vset.pattern.permute.xlu0 24
    %528 = vperm.xlu0 %527, %v525
    %v529 = vpop.permute.xlu0 %528
    %v531 = vmul.f32 %v529, %v220
    %532 = vset.pattern.permute.xlu0 25
    %533 = vperm.xlu0 %532, %v525
    %v534 = vpop.permute.xlu0 %533
    %v536 = vmul.f32 %v534, %v224
    %537 = vset.pattern.permute.xlu0 26
    %538 = vperm.xlu0 %537, %v525
    %v539 = vpop.permute.xlu0 %538
    %v541 = vmul.f32 %v539, %v228
    %542 = vset.pattern.permute.xlu0 27
    %543 = vperm.xlu0 %542, %v525
    %v544 = vpop.permute.xlu0 %543
    %v546 = vmul.f32 %v544, %v232
    %547 = vset.pattern.permute.xlu0 28
    %548 = vperm.xlu0 %547, %v525
    %v549 = vpop.permute.xlu0 %548
    %v551 = vmul.f32 %v549, %v236
    %552 = vset.pattern.permute.xlu0 29
    %553 = vperm.xlu0 %552, %v525
    %v554 = vpop.permute.xlu0 %553
    %v556 = vmul.f32 %v554, %v240
    %557 = vset.pattern.permute.xlu0 30
    %558 = vperm.xlu0 %557, %v525
    %v559 = vpop.permute.xlu0 %558
    %v561 = vmul.f32 %v559, %v244
    %562 = vset.pattern.permute.xlu0 31
    %563 = vperm.xlu0 %562, %v525
    %v564 = vpop.permute.xlu0 %563
    %v566 = vmul.f32 %v564, %v248
    %v567 = vadd.f32 %v531, %v536
    %v568 = vadd.f32 %v541, %v546
    %v569 = vadd.f32 %v551, %v556
    %v570 = vadd.f32 %v561, %v566
    %v571 = vadd.f32 %v567, %v568
    %v572 = vadd.f32 %v569, %v570
    %v573 = vadd.f32 %v571, %v572
    %v575 = vrot.slane %v573, 6
    %v577 = vadd.f32 %v203, %v575
    %v578 = vxor.u32 %v577, 2147483648
    %v579 = vmul.f32 %v578, 1.442695
    %v580 = vpow.pop %v579
    %v581 = vadd.f32 %v580, 1.0
    %v582 = vrcp.pop %v581
    %v583 = vmul.f32 1.0, %v582
    %v584 = vtanh.pop %v577
    %v586 = vrot.slane %v519, 6
    %v588 = vmul.f32 %v583, %v586
    %590 = vrot.lane.b32.xlu0 %v584, 112
    %v591 = vpop.permute.xlu0 %590
    %v593 = vmul.f32 %v583, %v591
    %595 = vrot.lane.b32.xlu0 %v593, 8
    %v596 = vpop.permute.xlu0 %595
    %v598 = vadd.f32 %v588, %v596
    %v599 = vtanh.pop %v598
    %601 = vrot.lane.b32.xlu0 %v599, 16
    %v602 = vpop.permute.xlu0 %601
    %v604 = vmul.f32 %v583, %v602
    %606 = vset.pattern.permute.xlu0 24
    %607 = vperm.xlu0 %606, %v604
    %v608 = vpop.permute.xlu0 %607
    %v610 = vmul.f32 %v608, %v220
    %611 = vset.pattern.permute.xlu0 25
    %612 = vperm.xlu0 %611, %v604
    %v613 = vpop.permute.xlu0 %612
    %v615 = vmul.f32 %v613, %v224
    %616 = vset.pattern.permute.xlu0 26
    %617 = vperm.xlu0 %616, %v604
    %v618 = vpop.permute.xlu0 %617
    %v620 = vmul.f32 %v618, %v228
    %621 = vset.pattern.permute.xlu0 27
    %622 = vperm.xlu0 %621, %v604
    %v623 = vpop.permute.xlu0 %622
    %v625 = vmul.f32 %v623, %v232
    %626 = vset.pattern.permute.xlu0 28
    %627 = vperm.xlu0 %626, %v604
    %v628 = vpop.permute.xlu0 %627
    %v630 = vmul.f32 %v628, %v236
    %631 = vset.pattern.permute.xlu0 29
    %632 = vperm.xlu0 %631, %v604
    %v633 = vpop.permute.xlu0 %632
    %v635 = vmul.f32 %v633, %v240
    %636 = vset.pattern.permute.xlu0 30
    %637 = vperm.xlu0 %636, %v604
    %v638 = vpop.permute.xlu0 %637
    %v640 = vmul.f32 %v638, %v244
    %641 = vset.pattern.permute.xlu0 31
    %642 = vperm.xlu0 %641, %v604
    %v643 = vpop.permute.xlu0 %642
    %v645 = vmul.f32 %v643, %v248
    %v646 = vadd.f32 %v610, %v615
    %v647 = vadd.f32 %v620, %v625
    %v648 = vadd.f32 %v630, %v635
    %v649 = vadd.f32 %v640, %v645
    %v650 = vadd.f32 %v646, %v647
    %v651 = vadd.f32 %v648, %v649
    %v652 = vadd.f32 %v650, %v651
    %v654 = vrot.slane %v652, 6
    %v656 = vadd.f32 %v203, %v654
    %v657 = vxor.u32 %v656, 2147483648
    %v658 = vmul.f32 %v657, 1.442695
    %v659 = vpow.pop %v658
    %v660 = vadd.f32 %v659, 1.0
    %v661 = vrcp.pop %v660
    %v662 = vmul.f32 1.0, %v661
    %v663 = vtanh.pop %v656
    %v665 = vrot.slane %v598, 6
    %v667 = vmul.f32 %v662, %v665
    %669 = vrot.lane.b32.xlu0 %v663, 112
    %v670 = vpop.permute.xlu0 %669
    %v672 = vmul.f32 %v662, %v670
    %674 = vrot.lane.b32.xlu0 %v672, 8
    %v675 = vpop.permute.xlu0 %674
    %v677 = vadd.f32 %v667, %v675
    %v678 = vtanh.pop %v677
    %680 = vrot.lane.b32.xlu0 %v678, 16
    %v681 = vpop.permute.xlu0 %680
    %v683 = vmul.f32 %v662, %v681
    %685 = vset.pattern.permute.xlu0 24
    %686 = vperm.xlu0 %685, %v683
    %v687 = vpop.permute.xlu0 %686
    %v689 = vmul.f32 %v687, %v220
    %690 = vset.pattern.permute.xlu0 25
    %691 = vperm.xlu0 %690, %v683
    %v692 = vpop.permute.xlu0 %691
    %v694 = vmul.f32 %v692, %v224
    %695 = vset.pattern.permute.xlu0 26
    %696 = vperm.xlu0 %695, %v683
    %v697 = vpop.permute.xlu0 %696
    %v699 = vmul.f32 %v697, %v228
    %700 = vset.pattern.permute.xlu0 27
    %701 = vperm.xlu0 %700, %v683
    %v702 = vpop.permute.xlu0 %701
    %v704 = vmul.f32 %v702, %v232
    %705 = vset.pattern.permute.xlu0 28
    %706 = vperm.xlu0 %705, %v683
    %v707 = vpop.permute.xlu0 %706
    %v709 = vmul.f32 %v707, %v236
    %710 = vset.pattern.permute.xlu0 29
    %711 = vperm.xlu0 %710, %v683
    %v712 = vpop.permute.xlu0 %711
    %v714 = vmul.f32 %v712, %v240
    %715 = vset.pattern.permute.xlu0 30
    %716 = vperm.xlu0 %715, %v683
    %v717 = vpop.permute.xlu0 %716
    %v719 = vmul.f32 %v717, %v244
    %720 = vset.pattern.permute.xlu0 31
    %721 = vperm.xlu0 %720, %v683
    %v722 = vpop.permute.xlu0 %721
    %v724 = vmul.f32 %v722, %v248
    %v725 = vadd.f32 %v689, %v694
    %v726 = vadd.f32 %v699, %v704
    %v727 = vadd.f32 %v709, %v714
    %v728 = vadd.f32 %v719, %v724
    %v729 = vadd.f32 %v725, %v726
    %v730 = vadd.f32 %v727, %v728
    %v731 = vadd.f32 %v729, %v730
    %v733 = vrot.slane %v731, 6
    %v735 = vadd.f32 %v203, %v733
    %v736 = vxor.u32 %v735, 2147483648
    %v737 = vmul.f32 %v736, 1.442695
    %v738 = vpow.pop %v737
    %v739 = vadd.f32 %v738, 1.0
    %v740 = vrcp.pop %v739
    %v741 = vmul.f32 1.0, %v740
    %v742 = vtanh.pop %v735
    %v744 = vrot.slane %v677, 6
    %v746 = vmul.f32 %v741, %v744
    %748 = vrot.lane.b32.xlu0 %v742, 112
    %v749 = vpop.permute.xlu0 %748
    %v751 = vmul.f32 %v741, %v749
    %753 = vrot.lane.b32.xlu0 %v751, 8
    %v754 = vpop.permute.xlu0 %753
    %v756 = vadd.f32 %v746, %v754
    %v757 = vtanh.pop %v756
    %759 = vrot.lane.b32.xlu0 %v757, 16
    %v760 = vpop.permute.xlu0 %759
    %v762 = vmul.f32 %v741, %v760
    %764 = vset.pattern.permute.xlu0 24
    %765 = vperm.xlu0 %764, %v762
    %v766 = vpop.permute.xlu0 %765
    %v768 = vmul.f32 %v766, %v220
    %769 = vset.pattern.permute.xlu0 25
    %770 = vperm.xlu0 %769, %v762
    %v771 = vpop.permute.xlu0 %770
    %v773 = vmul.f32 %v771, %v224
    %774 = vset.pattern.permute.xlu0 26
    %775 = vperm.xlu0 %774, %v762
    %v776 = vpop.permute.xlu0 %775
    %v778 = vmul.f32 %v776, %v228
    %779 = vset.pattern.permute.xlu0 27
    %780 = vperm.xlu0 %779, %v762
    %v781 = vpop.permute.xlu0 %780
    %v783 = vmul.f32 %v781, %v232
    %784 = vset.pattern.permute.xlu0 28
    %785 = vperm.xlu0 %784, %v762
    %v786 = vpop.permute.xlu0 %785
    %v788 = vmul.f32 %v786, %v236
    %789 = vset.pattern.permute.xlu0 29
    %790 = vperm.xlu0 %789, %v762
    %v791 = vpop.permute.xlu0 %790
    %v793 = vmul.f32 %v791, %v240
    %794 = vset.pattern.permute.xlu0 30
    %795 = vperm.xlu0 %794, %v762
    %v796 = vpop.permute.xlu0 %795
    %v798 = vmul.f32 %v796, %v244
    %799 = vset.pattern.permute.xlu0 31
    %800 = vperm.xlu0 %799, %v762
    %v801 = vpop.permute.xlu0 %800
    %v803 = vmul.f32 %v801, %v248
    %v804 = vadd.f32 %v768, %v773
    %v805 = vadd.f32 %v778, %v783
    %v806 = vadd.f32 %v788, %v793
    %v807 = vadd.f32 %v798, %v803
    %v808 = vadd.f32 %v804, %v805
    %v809 = vadd.f32 %v806, %v807
    %v810 = vadd.f32 %v808, %v809
    %v812 = vrot.slane %v810, 6
    %v814 = vadd.f32 %v203, %v812
    %v815 = vxor.u32 %v814, 2147483648
    %v816 = vmul.f32 %v815, 1.442695
    %v817 = vpow.pop %v816
    %v818 = vadd.f32 %v817, 1.0
    %v819 = vrcp.pop %v818
    %v820 = vmul.f32 1.0, %v819
    %v821 = vtanh.pop %v814
    %v823 = vrot.slane %v756, 6
    %v825 = vmul.f32 %v820, %v823
    %827 = vrot.lane.b32.xlu0 %v821, 112
    %v828 = vpop.permute.xlu0 %827
    %v830 = vmul.f32 %v820, %v828
    %832 = vrot.lane.b32.xlu0 %v830, 8
    %v833 = vpop.permute.xlu0 %832
    %v835 = vadd.f32 %v825, %v833
    %v836 = vtanh.pop %v835
    %838 = vrot.lane.b32.xlu0 %v836, 16
    %v839 = vpop.permute.xlu0 %838
    %v841 = vmul.f32 %v820, %v839
    %843 = vset.pattern.permute.xlu0 24
    %844 = vperm.xlu0 %843, %v841
    %v845 = vpop.permute.xlu0 %844
    %v847 = vmul.f32 %v845, %v220
    %848 = vset.pattern.permute.xlu0 25
    %849 = vperm.xlu0 %848, %v841
    %v850 = vpop.permute.xlu0 %849
    %v852 = vmul.f32 %v850, %v224
    %853 = vset.pattern.permute.xlu0 26
    %854 = vperm.xlu0 %853, %v841
    %v855 = vpop.permute.xlu0 %854
    %v857 = vmul.f32 %v855, %v228
    %858 = vset.pattern.permute.xlu0 27
    %859 = vperm.xlu0 %858, %v841
    %v860 = vpop.permute.xlu0 %859
    %v862 = vmul.f32 %v860, %v232
    %863 = vset.pattern.permute.xlu0 28
    %864 = vperm.xlu0 %863, %v841
    %v865 = vpop.permute.xlu0 %864
    %v867 = vmul.f32 %v865, %v236
    %868 = vset.pattern.permute.xlu0 29
    %869 = vperm.xlu0 %868, %v841
    %v870 = vpop.permute.xlu0 %869
    %v872 = vmul.f32 %v870, %v240
    %873 = vset.pattern.permute.xlu0 30
    %874 = vperm.xlu0 %873, %v841
    %v875 = vpop.permute.xlu0 %874
    %v877 = vmul.f32 %v875, %v244
    %878 = vset.pattern.permute.xlu0 31
    %879 = vperm.xlu0 %878, %v841
    %v880 = vpop.permute.xlu0 %879
    %v882 = vmul.f32 %v880, %v248
    %v883 = vadd.f32 %v847, %v852
    %v884 = vadd.f32 %v857, %v862
    %v885 = vadd.f32 %v867, %v872
    %v886 = vadd.f32 %v877, %v882
    %v887 = vadd.f32 %v883, %v884
    %v888 = vadd.f32 %v885, %v886
    %v889 = vadd.f32 %v887, %v888
    %v891 = vrot.slane %v889, 6
    %v893 = vadd.f32 %v208, %v891
    %v894 = vxor.u32 %v893, 2147483648
    %v895 = vmul.f32 %v894, 1.442695
    %v896 = vpow.pop %v895
    %v897 = vadd.f32 %v896, 1.0
    %v898 = vrcp.pop %v897
    %v899 = vmul.f32 1.0, %v898
    %v900 = vtanh.pop %v893
    %v902 = vrot.slane %v835, 6
    %v904 = vmul.f32 %v899, %v902
    %906 = vrot.lane.b32.xlu0 %v900, 112
    %v907 = vpop.permute.xlu0 %906
    %v909 = vmul.f32 %v899, %v907
    %911 = vrot.lane.b32.xlu0 %v909, 8
    %v912 = vpop.permute.xlu0 %911
    %v914 = vadd.f32 %v904, %v912
    %v915 = vtanh.pop %v914
    %917 = vrot.lane.b32.xlu0 %v915, 16
    %v918 = vpop.permute.xlu0 %917
    %v920 = vmul.f32 %v899, %v918
    %922 = vset.pattern.permute.xlu0 24
    %923 = vperm.xlu0 %922, %v920
    %v924 = vpop.permute.xlu0 %923
    %v926 = vmul.f32 %v924, %v220
    %927 = vset.pattern.permute.xlu0 25
    %928 = vperm.xlu0 %927, %v920
    %v929 = vpop.permute.xlu0 %928
    %v931 = vmul.f32 %v929, %v224
    %932 = vset.pattern.permute.xlu0 26
    %933 = vperm.xlu0 %932, %v920
    %v934 = vpop.permute.xlu0 %933
    %v936 = vmul.f32 %v934, %v228
    %937 = vset.pattern.permute.xlu0 27
    %938 = vperm.xlu0 %937, %v920
    %v939 = vpop.permute.xlu0 %938
    %v941 = vmul.f32 %v939, %v232
    %942 = vset.pattern.permute.xlu0 28
    %943 = vperm.xlu0 %942, %v920
    %v944 = vpop.permute.xlu0 %943
    %v946 = vmul.f32 %v944, %v236
    %947 = vset.pattern.permute.xlu0 29
    %948 = vperm.xlu0 %947, %v920
    %v949 = vpop.permute.xlu0 %948
    %v951 = vmul.f32 %v949, %v240
    %952 = vset.pattern.permute.xlu0 30
    %953 = vperm.xlu0 %952, %v920
    %v954 = vpop.permute.xlu0 %953
    %v956 = vmul.f32 %v954, %v244
    %957 = vset.pattern.permute.xlu0 31
    %958 = vperm.xlu0 %957, %v920
    %v959 = vpop.permute.xlu0 %958
    %v961 = vmul.f32 %v959, %v248
    %v962 = vadd.f32 %v926, %v931
    %v963 = vadd.f32 %v936, %v941
    %v964 = vadd.f32 %v946, %v951
    %v965 = vadd.f32 %v956, %v961
    %v966 = vadd.f32 %v962, %v963
    %v967 = vadd.f32 %v964, %v965
    %v968 = vadd.f32 %v966, %v967
    %v970 = vrot.slane %v968, 6
    %v972 = vadd.f32 %v208, %v970
    %v973 = vxor.u32 %v972, 2147483648
    %v974 = vmul.f32 %v973, 1.442695
    %v975 = vpow.pop %v974
    %v976 = vadd.f32 %v975, 1.0
    %v977 = vrcp.pop %v976
    %v978 = vmul.f32 1.0, %v977
    %v979 = vtanh.pop %v972
    %v981 = vrot.slane %v914, 6
    %v983 = vmul.f32 %v978, %v981
    %985 = vrot.lane.b32.xlu0 %v979, 112
    %v986 = vpop.permute.xlu0 %985
    %v988 = vmul.f32 %v978, %v986
    %990 = vrot.lane.b32.xlu0 %v988, 8
    %v991 = vpop.permute.xlu0 %990
    %v993 = vadd.f32 %v983, %v991
    %v994 = vtanh.pop %v993
    %996 = vrot.lane.b32.xlu0 %v994, 16
    %v997 = vpop.permute.xlu0 %996
    %v999 = vmul.f32 %v978, %v997
    %1001 = vset.pattern.permute.xlu0 24
    %1002 = vperm.xlu0 %1001, %v999
    %v1003 = vpop.permute.xlu0 %1002
    %v1005 = vmul.f32 %v1003, %v220
    %1006 = vset.pattern.permute.xlu0 25
    %1007 = vperm.xlu0 %1006, %v999
    %v1008 = vpop.permute.xlu0 %1007
    %v1010 = vmul.f32 %v1008, %v224
    %1011 = vset.pattern.permute.xlu0 26
    %1012 = vperm.xlu0 %1011, %v999
    %v1013 = vpop.permute.xlu0 %1012
    %v1015 = vmul.f32 %v1013, %v228
    %1016 = vset.pattern.permute.xlu0 27
    %1017 = vperm.xlu0 %1016, %v999
    %v1018 = vpop.permute.xlu0 %1017
    %v1020 = vmul.f32 %v1018, %v232
    %1021 = vset.pattern.permute.xlu0 28
    %1022 = vperm.xlu0 %1021, %v999
    %v1023 = vpop.permute.xlu0 %1022
    %v1025 = vmul.f32 %v1023, %v236
    %1026 = vset.pattern.permute.xlu0 29
    %1027 = vperm.xlu0 %1026, %v999
    %v1028 = vpop.permute.xlu0 %1027
    %v1030 = vmul.f32 %v1028, %v240
    %1031 = vset.pattern.permute.xlu0 30
    %1032 = vperm.xlu0 %1031, %v999
    %v1033 = vpop.permute.xlu0 %1032
    %v1035 = vmul.f32 %v1033, %v244
    %1036 = vset.pattern.permute.xlu0 31
    %1037 = vperm.xlu0 %1036, %v999
    %v1038 = vpop.permute.xlu0 %1037
    %v1040 = vmul.f32 %v1038, %v248
    %v1041 = vadd.f32 %v1005, %v1010
    %v1042 = vadd.f32 %v1015, %v1020
    %v1043 = vadd.f32 %v1025, %v1030
    %v1044 = vadd.f32 %v1035, %v1040
    %v1045 = vadd.f32 %v1041, %v1042
    %v1046 = vadd.f32 %v1043, %v1044
    %v1047 = vadd.f32 %v1045, %v1046
    %v1049 = vrot.slane %v1047, 6
    %v1051 = vadd.f32 %v208, %v1049
    %v1052 = vxor.u32 %v1051, 2147483648
    %v1053 = vmul.f32 %v1052, 1.442695
    %v1054 = vpow.pop %v1053
    %v1055 = vadd.f32 %v1054, 1.0
    %v1056 = vrcp.pop %v1055
    %v1057 = vmul.f32 1.0, %v1056
    %v1058 = vtanh.pop %v1051
    %v1060 = vrot.slane %v993, 6
    %v1062 = vmul.f32 %v1057, %v1060
    %1064 = vrot.lane.b32.xlu0 %v1058, 112
    %v1065 = vpop.permute.xlu0 %1064
    %v1067 = vmul.f32 %v1057, %v1065
    %1069 = vrot.lane.b32.xlu0 %v1067, 8
    %v1070 = vpop.permute.xlu0 %1069
    %v1072 = vadd.f32 %v1062, %v1070
    %v1073 = vtanh.pop %v1072
    %1075 = vrot.lane.b32.xlu0 %v1073, 16
    %v1076 = vpop.permute.xlu0 %1075
    %v1078 = vmul.f32 %v1057, %v1076
    %1080 = vset.pattern.permute.xlu0 24
    %1081 = vperm.xlu0 %1080, %v1078
    %v1082 = vpop.permute.xlu0 %1081
    %v1084 = vmul.f32 %v1082, %v220
    %1085 = vset.pattern.permute.xlu0 25
    %1086 = vperm.xlu0 %1085, %v1078
    %v1087 = vpop.permute.xlu0 %1086
    %v1089 = vmul.f32 %v1087, %v224
    %1090 = vset.pattern.permute.xlu0 26
    %1091 = vperm.xlu0 %1090, %v1078
    %v1092 = vpop.permute.xlu0 %1091
    %v1094 = vmul.f32 %v1092, %v228
    %1095 = vset.pattern.permute.xlu0 27
    %1096 = vperm.xlu0 %1095, %v1078
    %v1097 = vpop.permute.xlu0 %1096
    %v1099 = vmul.f32 %v1097, %v232
    %1100 = vset.pattern.permute.xlu0 28
    %1101 = vperm.xlu0 %1100, %v1078
    %v1102 = vpop.permute.xlu0 %1101
    %v1104 = vmul.f32 %v1102, %v236
    %1105 = vset.pattern.permute.xlu0 29
    %1106 = vperm.xlu0 %1105, %v1078
    %v1107 = vpop.permute.xlu0 %1106
    %v1109 = vmul.f32 %v1107, %v240
    %1110 = vset.pattern.permute.xlu0 30
    %1111 = vperm.xlu0 %1110, %v1078
    %v1112 = vpop.permute.xlu0 %1111
    %v1114 = vmul.f32 %v1112, %v244
    %1115 = vset.pattern.permute.xlu0 31
    %1116 = vperm.xlu0 %1115, %v1078
    %v1117 = vpop.permute.xlu0 %1116
    %v1119 = vmul.f32 %v1117, %v248
    %v1120 = vadd.f32 %v1084, %v1089
    %v1121 = vadd.f32 %v1094, %v1099
    %v1122 = vadd.f32 %v1104, %v1109
    %v1123 = vadd.f32 %v1114, %v1119
    %v1124 = vadd.f32 %v1120, %v1121
    %v1125 = vadd.f32 %v1122, %v1123
    %v1126 = vadd.f32 %v1124, %v1125
    %v1128 = vrot.slane %v1126, 6
    %v1130 = vadd.f32 %v208, %v1128
    %v1131 = vxor.u32 %v1130, 2147483648
    %v1132 = vmul.f32 %v1131, 1.442695
    %v1133 = vpow.pop %v1132
    %v1134 = vadd.f32 %v1133, 1.0
    %v1135 = vrcp.pop %v1134
    %v1136 = vmul.f32 1.0, %v1135
    %v1137 = vtanh.pop %v1130
    %v1139 = vrot.slane %v1072, 6
    %v1141 = vmul.f32 %v1136, %v1139
    %1143 = vrot.lane.b32.xlu0 %v1137, 112
    %v1144 = vpop.permute.xlu0 %1143
    %v1146 = vmul.f32 %v1136, %v1144
    %1148 = vrot.lane.b32.xlu0 %v1146, 8
    %v1149 = vpop.permute.xlu0 %1148
    %v1151 = vadd.f32 %v1141, %v1149
    %v1152 = vtanh.pop %v1151
    %1154 = vrot.lane.b32.xlu0 %v1152, 16
    %v1155 = vpop.permute.xlu0 %1154
    %v1157 = vmul.f32 %v1136, %v1155
    %1159 = vset.pattern.permute.xlu0 24
    %1160 = vperm.xlu0 %1159, %v1157
    %v1161 = vpop.permute.xlu0 %1160
    %v1163 = vmul.f32 %v1161, %v220
    %1164 = vset.pattern.permute.xlu0 25
    %1165 = vperm.xlu0 %1164, %v1157
    %v1166 = vpop.permute.xlu0 %1165
    %v1168 = vmul.f32 %v1166, %v224
    %1169 = vset.pattern.permute.xlu0 26
    %1170 = vperm.xlu0 %1169, %v1157
    %v1171 = vpop.permute.xlu0 %1170
    %v1173 = vmul.f32 %v1171, %v228
    %1174 = vset.pattern.permute.xlu0 27
    %1175 = vperm.xlu0 %1174, %v1157
    %v1176 = vpop.permute.xlu0 %1175
    %v1178 = vmul.f32 %v1176, %v232
    %1179 = vset.pattern.permute.xlu0 28
    %1180 = vperm.xlu0 %1179, %v1157
    %v1181 = vpop.permute.xlu0 %1180
    %v1183 = vmul.f32 %v1181, %v236
    %1184 = vset.pattern.permute.xlu0 29
    %1185 = vperm.xlu0 %1184, %v1157
    %v1186 = vpop.permute.xlu0 %1185
    %v1188 = vmul.f32 %v1186, %v240
    %1189 = vset.pattern.permute.xlu0 30
    %1190 = vperm.xlu0 %1189, %v1157
    %v1191 = vpop.permute.xlu0 %1190
    %v1193 = vmul.f32 %v1191, %v244
    %1194 = vset.pattern.permute.xlu0 31
    %1195 = vperm.xlu0 %1194, %v1157
    %v1196 = vpop.permute.xlu0 %1195
    %v1198 = vmul.f32 %v1196, %v248
    %v1199 = vadd.f32 %v1163, %v1168
    %v1200 = vadd.f32 %v1173, %v1178
    %v1201 = vadd.f32 %v1183, %v1188
    %v1202 = vadd.f32 %v1193, %v1198
    %v1203 = vadd.f32 %v1199, %v1200
    %v1204 = vadd.f32 %v1201, %v1202
    %v1205 = vadd.f32 %v1203, %v1204
    %v1207 = vrot.slane %v1205, 6
    %v1209 = vadd.f32 %v213, %v1207
    %v1210 = vxor.u32 %v1209, 2147483648
    %v1211 = vmul.f32 %v1210, 1.442695
    %v1212 = vpow.pop %v1211
    %v1213 = vadd.f32 %v1212, 1.0
    %v1214 = vrcp.pop %v1213
    %v1215 = vmul.f32 1.0, %v1214
    %v1216 = vtanh.pop %v1209
    %v1218 = vrot.slane %v1151, 6
    %v1220 = vmul.f32 %v1215, %v1218
    %1222 = vrot.lane.b32.xlu0 %v1216, 112
    %v1223 = vpop.permute.xlu0 %1222
    %v1225 = vmul.f32 %v1215, %v1223
    %1227 = vrot.lane.b32.xlu0 %v1225, 8
    %v1228 = vpop.permute.xlu0 %1227
    %v1230 = vadd.f32 %v1220, %v1228
    %v1231 = vtanh.pop %v1230
    %1233 = vrot.lane.b32.xlu0 %v1231, 16
    %v1234 = vpop.permute.xlu0 %1233
    %v1236 = vmul.f32 %v1215, %v1234
    %1238 = vset.pattern.permute.xlu0 24
    %1239 = vperm.xlu0 %1238, %v1236
    %v1240 = vpop.permute.xlu0 %1239
    %v1242 = vmul.f32 %v1240, %v220
    %1243 = vset.pattern.permute.xlu0 25
    %1244 = vperm.xlu0 %1243, %v1236
    %v1245 = vpop.permute.xlu0 %1244
    %v1247 = vmul.f32 %v1245, %v224
    %1248 = vset.pattern.permute.xlu0 26
    %1249 = vperm.xlu0 %1248, %v1236
    %v1250 = vpop.permute.xlu0 %1249
    %v1252 = vmul.f32 %v1250, %v228
    %1253 = vset.pattern.permute.xlu0 27
    %1254 = vperm.xlu0 %1253, %v1236
    %v1255 = vpop.permute.xlu0 %1254
    %v1257 = vmul.f32 %v1255, %v232
    %1258 = vset.pattern.permute.xlu0 28
    %1259 = vperm.xlu0 %1258, %v1236
    %v1260 = vpop.permute.xlu0 %1259
    %v1262 = vmul.f32 %v1260, %v236
    %1263 = vset.pattern.permute.xlu0 29
    %1264 = vperm.xlu0 %1263, %v1236
    %v1265 = vpop.permute.xlu0 %1264
    %v1267 = vmul.f32 %v1265, %v240
    %1268 = vset.pattern.permute.xlu0 30
    %1269 = vperm.xlu0 %1268, %v1236
    %v1270 = vpop.permute.xlu0 %1269
    %v1272 = vmul.f32 %v1270, %v244
    %1273 = vset.pattern.permute.xlu0 31
    %1274 = vperm.xlu0 %1273, %v1236
    %v1275 = vpop.permute.xlu0 %1274
    %v1277 = vmul.f32 %v1275, %v248
    %v1278 = vadd.f32 %v1242, %v1247
    %v1279 = vadd.f32 %v1252, %v1257
    %v1280 = vadd.f32 %v1262, %v1267
    %v1281 = vadd.f32 %v1272, %v1277
    %v1282 = vadd.f32 %v1278, %v1279
    %v1283 = vadd.f32 %v1280, %v1281
    %v1284 = vadd.f32 %v1282, %v1283
    %v1286 = vrot.slane %v1284, 6
    %v1288 = vadd.f32 %v213, %v1286
    %v1289 = vxor.u32 %v1288, 2147483648
    %v1290 = vmul.f32 %v1289, 1.442695
    %v1291 = vpow.pop %v1290
    %v1292 = vadd.f32 %v1291, 1.0
    %v1293 = vrcp.pop %v1292
    %v1294 = vmul.f32 1.0, %v1293
    %v1295 = vtanh.pop %v1288
    %v1297 = vrot.slane %v1230, 6
    %v1299 = vmul.f32 %v1294, %v1297
    %1301 = vrot.lane.b32.xlu0 %v1295, 112
    %v1302 = vpop.permute.xlu0 %1301
    %v1304 = vmul.f32 %v1294, %v1302
    %1306 = vrot.lane.b32.xlu0 %v1304, 8
    %v1307 = vpop.permute.xlu0 %1306
    %v1309 = vadd.f32 %v1299, %v1307
    %v1310 = vtanh.pop %v1309
    %1312 = vrot.lane.b32.xlu0 %v1310, 16
    %v1313 = vpop.permute.xlu0 %1312
    %v1315 = vmul.f32 %v1294, %v1313
    %1317 = vset.pattern.permute.xlu0 24
    %1318 = vperm.xlu0 %1317, %v1315
    %v1319 = vpop.permute.xlu0 %1318
    %v1321 = vmul.f32 %v1319, %v220
    %1322 = vset.pattern.permute.xlu0 25
    %1323 = vperm.xlu0 %1322, %v1315
    %v1324 = vpop.permute.xlu0 %1323
    %v1326 = vmul.f32 %v1324, %v224
    %1327 = vset.pattern.permute.xlu0 26
    %1328 = vperm.xlu0 %1327, %v1315
    %v1329 = vpop.permute.xlu0 %1328
    %v1331 = vmul.f32 %v1329, %v228
    %1332 = vset.pattern.permute.xlu0 27
    %1333 = vperm.xlu0 %1332, %v1315
    %v1334 = vpop.permute.xlu0 %1333
    %v1336 = vmul.f32 %v1334, %v232
    %1337 = vset.pattern.permute.xlu0 28
    %1338 = vperm.xlu0 %1337, %v1315
    %v1339 = vpop.permute.xlu0 %1338
    %v1341 = vmul.f32 %v1339, %v236
    %1342 = vset.pattern.permute.xlu0 29
    %1343 = vperm.xlu0 %1342, %v1315
    %v1344 = vpop.permute.xlu0 %1343
    %v1346 = vmul.f32 %v1344, %v240
    %1347 = vset.pattern.permute.xlu0 30
    %1348 = vperm.xlu0 %1347, %v1315
    %v1349 = vpop.permute.xlu0 %1348
    %v1351 = vmul.f32 %v1349, %v244
    %1352 = vset.pattern.permute.xlu0 31
    %1353 = vperm.xlu0 %1352, %v1315
    %v1354 = vpop.permute.xlu0 %1353
    %v1356 = vmul.f32 %v1354, %v248
    %v1357 = vadd.f32 %v1321, %v1326
    %v1358 = vadd.f32 %v1331, %v1336
    %v1359 = vadd.f32 %v1341, %v1346
    %v1360 = vadd.f32 %v1351, %v1356
    %v1361 = vadd.f32 %v1357, %v1358
    %v1362 = vadd.f32 %v1359, %v1360
    %v1363 = vadd.f32 %v1361, %v1362
    %v1365 = vrot.slane %v1363, 6
    %v1367 = vadd.f32 %v213, %v1365
    %v1368 = vxor.u32 %v1367, 2147483648
    %v1369 = vmul.f32 %v1368, 1.442695
    %v1370 = vpow.pop %v1369
    %v1371 = vadd.f32 %v1370, 1.0
    %v1372 = vrcp.pop %v1371
    %v1373 = vmul.f32 1.0, %v1372
    %v1374 = vtanh.pop %v1367
    %v1376 = vrot.slane %v1309, 6
    %v1378 = vmul.f32 %v1373, %v1376
    %1380 = vrot.lane.b32.xlu0 %v1374, 112
    %v1381 = vpop.permute.xlu0 %1380
    %v1383 = vmul.f32 %v1373, %v1381
    %1385 = vrot.lane.b32.xlu0 %v1383, 8
    %v1386 = vpop.permute.xlu0 %1385
    %v1388 = vadd.f32 %v1378, %v1386
    %v1389 = vtanh.pop %v1388
    %1391 = vrot.lane.b32.xlu0 %v1389, 16
    %v1392 = vpop.permute.xlu0 %1391
    %v1394 = vmul.f32 %v1373, %v1392
    %1396 = vset.pattern.permute.xlu0 24
    %1397 = vperm.xlu0 %1396, %v1394
    %v1398 = vpop.permute.xlu0 %1397
    %v1400 = vmul.f32 %v1398, %v220
    %1401 = vset.pattern.permute.xlu0 25
    %1402 = vperm.xlu0 %1401, %v1394
    %v1403 = vpop.permute.xlu0 %1402
    %v1405 = vmul.f32 %v1403, %v224
    %1406 = vset.pattern.permute.xlu0 26
    %1407 = vperm.xlu0 %1406, %v1394
    %v1408 = vpop.permute.xlu0 %1407
    %v1410 = vmul.f32 %v1408, %v228
    %1411 = vset.pattern.permute.xlu0 27
    %1412 = vperm.xlu0 %1411, %v1394
    %v1413 = vpop.permute.xlu0 %1412
    %v1415 = vmul.f32 %v1413, %v232
    %1416 = vset.pattern.permute.xlu0 28
    %1417 = vperm.xlu0 %1416, %v1394
    %v1418 = vpop.permute.xlu0 %1417
    %v1420 = vmul.f32 %v1418, %v236
    %1421 = vset.pattern.permute.xlu0 29
    %1422 = vperm.xlu0 %1421, %v1394
    %v1423 = vpop.permute.xlu0 %1422
    %v1425 = vmul.f32 %v1423, %v240
    %1426 = vset.pattern.permute.xlu0 30
    %1427 = vperm.xlu0 %1426, %v1394
    %v1428 = vpop.permute.xlu0 %1427
    %v1430 = vmul.f32 %v1428, %v244
    %1431 = vset.pattern.permute.xlu0 31
    %1432 = vperm.xlu0 %1431, %v1394
    %v1433 = vpop.permute.xlu0 %1432
    %v1435 = vmul.f32 %v1433, %v248
    %v1436 = vadd.f32 %v1400, %v1405
    %v1437 = vadd.f32 %v1410, %v1415
    %v1438 = vadd.f32 %v1420, %v1425
    %v1439 = vadd.f32 %v1430, %v1435
    %v1440 = vadd.f32 %v1436, %v1437
    %v1441 = vadd.f32 %v1438, %v1439
    %v1442 = vadd.f32 %v1440, %v1441
    %v1444 = vrot.slane %v1442, 6
    %v1446 = vadd.f32 %v213, %v1444
    %v1447 = vxor.u32 %v1446, 2147483648
    %v1448 = vmul.f32 %v1447, 1.442695
    %v1449 = vpow.pop %v1448
    %v1450 = vadd.f32 %v1449, 1.0
    %v1451 = vrcp.pop %v1450
    %v1452 = vmul.f32 1.0, %v1451
    %v1453 = vtanh.pop %v1446
    %v1455 = vrot.slane %v1388, 6
    %v1457 = vmul.f32 %v1452, %v1455
    %1459 = vrot.lane.b32.xlu0 %v1453, 112
    %v1460 = vpop.permute.xlu0 %1459
    %v1462 = vmul.f32 %v1452, %v1460
    %1464 = vrot.lane.b32.xlu0 %v1462, 8
    %v1465 = vpop.permute.xlu0 %1464
    %v1467 = vadd.f32 %v1457, %v1465
    %v1468 = vtanh.pop %v1467
    %1470 = vrot.lane.b32.xlu0 %v1468, 16
    %v1471 = vpop.permute.xlu0 %1470
    %v1473 = vmul.f32 %v1452, %v1471
    %v1474 = vld [vmem:[%s4] sm:$0xff]
    %v1475 = vld [vmem:[%s4 + $0x8] sm:$0xff]
    %v1476 = vld [vmem:[%s4 + $0x10] sm:$0xff]
    %v1477 = vld [vmem:[%s4 + $0x18] sm:$0xff]
    %v1478 = vld [vmem:[%s5] sm:$0xff]
    %v1479 = vld [vmem:[%s5 + $0x8] sm:$0xff]
    %v1480 = vld [vmem:[%s5 + $0x10] sm:$0xff]
    %v1481 = vld [vmem:[%s5 + $0x18] sm:$0xff]
    %vm1482 = vcmask 261120
    %v1484 = vsel %vm1482, %v1474, 0
    %v1487 = vsel %vm1482, %v1475, 0
    %v1490 = vsel %vm1482, %v1476, 0
    %v1493 = vsel %vm1482, %v1477, 0
    %1495 = vmatprep.subr.mxu0 0.0
    %1496 = vmatpush1.msra.mxu0 %v1478
    %1497 = vmatprep.subr.mxu0 0.0
    %1498 = vmatpush1.msra.mxu0 %v1479
    %1499 = vmatprep.subr.mxu0 0.0
    %1500 = vmatpush1.msra.mxu0 %v1480
    %1501 = vmatprep.subr.mxu0 0.0
    %1502 = vmatpush1.msra.mxu0 %v1481
    %1503 = vmatprep.subr.mxu0 0.0
    %1504 = vmatpush1.msra.mxu0 0.0
    %1505 = vmatprep.subr.mxu0 0.0
    %1506 = vmatpush1.msra.mxu0 0.0
    %1507 = vmatprep.subr.mxu0 0.0
    %1508 = vmatpush1.msra.mxu0 0.0
    %1509 = vmatprep.subr.mxu0 0.0
    %1510 = vmatpush1.msra.mxu0 0.0
    %1511 = vmatprep.subr.mxu0 0.0
    %1512 = vmatpush1.msra.mxu0 0.0
    %1513 = vmatprep.subr.mxu0 0.0
    %1514 = vmatpush1.msra.mxu0 0.0
    %1515 = vmatprep.subr.mxu0 0.0
    %1516 = vmatpush1.msra.mxu0 0.0
    %1517 = vmatprep.subr.mxu0 0.0
    %1518 = vmatpush1.msra.mxu0 0.0
    %1519 = vmatprep.subr.mxu0 0.0
    %1520 = vmatpush1.msra.mxu0 0.0
    %1521 = vmatprep.subr.mxu0 0.0
    %1522 = vmatpush1.msra.mxu0 0.0
    %1523 = vmatprep.subr.mxu0 0.0
    %1524 = vmatpush1.msra.mxu0 0.0
    %1525 = vmatprep.subr.mxu0 0.0
    %1526 = vmatpush1.msra.mxu0 0.0
    %1527 = vmatprep.subr.mxu0 0.0
    %1528 = vmatpush1.msra.mxu0 0.0
    %1529 = vmatprep.subr.mxu0 0.0
    %1530 = vmatpush1.msra.mxu0 0.0
    %1531 = vmatprep.subr.mxu0 0.0
    %1532 = vmatpush1.msra.mxu0 0.0
    %1533 = vmatprep.subr.mxu0 0.0
    %1534 = vmatpush1.msra.mxu0 0.0
    %1535 = vmatprep.subr.mxu0 0.0
    %1536 = vmatpush1.msra.mxu0 0.0
    %1537 = vmatprep.subr.mxu0 0.0
    %1538 = vmatpush1.msra.mxu0 0.0
    %1539 = vmatprep.subr.mxu0 0.0
    %1540 = vmatpush1.msra.mxu0 0.0
    %1541 = vmatprep.subr.mxu0 0.0
    %1542 = vmatpush1.msra.mxu0 0.0
    %1543 = vmatprep.subr.mxu0 0.0
    %1544 = vmatpush1.msra.mxu0 0.0
    %1545 = vmatprep.subr.mxu0 0.0
    %1546 = vmatpush1.msra.mxu0 0.0
    %1547 = vmatprep.subr.mxu0 0.0
    %1548 = vmatpush1.msra.mxu0 0.0
    %1549 = vmatprep.subr.mxu0 0.0
    %1550 = vmatpush1.msra.mxu0 0.0
    %1551 = vmatprep.subr.mxu0 0.0
    %1552 = vmatpush1.msra.mxu0 0.0
    %1553 = vmatprep.subr.mxu0 0.0
    %1554 = vmatpush1.msra.mxu0 0.0
    %1555 = vmatprep.subr.mxu0 0.0
    %1556 = vmatpush1.msra.mxu0 0.0
    %1557 = vmatprep.subr.mxu0 0.0
    %1558 = vmatpush1.msra.mxu0 0.0
    %1559 = vmatprep.mubr.f32.mxu0 0.0
    %1560 = vmatmul.mubr.f32.gmra.mrb[0].mxu0 %v1484
    %v1561 = vpop.f32.mrb[0].mxu0
    %v1562 = vadd.f32 0.0, %v1561
    %v1563 = vpop.f32.mrb[0].mxu0
    %1564 = vmatprep.mubr.f32.mxu0 0.0
    %1565 = vmatmul.mubr.f32.gmra.mrb[0].mxu0 %v1487
    %v1566 = vpop.f32.mrb[0].mxu0
    %v1567 = vadd.f32 0.0, %v1566
    %v1568 = vpop.f32.mrb[0].mxu0
    %1569 = vmatprep.mubr.f32.mxu0 0.0
    %1570 = vmatmul.mubr.f32.gmra.mrb[0].mxu0 %v1490
    %v1571 = vpop.f32.mrb[0].mxu0
    %v1572 = vadd.f32 0.0, %v1571
    %v1573 = vpop.f32.mrb[0].mxu0
    %1574 = vmatprep.mubr.f32.mxu0 0.0
    %1575 = vmatmul.mubr.f32.gmra.mrb[0].mxu0 %v1493
    %v1576 = vpop.f32.mrb[0].mxu0
    %v1577 = vadd.f32 0.0, %v1576
    %v1578 = vpop.f32.mrb[0].mxu0
    %1579 = vdwg.mxu0
    %v1580 = vld [vmem:[%s6] sm:$0x1]
    %v1582 = vlaneseq
    %v1583 = vshrl.u32 %v1582, 7
    %v1584 = vsub.s32 0, %v1583
    %v1585 = vrot.slane %v1580, %v1584
    %v1587 = vmul.f32 %v1562, %v1585
    %v1588 = vmul.f32 %v1567, %v1585
    %v1589 = vmul.f32 %v1572, %v1585
    %v1590 = vmul.f32 %v1577, %v1585
    %v1591 = vld [vmem:[%s7] sm:$0x1]
    %v1593 = vlaneseq
    %v1594 = vshrl.u32 %v1593, 7
    %v1595 = vsub.s32 0, %v1594
    %v1596 = vrot.slane %v1591, %v1595
    %v1598 = vadd.f32 %v1587, %v1596
    %v1599 = vadd.f32 %v1588, %v1596
    %v1600 = vadd.f32 %v1589, %v1596
    %v1601 = vadd.f32 %v1590, %v1596
    %v1602 = vmax.f32 %v1598, 0.0
    %v1603 = vmax.f32 %v1599, 0.0
    %v1604 = vmax.f32 %v1600, 0.0
    %v1605 = vmax.f32 %v1601, 0.0
    %v1606 = vadd.f32 %v1602, %v1603
    %v1607 = vrot.slane %v1606, 4
    %v1608 = vadd.f32 %v1606, %v1607
    %v1609 = vrot.slane %v1608, 2
    %v1610 = vadd.f32 %v1608, %v1609
    %v1611 = vrot.slane %v1610, 1
    %v1612 = vadd.f32 %v1610, %v1611
    %v1613 = vrcp.pop 16.0
    %v1614 = vmul.f32 %v1612, %v1613
    %v1615 = vadd.f32 %v1604, %v1605
    %v1616 = vrot.slane %v1615, 4
    %v1617 = vadd.f32 %v1615, %v1616
    %v1618 = vrot.slane %v1617, 2
    %v1619 = vadd.f32 %v1617, %v1618
    %v1620 = vrot.slane %v1619, 1
    %v1621 = vadd.f32 %v1619, %v1620
    %v1622 = vmul.f32 %v1621, %v1613
    %vm1623 = vcmask 1040384
    %v1624 = vsel %vm1623, %v1614, %v1622
    %v1625 = vld [vmem:[%s8] sm:$0xff]
    %v1626 = vld [vmem:[%s8 + $0x8] sm:$0xff]
    %v1627 = vld [vmem:[%s8 + $0x10] sm:$0xff]
    %v1628 = vld [vmem:[%s8 + $0x18] sm:$0xff]
    %v1629 = vld [vmem:[%s8 + $0x20] sm:$0xff]
    %v1630 = vld [vmem:[%s8 + $0x28] sm:$0xff]
    %v1631 = vld [vmem:[%s8 + $0x30] sm:$0xff]
    %v1632 = vld [vmem:[%s8 + $0x38] sm:$0xff]
    %v1633 = vld [vmem:[%s8 + $0x40] sm:$0xff]
    %v1634 = vld [vmem:[%s8 + $0x48] sm:$0xff]
    %v1635 = vld [vmem:[%s8 + $0x50] sm:$0xff]
    %v1636 = vld [vmem:[%s8 + $0x58] sm:$0xff]
    %v1637 = vld [vmem:[%s8 + $0x60] sm:$0xff]
    %v1638 = vld [vmem:[%s8 + $0x68] sm:$0xff]
    %v1639 = vld [vmem:[%s8 + $0x70] sm:$0xff]
    %v1640 = vld [vmem:[%s8 + $0x78] sm:$0xff]
    %1641 = vmatprep.subr.mxu0 0.0
    %1642 = vmatpush1.msra.mxu0 %v1625
    %1643 = vmatprep.subr.mxu0 0.0
    %1644 = vmatpush1.msra.mxu0 %v1626
    %1645 = vmatprep.subr.mxu0 0.0
    %1646 = vmatpush1.msra.mxu0 %v1627
    %1647 = vmatprep.subr.mxu0 0.0
    %1648 = vmatpush1.msra.mxu0 %v1628
    %1649 = vmatprep.subr.mxu0 0.0
    %1650 = vmatpush1.msra.mxu0 %v1629
    %1651 = vmatprep.subr.mxu0 0.0
    %1652 = vmatpush1.msra.mxu0 %v1630
    %1653 = vmatprep.subr.mxu0 0.0
    %1654 = vmatpush1.msra.mxu0 %v1631
    %1655 = vmatprep.subr.mxu0 0.0
    %1656 = vmatpush1.msra.mxu0 %v1632
    %1657 = vmatprep.subr.mxu0 0.0
    %1658 = vmatpush1.msra.mxu0 %v1633
    %1659 = vmatprep.subr.mxu0 0.0
    %1660 = vmatpush1.msra.mxu0 %v1634
    %1661 = vmatprep.subr.mxu0 0.0
    %1662 = vmatpush1.msra.mxu0 %v1635
    %1663 = vmatprep.subr.mxu0 0.0
    %1664 = vmatpush1.msra.mxu0 %v1636
    %1665 = vmatprep.subr.mxu0 0.0
    %1666 = vmatpush1.msra.mxu0 %v1637
    %1667 = vmatprep.subr.mxu0 0.0
    %1668 = vmatpush1.msra.mxu0 %v1638
    %1669 = vmatprep.subr.mxu0 0.0
    %1670 = vmatpush1.msra.mxu0 %v1639
    %1671 = vmatprep.subr.mxu0 0.0
    %1672 = vmatpush1.msra.mxu0 %v1640
    %1673 = vmatprep.subr.mxu0 0.0
    %1674 = vmatpush1.msra.mxu0 0.0
    %1675 = vmatprep.subr.mxu0 0.0
    %1676 = vmatpush1.msra.mxu0 0.0
    %1677 = vmatprep.subr.mxu0 0.0
    %1678 = vmatpush1.msra.mxu0 0.0
    %1679 = vmatprep.subr.mxu0 0.0
    %1680 = vmatpush1.msra.mxu0 0.0
    %1681 = vmatprep.subr.mxu0 0.0
    %1682 = vmatpush1.msra.mxu0 0.0
    %1683 = vmatprep.subr.mxu0 0.0
    %1684 = vmatpush1.msra.mxu0 0.0
    %1685 = vmatprep.subr.mxu0 0.0
    %1686 = vmatpush1.msra.mxu0 0.0
    %1687 = vmatprep.subr.mxu0 0.0
    %1688 = vmatpush1.msra.mxu0 0.0
    %1689 = vmatprep.subr.mxu0 0.0
    %1690 = vmatpush1.msra.mxu0 0.0
    %1691 = vmatprep.subr.mxu0 0.0
    %1692 = vmatpush1.msra.mxu0 0.0
    %1693 = vmatprep.subr.mxu0 0.0
    %1694 = vmatpush1.msra.mxu0 0.0
    %1695 = vmatprep.subr.mxu0 0.0
    %1696 = vmatpush1.msra.mxu0 0.0
    %1697 = vmatprep.subr.mxu0 0.0
    %1698 = vmatpush1.msra.mxu0 0.0
    %1699 = vmatprep.subr.mxu0 0.0
    %1700 = vmatpush1.msra.mxu0 0.0
    %1701 = vmatprep.subr.mxu0 0.0
    %1702 = vmatpush1.msra.mxu0 0.0
    %1703 = vmatprep.subr.mxu0 0.0
    %1704 = vmatpush1.msra.mxu0 0.0
    %1705 = vmatprep.mubr.f32.mxu0 0.0
    %1706 = vmatmul.mubr.f32.gmra.mrb[0].mxu0 %v1624
    %v1707 = vpop.f32.mrb[0].mxu0
    %v1708 = vadd.f32 0.0, %v1707
    %v1709 = vpop.f32.mrb[0].mxu0
    %1710 = vdwg.mxu0
    %v1711 = vmax.f32 %v1708, 0.0
    %v1712 = vld [vmem:[%s9] sm:$0xff]
    %vm1713 = vcmask 64512
    %v1715 = vsel %vm1713, %v1711, 0
    %1717 = vmatprep.subr.mxu0 0.0
    %1718 = vmatpush1.msra.mxu0 %v1712
    %1719 = vmatprep.subr.mxu0 0.0
    %1720 = vmatpush1.msra.mxu0 0.0
    %1721 = vmatprep.subr.mxu0 0.0
    %1722 = vmatpush1.msra.mxu0 0.0
    %1723 = vmatprep.subr.mxu0 0.0
    %1724 = vmatpush1.msra.mxu0 0.0
    %1725 = vmatprep.subr.mxu0 0.0
    %1726 = vmatpush1.msra.mxu0 0.0
    %1727 = vmatprep.subr.mxu0 0.0
    %1728 = vmatpush1.msra.mxu0 0.0
    %1729 = vmatprep.subr.mxu0 0.0
    %1730 = vmatpush1.msra.mxu0 0.0
    %1731 = vmatprep.subr.mxu0 0.0
    %1732 = vmatpush1.msra.mxu0 0.0
    %1733 = vmatprep.subr.mxu0 0.0
    %1734 = vmatpush1.msra.mxu0 0.0
    %1735 = vmatprep.subr.mxu0 0.0
    %1736 = vmatpush1.msra.mxu0 0.0
    %1737 = vmatprep.subr.mxu0 0.0
    %1738 = vmatpush1.msra.mxu0 0.0
    %1739 = vmatprep.subr.mxu0 0.0
    %1740 = vmatpush1.msra.mxu0 0.0
    %1741 = vmatprep.subr.mxu0 0.0
    %1742 = vmatpush1.msra.mxu0 0.0
    %1743 = vmatprep.subr.mxu0 0.0
    %1744 = vmatpush1.msra.mxu0 0.0
    %1745 = vmatprep.subr.mxu0 0.0
    %1746 = vmatpush1.msra.mxu0 0.0
    %1747 = vmatprep.subr.mxu0 0.0
    %1748 = vmatpush1.msra.mxu0 0.0
    %1749 = vmatprep.subr.mxu0 0.0
    %1750 = vmatpush1.msra.mxu0 0.0
    %1751 = vmatprep.subr.mxu0 0.0
    %1752 = vmatpush1.msra.mxu0 0.0
    %1753 = vmatprep.subr.mxu0 0.0
    %1754 = vmatpush1.msra.mxu0 0.0
    %1755 = vmatprep.subr.mxu0 0.0
    %1756 = vmatpush1.msra.mxu0 0.0
    %1757 = vmatprep.subr.mxu0 0.0
    %1758 = vmatpush1.msra.mxu0 0.0
    %1759 = vmatprep.subr.mxu0 0.0
    %1760 = vmatpush1.msra.mxu0 0.0
    %1761 = vmatprep.subr.mxu0 0.0
    %1762 = vmatpush1.msra.mxu0 0.0
    %1763 = vmatprep.subr.mxu0 0.0
    %1764 = vmatpush1.msra.mxu0 0.0
    %1765 = vmatprep.subr.mxu0 0.0
    %1766 = vmatpush1.msra.mxu0 0.0
    %1767 = vmatprep.subr.mxu0 0.0
    %1768 = vmatpush1.msra.mxu0 0.0
    %1769 = vmatprep.subr.mxu0 0.0
    %1770 = vmatpush1.msra.mxu0 0.0
    %1771 = vmatprep.subr.mxu0 0.0
    %1772 = vmatpush1.msra.mxu0 0.0
    %1773 = vmatprep.subr.mxu0 0.0
    %1774 = vmatpush1.msra.mxu0 0.0
    %1775 = vmatprep.subr.mxu0 0.0
    %1776 = vmatpush1.msra.mxu0 0.0
    %1777 = vmatprep.subr.mxu0 0.0
    %1778 = vmatpush1.msra.mxu0 0.0
    %1779 = vmatprep.subr.mxu0 0.0
    %1780 = vmatpush1.msra.mxu0 0.0
    %1781 = vmatprep.mubr.f32.mxu0 0.0
    %1782 = vmatmul.mubr.f32.gmra.mrb[0].mxu0 %v1715
    %v1783 = vpop.f32.mrb[0].mxu0
    %v1784 = vadd.f32 0.0, %v1783
    %v1785 = vpop.f32.mrb[0].mxu0
    %1786 = vdwg.mxu0
    %v1787 = vxor.u32 %v1784, 2147483648
    %v1788 = vmul.f32 %v1787, 1.442695
    %v1789 = vpow.pop %v1788
    %v1790 = vadd.f32 %v1789, 1.0
    %v1791 = vrcp.pop %v1790
    %v1792 = vmul.f32 1.0, %v1791
    %v1793 = vlaneseq
    %v1794 = vshrl.u32 %v1793, 7
    %v1795 = vsub.s32 0, %v1794
    %v1796 = vrot.slane %v1792, %v1795
    %v1797 = vmul.f32 %v1602, %v1796
    %v1798 = vmul.f32 %v1603, %v1796
    %1799 = vst [vmem:[#allocation4 + $0x8] sm:$0xff] %v1797
    %1800 = vst [vmem:[#allocation4 + $0x10] sm:$0xff] %v1798
    %v1801 = vlaneseq
    %v1802 = vshrl.u32 %v1801, 7
    %v1803 = vsub.s32 1, %v1802
    %v1804 = vrot.slane %v1792, %v1803
    %v1805 = vmul.f32 %v1604, %v1804
    %v1806 = vmul.f32 %v1605, %v1804
    %1807 = vst [vmem:[%s94 + $0x8] sm:$0xff] %v1805
    %1808 = vst [vmem:[%s94 + $0x10] sm:$0xff] %v1806
    %v1809 = vld [vmem:[#allocation4 + $0x6] sm:$0xff]
    %v1810 = vld [vmem:[#allocation4 + $0xe] sm:$0xff]
    %1811 = vst [vmem:[#allocation6] sm:$0xff] %v1809
    %1812 = vst [vmem:[#allocation6 + $0x28] sm:$0xff] %v1810
    %v1813 = vld [vmem:[#allocation4 + $0x7] sm:$0xff]
    %v1814 = vld [vmem:[#allocation4 + $0xf] sm:$0xff]
    %1815 = vst [vmem:[#allocation6 + $0x8] sm:$0xff] %v1813
    %1816 = vst [vmem:[#allocation6 + $0x30] sm:$0xff] %v1814
    %v1817 = vld [vmem:[#allocation4 + $0x8] sm:$0xff]
    %v1818 = vld [vmem:[#allocation4 + $0x10] sm:$0xff]
    %1819 = vst [vmem:[#allocation6 + $0x10] sm:$0xff] %v1817
    %1820 = vst [vmem:[#allocation6 + $0x38] sm:$0xff] %v1818
    %v1821 = vld [vmem:[#allocation4 + $0x9] sm:$0xff]
    %v1822 = vld [vmem:[#allocation4 + $0x11] sm:$0xff]
    %1823 = vst [vmem:[#allocation6 + $0x18] sm:$0xff] %v1821
    %1824 = vst [vmem:[#allocation6 + $0x40] sm:$0xff] %v1822
    %v1825 = vld [vmem:[#allocation4 + $0xa] sm:$0xff]
    %v1826 = vld [vmem:[#allocation4 + $0x12] sm:$0xff]
    %1827 = vst [vmem:[#allocation6 + $0x20] sm:$0xff] %v1825
    %1828 = vst [vmem:[#allocation6 + $0x48] sm:$0xff] %v1826
    %v1829 = vld [vmem:[%s94 + $0x6] sm:$0xff]
    %v1830 = vld [vmem:[%s94 + $0xe] sm:$0xff]
    %1831 = vst [vmem:[#allocation6 + $0x50] sm:$0xff] %v1829
    %1832 = vst [vmem:[#allocation6 + $0x78] sm:$0xff] %v1830
    %v1833 = vld [vmem:[%s94 + $0x7] sm:$0xff]
    %v1834 = vld [vmem:[%s94 + $0xf] sm:$0xff]
    %1835 = vst [vmem:[#allocation6 + $0x58] sm:$0xff] %v1833
    %1836 = vst [vmem:[#allocation6 + $0x80] sm:$0xff] %v1834
    %v1837 = vld [vmem:[%s94 + $0x8] sm:$0xff]
    %v1838 = vld [vmem:[%s94 + $0x10] sm:$0xff]
    %1839 = vst [vmem:[#allocation6 + $0x60] sm:$0xff] %v1837
    %1840 = vst [vmem:[#allocation6 + $0x88] sm:$0xff] %v1838
    %v1841 = vld [vmem:[%s94 + $0x9] sm:$0xff]
    %v1842 = vld [vmem:[%s94 + $0x11] sm:$0xff]
    %1843 = vst [vmem:[#allocation6 + $0x68] sm:$0xff] %v1841
    %1844 = vst [vmem:[#allocation6 + $0x90] sm:$0xff] %v1842
    %v1845 = vld [vmem:[%s94 + $0xa] sm:$0xff]
    %v1846 = vld [vmem:[%s94 + $0x12] sm:$0xff]
    %1847 = vst [vmem:[#allocation6 + $0x70] sm:$0xff] %v1845
    %1848 = vst [vmem:[#allocation6 + $0x98] sm:$0xff] %v1846
    %s1849 = smul.u32 8, 80
    %s1850 = smul.u32 %s1849, 2
    %s1851 = sshll.u32 %s1850, 4
    %1852 = dma.done [#allocation8], %s1851
    %v1853 = vld [vmem:[#allocation6] sm:$0xff]
    %v1854 = vld [vmem:[#allocation6 + $0x8] sm:$0xff]
    %v1855 = vld [vmem:[#allocation6 + $0x10] sm:$0xff]
    %v1856 = vld [vmem:[#allocation6 + $0x18] sm:$0xff]
    %v1857 = vld [vmem:[#allocation6 + $0x20] sm:$0xff]
    %v1858 = vld [vmem:[#allocation6 + $0x28] sm:$0xff]
    %v1859 = vld [vmem:[#allocation6 + $0x30] sm:$0xff]
    %v1860 = vld [vmem:[#allocation6 + $0x38] sm:$0xff]
    %v1861 = vld [vmem:[#allocation6 + $0x40] sm:$0xff]
    %v1862 = vld [vmem:[#allocation6 + $0x48] sm:$0xff]
    %v1863 = vld [vmem:[#allocation6 + $0x50] sm:$0xff]
    %v1864 = vld [vmem:[#allocation6 + $0x58] sm:$0xff]
    %v1865 = vld [vmem:[#allocation6 + $0x60] sm:$0xff]
    %v1866 = vld [vmem:[#allocation6 + $0x68] sm:$0xff]
    %v1867 = vld [vmem:[#allocation6 + $0x70] sm:$0xff]
    %v1868 = vld [vmem:[#allocation6 + $0x78] sm:$0xff]
    %v1869 = vld [vmem:[#allocation6 + $0x80] sm:$0xff]
    %v1870 = vld [vmem:[#allocation6 + $0x88] sm:$0xff]
    %v1871 = vld [vmem:[#allocation6 + $0x90] sm:$0xff]
    %v1872 = vld [vmem:[#allocation6 + $0x98] sm:$0xff]
    %v1873 = vld [vmem:[#allocation2] sm:$0xff]
    %v1874 = vld [vmem:[#allocation2 + $0x8] sm:$0xff]
    %v1875 = vld [vmem:[#allocation2 + $0x10] sm:$0xff]
    %v1876 = vld [vmem:[#allocation2 + $0x18] sm:$0xff]
    %v1877 = vld [vmem:[#allocation2 + $0x20] sm:$0xff]
    %v1878 = vld [vmem:[#allocation2 + $0x28] sm:$0xff]
    %v1879 = vld [vmem:[#allocation2 + $0x30] sm:$0xff]
    %v1880 = vld [vmem:[#allocation2 + $0x38] sm:$0xff]
    %v1881 = vld [vmem:[#allocation2 + $0x40] sm:$0xff]
    %v1882 = vld [vmem:[#allocation2 + $0x48] sm:$0xff]
    %v1883 = vld [vmem:[#allocation2 + $0x50] sm:$0xff]
    %v1884 = vld [vmem:[#allocation2 + $0x58] sm:$0xff]
    %v1885 = vld [vmem:[#allocation2 + $0x60] sm:$0xff]
    %v1886 = vld [vmem:[#allocation2 + $0x68] sm:$0xff]
    %v1887 = vld [vmem:[#allocation2 + $0x70] sm:$0xff]
    %v1888 = vld [vmem:[#allocation2 + $0x78] sm:$0xff]
    %v1889 = vld [vmem:[#allocation2 + $0x80] sm:$0xff]
    %v1890 = vld [vmem:[#allocation2 + $0x88] sm:$0xff]
    %v1891 = vld [vmem:[#allocation2 + $0x90] sm:$0xff]
    %v1892 = vld [vmem:[#allocation2 + $0x98] sm:$0xff]
    %v1893 = vld [vmem:[#allocation2 + $0xa0] sm:$0xff]
    %v1894 = vld [vmem:[#allocation2 + $0xa8] sm:$0xff]
    %v1895 = vld [vmem:[#allocation2 + $0xb0] sm:$0xff]
    %v1896 = vld [vmem:[#allocation2 + $0xb8] sm:$0xff]
    %v1897 = vld [vmem:[#allocation2 + $0xc0] sm:$0xff]
    %v1898 = vld [vmem:[#allocation2 + $0xc8] sm:$0xff]
    %v1899 = vld [vmem:[#allocation2 + $0xd0] sm:$0xff]
    %v1900 = vld [vmem:[#allocation2 + $0xd8] sm:$0xff]
    %v1901 = vld [vmem:[#allocation2 + $0xe0] sm:$0xff]
    %v1902 = vld [vmem:[#allocation2 + $0xe8] sm:$0xff]
    %v1903 = vld [vmem:[#allocation2 + $0xf0] sm:$0xff]
    %v1904 = vld [vmem:[#allocation2 + $0xf8] sm:$0xff]
    %v1905 = vld [vmem:[#allocation2 + $0x100] sm:$0xff]
    %v1906 = vld [vmem:[#allocation2 + $0x108] sm:$0xff]
    %v1907 = vld [vmem:[#allocation2 + $0x110] sm:$0xff]
    %v1908 = vld [vmem:[#allocation2 + $0x118] sm:$0xff]
    %v1909 = vld [vmem:[#allocation2 + $0x120] sm:$0xff]
    %v1910 = vld [vmem:[#allocation2 + $0x128] sm:$0xff]
    %v1911 = vld [vmem:[#allocation2 + $0x130] sm:$0xff]
    %v1912 = vld [vmem:[#allocation2 + $0x138] sm:$0xff]
    %v1913 = vld [vmem:[#allocation2 + $0x140] sm:$0xff]
    %v1914 = vld [vmem:[#allocation2 + $0x148] sm:$0xff]
    %v1915 = vld [vmem:[#allocation2 + $0x150] sm:$0xff]
    %v1916 = vld [vmem:[#allocation2 + $0x158] sm:$0xff]
    %v1917 = vld [vmem:[#allocation2 + $0x160] sm:$0xff]
    %v1918 = vld [vmem:[#allocation2 + $0x168] sm:$0xff]
    %v1919 = vld [vmem:[#allocation2 + $0x170] sm:$0xff]
    %v1920 = vld [vmem:[#allocation2 + $0x178] sm:$0xff]
    %v1921 = vld [vmem:[#allocation2 + $0x180] sm:$0xff]
    %v1922 = vld [vmem:[#allocation2 + $0x188] sm:$0xff]
    %v1923 = vld [vmem:[#allocation2 + $0x190] sm:$0xff]
    %v1924 = vld [vmem:[#allocation2 + $0x198] sm:$0xff]
    %v1925 = vld [vmem:[#allocation2 + $0x1a0] sm:$0xff]
    %v1926 = vld [vmem:[#allocation2 + $0x1a8] sm:$0xff]
    %v1927 = vld [vmem:[#allocation2 + $0x1b0] sm:$0xff]
    %v1928 = vld [vmem:[#allocation2 + $0x1b8] sm:$0xff]
    %v1929 = vld [vmem:[#allocation2 + $0x1c0] sm:$0xff]
    %v1930 = vld [vmem:[#allocation2 + $0x1c8] sm:$0xff]
    %v1931 = vld [vmem:[#allocation2 + $0x1d0] sm:$0xff]
    %v1932 = vld [vmem:[#allocation2 + $0x1d8] sm:$0xff]
    %v1933 = vld [vmem:[#allocation2 + $0x1e0] sm:$0xff]
    %v1934 = vld [vmem:[#allocation2 + $0x1e8] sm:$0xff]
    %v1935 = vld [vmem:[#allocation2 + $0x1f0] sm:$0xff]
    %v1936 = vld [vmem:[#allocation2 + $0x1f8] sm:$0xff]
    %v1937 = vld [vmem:[#allocation2 + $0x200] sm:$0xff]
    %v1938 = vld [vmem:[#allocation2 + $0x208] sm:$0xff]
    %v1939 = vld [vmem:[#allocation2 + $0x210] sm:$0xff]
    %v1940 = vld [vmem:[#allocation2 + $0x218] sm:$0xff]
    %v1941 = vld [vmem:[#allocation2 + $0x220] sm:$0xff]
    %v1942 = vld [vmem:[#allocation2 + $0x228] sm:$0xff]
    %v1943 = vld [vmem:[#allocation2 + $0x230] sm:$0xff]
    %v1944 = vld [vmem:[#allocation2 + $0x238] sm:$0xff]
    %v1945 = vld [vmem:[#allocation2 + $0x240] sm:$0xff]
    %v1946 = vld [vmem:[#allocation2 + $0x248] sm:$0xff]
    %v1947 = vld [vmem:[#allocation2 + $0x250] sm:$0xff]
    %v1948 = vld [vmem:[#allocation2 + $0x258] sm:$0xff]
    %v1949 = vld [vmem:[#allocation2 + $0x260] sm:$0xff]
    %v1950 = vld [vmem:[#allocation2 + $0x268] sm:$0xff]
    %v1951 = vld [vmem:[#allocation2 + $0x270] sm:$0xff]
    %v1952 = vld [vmem:[#allocation2 + $0x278] sm:$0xff]
    %v1953 = vld [vmem:[#allocation2 + $0x280] sm:$0xff]
    %v1954 = vld [vmem:[#allocation2 + $0x288] sm:$0xff]
    %v1955 = vld [vmem:[#allocation2 + $0x290] sm:$0xff]
    %v1956 = vld [vmem:[#allocation2 + $0x298] sm:$0xff]
    %v1957 = vld [vmem:[#allocation2 + $0x2a0] sm:$0xff]
    %v1958 = vld [vmem:[#allocation2 + $0x2a8] sm:$0xff]
    %v1959 = vld [vmem:[#allocation2 + $0x2b0] sm:$0xff]
    %v1960 = vld [vmem:[#allocation2 + $0x2b8] sm:$0xff]
    %v1961 = vld [vmem:[#allocation2 + $0x2c0] sm:$0xff]
    %v1962 = vld [vmem:[#allocation2 + $0x2c8] sm:$0xff]
    %v1963 = vld [vmem:[#allocation2 + $0x2d0] sm:$0xff]
    %v1964 = vld [vmem:[#allocation2 + $0x2d8] sm:$0xff]
    %v1965 = vld [vmem:[#allocation2 + $0x2e0] sm:$0xff]
    %v1966 = vld [vmem:[#allocation2 + $0x2e8] sm:$0xff]
    %v1967 = vld [vmem:[#allocation2 + $0x2f0] sm:$0xff]
    %v1968 = vld [vmem:[#allocation2 + $0x2f8] sm:$0xff]
    %v1969 = vld [vmem:[#allocation2 + $0x300] sm:$0xff]
    %v1970 = vld [vmem:[#allocation2 + $0x308] sm:$0xff]
    %v1971 = vld [vmem:[#allocation2 + $0x310] sm:$0xff]
    %v1972 = vld [vmem:[#allocation2 + $0x318] sm:$0xff]
    %v1973 = vld [vmem:[#allocation2 + $0x320] sm:$0xff]
    %v1974 = vld [vmem:[#allocation2 + $0x328] sm:$0xff]
    %v1975 = vld [vmem:[#allocation2 + $0x330] sm:$0xff]
    %v1976 = vld [vmem:[#allocation2 + $0x338] sm:$0xff]
    %v1977 = vld [vmem:[#allocation2 + $0x340] sm:$0xff]
    %v1978 = vld [vmem:[#allocation2 + $0x348] sm:$0xff]
    %v1979 = vld [vmem:[#allocation2 + $0x350] sm:$0xff]
    %v1980 = vld [vmem:[#allocation2 + $0x358] sm:$0xff]
    %v1981 = vld [vmem:[#allocation2 + $0x360] sm:$0xff]
    %v1982 = vld [vmem:[#allocation2 + $0x368] sm:$0xff]
    %v1983 = vld [vmem:[#allocation2 + $0x370] sm:$0xff]
    %v1984 = vld [vmem:[#allocation2 + $0x378] sm:$0xff]
    %v1985 = vld [vmem:[#allocation2 + $0x380] sm:$0xff]
    %v1986 = vld [vmem:[#allocation2 + $0x388] sm:$0xff]
    %v1987 = vld [vmem:[#allocation2 + $0x390] sm:$0xff]
    %v1988 = vld [vmem:[#allocation2 + $0x398] sm:$0xff]
    %v1989 = vld [vmem:[#allocation2 + $0x3a0] sm:$0xff]
    %v1990 = vld [vmem:[#allocation2 + $0x3a8] sm:$0xff]
    %v1991 = vld [vmem:[#allocation2 + $0x3b0] sm:$0xff]
    %v1992 = vld [vmem:[#allocation2 + $0x3b8] sm:$0xff]
    %v1993 = vld [vmem:[#allocation2 + $0x3c0] sm:$0xff]
    %v1994 = vld [vmem:[#allocation2 + $0x3c8] sm:$0xff]
    %v1995 = vld [vmem:[#allocation2 + $0x3d0] sm:$0xff]
    %v1996 = vld [vmem:[#allocation2 + $0x3d8] sm:$0xff]
    %v1997 = vld [vmem:[#allocation2 + $0x3e0] sm:$0xff]
    %v1998 = vld [vmem:[#allocation2 + $0x3e8] sm:$0xff]
    %v1999 = vld [vmem:[#allocation2 + $0x3f0] sm:$0xff]
    %v2000 = vld [vmem:[#allocation2 + $0x3f8] sm:$0xff]
    %v2001 = vld [vmem:[#allocation2 + $0x400] sm:$0xff]
    %v2002 = vld [vmem:[#allocation2 + $0x408] sm:$0xff]
    %v2003 = vld [vmem:[#allocation2 + $0x410] sm:$0xff]
    %v2004 = vld [vmem:[#allocation2 + $0x418] sm:$0xff]
    %v2005 = vld [vmem:[#allocation2 + $0x420] sm:$0xff]
    %v2006 = vld [vmem:[#allocation2 + $0x428] sm:$0xff]
    %v2007 = vld [vmem:[#allocation2 + $0x430] sm:$0xff]
    %v2008 = vld [vmem:[#allocation2 + $0x438] sm:$0xff]
    %v2009 = vld [vmem:[#allocation2 + $0x440] sm:$0xff]
    %v2010 = vld [vmem:[#allocation2 + $0x448] sm:$0xff]
    %v2011 = vld [vmem:[#allocation2 + $0x450] sm:$0xff]
    %v2012 = vld [vmem:[#allocation2 + $0x458] sm:$0xff]
    %v2013 = vld [vmem:[#allocation2 + $0x460] sm:$0xff]
    %v2014 = vld [vmem:[#allocation2 + $0x468] sm:$0xff]
    %v2015 = vld [vmem:[#allocation2 + $0x470] sm:$0xff]
    %v2016 = vld [vmem:[#allocation2 + $0x478] sm:$0xff]
    %v2017 = vld [vmem:[#allocation2 + $0x480] sm:$0xff]
    %v2018 = vld [vmem:[#allocation2 + $0x488] sm:$0xff]
    %v2019 = vld [vmem:[#allocation2 + $0x490] sm:$0xff]
    %v2020 = vld [vmem:[#allocation2 + $0x498] sm:$0xff]
    %v2021 = vld [vmem:[#allocation2 + $0x4a0] sm:$0xff]
    %v2022 = vld [vmem:[#allocation2 + $0x4a8] sm:$0xff]
    %v2023 = vld [vmem:[#allocation2 + $0x4b0] sm:$0xff]
    %v2024 = vld [vmem:[#allocation2 + $0x4b8] sm:$0xff]
    %v2025 = vld [vmem:[#allocation2 + $0x4c0] sm:$0xff]
    %v2026 = vld [vmem:[#allocation2 + $0x4c8] sm:$0xff]
    %v2027 = vld [vmem:[#allocation2 + $0x4d0] sm:$0xff]
    %v2028 = vld [vmem:[#allocation2 + $0x4d8] sm:$0xff]
    %v2029 = vld [vmem:[#allocation2 + $0x4e0] sm:$0xff]
    %v2030 = vld [vmem:[#allocation2 + $0x4e8] sm:$0xff]
    %v2031 = vld [vmem:[#allocation2 + $0x4f0] sm:$0xff]
    %v2032 = vld [vmem:[#allocation2 + $0x4f8] sm:$0xff]
    %2033 = vmatprep.subr.mxu0 %v1874
    %2034 = vmatpush1.msra.mxu0 %v1873
    %2035 = vmatprep.subr.mxu0 %v1876
    %2036 = vmatpush1.msra.mxu0 %v1875
    %2037 = vmatprep.subr.mxu0 %v1878
    %2038 = vmatpush1.msra.mxu0 %v1877
    %2039 = vmatprep.subr.mxu0 %v1880
    %2040 = vmatpush1.msra.mxu0 %v1879
    %2041 = vmatprep.subr.mxu0 %v1882
    %2042 = vmatpush1.msra.mxu0 %v1881
    %2043 = vmatprep.subr.mxu0 %v1884
    %2044 = vmatpush1.msra.mxu0 %v1883
    %2045 = vmatprep.subr.mxu0 %v1886
    %2046 = vmatpush1.msra.mxu0 %v1885
    %2047 = vmatprep.subr.mxu0 %v1888
    %2048 = vmatpush1.msra.mxu0 %v1887
    %2049 = vmatprep.subr.mxu0 %v1890
    %2050 = vmatpush1.msra.mxu0 %v1889
    %2051 = vmatprep.subr.mxu0 %v1892
    %2052 = vmatpush1.msra.mxu0 %v1891
    %2053 = vmatprep.subr.mxu0 %v1894
    %2054 = vmatpush1.msra.mxu0 %v1893
    %2055 = vmatprep.subr.mxu0 %v1896
    %2056 = vmatpush1.msra.mxu0 %v1895
    %2057 = vmatprep.subr.mxu0 %v1898
    %2058 = vmatpush1.msra.mxu0 %v1897
    %2059 = vmatprep.subr.mxu0 %v1900
    %2060 = vmatpush1.msra.mxu0 %v1899
    %2061 = vmatprep.subr.mxu0 %v1902
    %2062 = vmatpush1.msra.mxu0 %v1901
    %2063 = vmatprep.subr.mxu0 %v1904
    %2064 = vmatpush1.msra.mxu0 %v1903
    %2065 = vmatprep.subr.mxu0 %v1906
    %2066 = vmatpush1.msra.mxu0 %v1905
    %2067 = vmatprep.subr.mxu0 %v1908
    %2068 = vmatpush1.msra.mxu0 %v1907
    %2069 = vmatprep.subr.mxu0 %v1910
    %2070 = vmatpush1.msra.mxu0 %v1909
    %2071 = vmatprep.subr.mxu0 %v1912
    %2072 = vmatpush1.msra.mxu0 %v1911
    %2073 = vmatprep.subr.mxu0 %v1914
    %2074 = vmatpush1.msra.mxu0 %v1913
    %2075 = vmatprep.subr.mxu0 %v1916
    %2076 = vmatpush1.msra.mxu0 %v1915
    %2077 = vmatprep.subr.mxu0 %v1918
    %2078 = vmatpush1.msra.mxu0 %v1917
    %2079 = vmatprep.subr.mxu0 %v1920
    %2080 = vmatpush1.msra.mxu0 %v1919
    %2081 = vmatprep.subr.mxu0 %v1922
    %2082 = vmatpush1.msra.mxu0 %v1921
    %2083 = vmatprep.subr.mxu0 %v1924
    %2084 = vmatpush1.msra.mxu0 %v1923
    %2085 = vmatprep.subr.mxu0 %v1926
    %2086 = vmatpush1.msra.mxu0 %v1925
    %2087 = vmatprep.subr.mxu0 %v1928
    %2088 = vmatpush1.msra.mxu0 %v1927
    %2089 = vmatprep.subr.mxu0 %v1930
    %2090 = vmatpush1.msra.mxu0 %v1929
    %2091 = vmatprep.subr.mxu0 %v1932
    %2092 = vmatpush1.msra.mxu0 %v1931
    %2093 = vmatprep.subr.mxu0 %v1934
    %2094 = vmatpush1.msra.mxu0 %v1933
    %2095 = vmatprep.subr.mxu0 %v1936
    %2096 = vmatpush1.msra.mxu0 %v1935
    %2097 = vmatprep.mubr.f32.mxu0 %v1854
    %2098 = vmatmul.mubr.f32.gmra.mrb[0].mxu0 %v1853
    %v2099 = vpop.f32.mrb[0].mxu0
    %v2100 = vadd.f32 0.0, %v2099
    %v2101 = vpop.f32.mrb[0].mxu0
    %v2102 = vadd.f32 0.0, %v2101
    %2103 = vmatprep.mubr.f32.mxu0 %v1859
    %2104 = vmatmul.mubr.f32.gmra.mrb[0].mxu0 %v1858
    %v2105 = vpop.f32.mrb[0].mxu0
    %v2106 = vadd.f32 0.0, %v2105
    %v2107 = vpop.f32.mrb[0].mxu0
    %v2108 = vadd.f32 0.0, %v2107
    %2109 = vmatprep.mubr.f32.mxu0 %v1864
    %2110 = vmatmul.mubr.f32.gmra.mrb[0].mxu0 %v1863
    %v2111 = vpop.f32.mrb[0].mxu0
    %v2112 = vadd.f32 0.0, %v2111
    %v2113 = vpop.f32.mrb[0].mxu0
    %v2114 = vadd.f32 0.0, %v2113
    %2115 = vmatprep.mubr.f32.mxu0 %v1869
    %2116 = vmatmul.mubr.f32.gmra.mrb[0].mxu0 %v1868
    %v2117 = vpop.f32.mrb[0].mxu0
    %v2118 = vadd.f32 0.0, %v2117
    %v2119 = vpop.f32.mrb[0].mxu0
    %v2120 = vadd.f32 0.0, %v2119
    %2121 = vdwg.mxu0
    %2122 = vmatprep.subr.mxu0 %v1938
    %2123 = vmatpush1.msra.mxu0 %v1937
    %2124 = vmatprep.subr.mxu0 %v1940
    %2125 = vmatpush1.msra.mxu0 %v1939
    %2126 = vmatprep.subr.mxu0 %v1942
    %2127 = vmatpush1.msra.mxu0 %v1941
    %2128 = vmatprep.subr.mxu0 %v1944
    %2129 = vmatpush1.msra.mxu0 %v1943
    %2130 = vmatprep.subr.mxu0 %v1946
    %2131 = vmatpush1.msra.mxu0 %v1945
    %2132 = vmatprep.subr.mxu0 %v1948
    %2133 = vmatpush1.msra.mxu0 %v1947
    %2134 = vmatprep.subr.mxu0 %v1950
    %2135 = vmatpush1.msra.mxu0 %v1949
    %2136 = vmatprep.subr.mxu0 %v1952
    %2137 = vmatpush1.msra.mxu0 %v1951
    %2138 = vmatprep.subr.mxu0 %v1954
    %2139 = vmatpush1.msra.mxu0 %v1953
    %2140 = vmatprep.subr.mxu0 %v1956
    %2141 = vmatpush1.msra.mxu0 %v1955
    %2142 = vmatprep.subr.mxu0 %v1958
    %2143 = vmatpush1.msra.mxu0 %v1957
    %2144 = vmatprep.subr.mxu0 %v1960
    %2145 = vmatpush1.msra.mxu0 %v1959
    %2146 = vmatprep.subr.mxu0 %v1962
    %2147 = vmatpush1.msra.mxu0 %v1961
    %2148 = vmatprep.subr.mxu0 %v1964
    %2149 = vmatpush1.msra.mxu0 %v1963
    %2150 = vmatprep.subr.mxu0 %v1966
    %2151 = vmatpush1.msra.mxu0 %v1965
    %2152 = vmatprep.subr.mxu0 %v1968
    %2153 = vmatpush1.msra.mxu0 %v1967
    %2154 = vmatprep.subr.mxu0 %v1970
    %2155 = vmatpush1.msra.mxu0 %v1969
    %2156 = vmatprep.subr.mxu0 %v1972
    %2157 = vmatpush1.msra.mxu0 %v1971
    %2158 = vmatprep.subr.mxu0 %v1974
    %2159 = vmatpush1.msra.mxu0 %v1973
    %2160 = vmatprep.subr.mxu0 %v1976
    %2161 = vmatpush1.msra.mxu0 %v1975
    %2162 = vmatprep.subr.mxu0 %v1978
    %2163 = vmatpush1.msra.mxu0 %v1977
    %2164 = vmatprep.subr.mxu0 %v1980
    %2165 = vmatpush1.msra.mxu0 %v1979
    %2166 = vmatprep.subr.mxu0 %v1982
    %2167 = vmatpush1.msra.mxu0 %v1981
    %2168 = vmatprep.subr.mxu0 %v1984
    %2169 = vmatpush1.msra.mxu0 %v1983
    %2170 = vmatprep.subr.mxu0 %v1986
    %2171 = vmatpush1.msra.mxu0 %v1985
    %2172 = vmatprep.subr.mxu0 %v1988
    %2173 = vmatpush1.msra.mxu0 %v1987
    %2174 = vmatprep.subr.mxu0 %v1990
    %2175 = vmatpush1.msra.mxu0 %v1989
    %2176 = vmatprep.subr.mxu0 %v1992
    %2177 = vmatpush1.msra.mxu0 %v1991
    %2178 = vmatprep.subr.mxu0 %v1994
    %2179 = vmatpush1.msra.mxu0 %v1993
    %2180 = vmatprep.subr.mxu0 %v1996
    %2181 = vmatpush1.msra.mxu0 %v1995
    %2182 = vmatprep.subr.mxu0 %v1998
    %2183 = vmatpush1.msra.mxu0 %v1997
    %2184 = vmatprep.subr.mxu0 %v2000
    %2185 = vmatpush1.msra.mxu0 %v1999
    %2186 = vmatprep.mubr.f32.mxu0 %v1856
    %2187 = vmatmul.mubr.f32.gmra.mrb[0].mxu0 %v1855
    %v2188 = vpop.f32.mrb[0].mxu0
    %v2189 = vadd.f32 %v2100, %v2188
    %v2190 = vpop.f32.mrb[0].mxu0
    %v2191 = vadd.f32 %v2102, %v2190
    %2192 = vmatprep.mubr.f32.mxu0 %v1861
    %2193 = vmatmul.mubr.f32.gmra.mrb[0].mxu0 %v1860
    %v2194 = vpop.f32.mrb[0].mxu0
    %v2195 = vadd.f32 %v2106, %v2194
    %v2196 = vpop.f32.mrb[0].mxu0
    %v2197 = vadd.f32 %v2108, %v2196
    %2198 = vmatprep.mubr.f32.mxu0 %v1866
    %2199 = vmatmul.mubr.f32.gmra.mrb[0].mxu0 %v1865
    %v2200 = vpop.f32.mrb[0].mxu0
    %v2201 = vadd.f32 %v2112, %v2200
    %v2202 = vpop.f32.mrb[0].mxu0
    %v2203 = vadd.f32 %v2114, %v2202
    %2204 = vmatprep.mubr.f32.mxu0 %v1871
    %2205 = vmatmul.mubr.f32.gmra.mrb[0].mxu0 %v1870
    %v2206 = vpop.f32.mrb[0].mxu0
    %v2207 = vadd.f32 %v2118, %v2206
    %v2208 = vpop.f32.mrb[0].mxu0
    %v2209 = vadd.f32 %v2120, %v2208
    %2210 = vdwg.mxu0
    %2211 = vmatprep.subr.mxu0 %v2002
    %2212 = vmatpush1.msra.mxu0 %v2001
    %2213 = vmatprep.subr.mxu0 %v2004
    %2214 = vmatpush1.msra.mxu0 %v2003
    %2215 = vmatprep.subr.mxu0 %v2006
    %2216 = vmatpush1.msra.mxu0 %v2005
    %2217 = vmatprep.subr.mxu0 %v2008
    %2218 = vmatpush1.msra.mxu0 %v2007
    %2219 = vmatprep.subr.mxu0 %v2010
    %2220 = vmatpush1.msra.mxu0 %v2009
    %2221 = vmatprep.subr.mxu0 %v2012
    %2222 = vmatpush1.msra.mxu0 %v2011
    %2223 = vmatprep.subr.mxu0 %v2014
    %2224 = vmatpush1.msra.mxu0 %v2013
    %2225 = vmatprep.subr.mxu0 %v2016
    %2226 = vmatpush1.msra.mxu0 %v2015
    %2227 = vmatprep.subr.mxu0 %v2018
    %2228 = vmatpush1.msra.mxu0 %v2017
    %2229 = vmatprep.subr.mxu0 %v2020
    %2230 = vmatpush1.msra.mxu0 %v2019
    %2231 = vmatprep.subr.mxu0 %v2022
    %2232 = vmatpush1.msra.mxu0 %v2021
    %2233 = vmatprep.subr.mxu0 %v2024
    %2234 = vmatpush1.msra.mxu0 %v2023
    %2235 = vmatprep.subr.mxu0 %v2026
    %2236 = vmatpush1.msra.mxu0 %v2025
    %2237 = vmatprep.subr.mxu0 %v2028
    %2238 = vmatpush1.msra.mxu0 %v2027
    %2239 = vmatprep.subr.mxu0 %v2030
    %2240 = vmatpush1.msra.mxu0 %v2029
    %2241 = vmatprep.subr.mxu0 %v2032
    %2242 = vmatpush1.msra.mxu0 %v2031
    %2243 = vmatprep.subr.mxu0 0.0
    %2244 = vmatpush1.msra.mxu0 0.0
    %2245 = vmatprep.subr.mxu0 0.0
    %2246 = vmatpush1.msra.mxu0 0.0
    %2247 = vmatprep.subr.mxu0 0.0
    %2248 = vmatpush1.msra.mxu0 0.0
    %2249 = vmatprep.subr.mxu0 0.0
    %2250 = vmatpush1.msra.mxu0 0.0
    %2251 = vmatprep.subr.mxu0 0.0
    %2252 = vmatpush1.msra.mxu0 0.0
    %2253 = vmatprep.subr.mxu0 0.0
    %2254 = vmatpush1.msra.mxu0 0.0
    %2255 = vmatprep.subr.mxu0 0.0
    %2256 = vmatpush1.msra.mxu0 0.0
    %2257 = vmatprep.subr.mxu0 0.0
    %2258 = vmatpush1.msra.mxu0 0.0
    %2259 = vmatprep.subr.mxu0 0.0
    %2260 = vmatpush1.msra.mxu0 0.0
    %2261 = vmatprep.subr.mxu0 0.0
    %2262 = vmatpush1.msra.mxu0 0.0
    %2263 = vmatprep.subr.mxu0 0.0
    %2264 = vmatpush1.msra.mxu0 0.0
    %2265 = vmatprep.subr.mxu0 0.0
    %2266 = vmatpush1.msra.mxu0 0.0
    %2267 = vmatprep.subr.mxu0 0.0
    %2268 = vmatpush1.msra.mxu0 0.0
    %2269 = vmatprep.subr.mxu0 0.0
    %2270 = vmatpush1.msra.mxu0 0.0
    %2271 = vmatprep.subr.mxu0 0.0
    %2272 = vmatpush1.msra.mxu0 0.0
    %2273 = vmatprep.subr.mxu0 0.0
    %2274 = vmatpush1.msra.mxu0 0.0
    %2275 = vmatprep.mubr.f32.mxu0 0.0
    %2276 = vmatmul.mubr.f32.gmra.mrb[0].mxu0 %v1857
    %v2277 = vpop.f32.mrb[0].mxu0
    %v2278 = vadd.f32 %v2189, %v2277
    %v2279 = vpop.f32.mrb[0].mxu0
    %v2280 = vadd.f32 %v2191, %v2279
    %2281 = vmatprep.mubr.f32.mxu0 0.0
    %2282 = vmatmul.mubr.f32.gmra.mrb[0].mxu0 %v1862
    %v2283 = vpop.f32.mrb[0].mxu0
    %v2284 = vadd.f32 %v2195, %v2283
    %v2285 = vpop.f32.mrb[0].mxu0
    %v2286 = vadd.f32 %v2197, %v2285
    %2287 = vmatprep.mubr.f32.mxu0 0.0
    %2288 = vmatmul.mubr.f32.gmra.mrb[0].mxu0 %v1867
    %v2289 = vpop.f32.mrb[0].mxu0
    %v2290 = vadd.f32 %v2201, %v2289
    %v2291 = vpop.f32.mrb[0].mxu0
    %v2292 = vadd.f32 %v2203, %v2291
    %2293 = vmatprep.mubr.f32.mxu0 0.0
    %2294 = vmatmul.mubr.f32.gmra.mrb[0].mxu0 %v1872
    %v2295 = vpop.f32.mrb[0].mxu0
    %v2296 = vadd.f32 %v2207, %v2295
    %v2297 = vpop.f32.mrb[0].mxu0
    %v2298 = vadd.f32 %v2209, %v2297
    %2299 = vdwg.mxu0
    %v2300 = vld [vmem:[%s11] sm:$0x3]
    %v2302 = vlaneseq
    %v2303 = vshrl.u32 %v2302, 7
    %v2304 = vsub.s32 0, %v2303
    %v2305 = vrot.slane %v2300, %v2304
    %v2306 = vlaneseq
    %v2307 = vshrl.u32 %v2306, 7
    %v2308 = vsub.s32 1, %v2307
    %v2309 = vrot.slane %v2300, %v2308
    %v2312 = vmul.f32 %v2278, %v2305
    %v2313 = vmul.f32 %v2280, %v2309
    %v2314 = vmul.f32 %v2284, %v2305
    %v2315 = vmul.f32 %v2286, %v2309
    %v2316 = vmul.f32 %v2290, %v2305
    %v2317 = vmul.f32 %v2292, %v2309
    %v2318 = vmul.f32 %v2296, %v2305
    %v2319 = vmul.f32 %v2298, %v2309
    %v2320 = vld [vmem:[%s12] sm:$0x3]
    %v2322 = vlaneseq
    %v2323 = vshrl.u32 %v2322, 7
    %v2324 = vsub.s32 0, %v2323
    %v2325 = vrot.slane %v2320, %v2324
    %v2326 = vlaneseq
    %v2327 = vshrl.u32 %v2326, 7
    %v2328 = vsub.s32 1, %v2327
    %v2329 = vrot.slane %v2320, %v2328
    %v2332 = vadd.f32 %v2312, %v2325
    %v2333 = vadd.f32 %v2313, %v2329
    %v2334 = vadd.f32 %v2314, %v2325
    %v2335 = vadd.f32 %v2315, %v2329
    %v2336 = vadd.f32 %v2316, %v2325
    %v2337 = vadd.f32 %v2317, %v2329
    %v2338 = vadd.f32 %v2318, %v2325
    %v2339 = vadd.f32 %v2319, %v2329
    %v2340 = vmax.f32 %v2332, 0.0
    %v2341 = vmax.f32 %v2333, 0.0
    %v2342 = vmax.f32 %v2334, 0.0
    %v2343 = vmax.f32 %v2335, 0.0
    %v2344 = vmax.f32 %v2336, 0.0
    %v2345 = vmax.f32 %v2337, 0.0
    %v2346 = vmax.f32 %v2338, 0.0
    %v2347 = vmax.f32 %v2339, 0.0
    %v2348 = vadd.f32 %v2340, %v2342
    %v2349 = vrot.slane %v2348, 4
    %v2350 = vadd.f32 %v2348, %v2349
    %v2351 = vrot.slane %v2350, 2
    %v2352 = vadd.f32 %v2350, %v2351
    %v2353 = vrot.slane %v2352, 1
    %v2354 = vadd.f32 %v2352, %v2353
    %v2355 = vadd.f32 %v2341, %v2343
    %v2356 = vrot.slane %v2355, 4
    %v2357 = vadd.f32 %v2355, %v2356
    %v2358 = vrot.slane %v2357, 2
    %v2359 = vadd.f32 %v2357, %v2358
    %v2360 = vrot.slane %v2359, 1
    %v2361 = vadd.f32 %v2359, %v2360
    %v2362 = vmul.f32 %v2354, %v1613
    %v2363 = vmul.f32 %v2361, %v1613
    %v2364 = vadd.f32 %v2344, %v2346
    %v2365 = vrot.slane %v2364, 4
    %v2366 = vadd.f32 %v2364, %v2365
    %v2367 = vrot.slane %v2366, 2
    %v2368 = vadd.f32 %v2366, %v2367
    %v2369 = vrot.slane %v2368, 1
    %v2370 = vadd.f32 %v2368, %v2369
    %v2371 = vadd.f32 %v2345, %v2347
    %v2372 = vrot.slane %v2371, 4
    %v2373 = vadd.f32 %v2371, %v2372
    %v2374 = vrot.slane %v2373, 2
    %v2375 = vadd.f32 %v2373, %v2374
    %v2376 = vrot.slane %v2375, 1
    %v2377 = vadd.f32 %v2375, %v2376
    %v2378 = vmul.f32 %v2370, %v1613
    %v2379 = vmul.f32 %v2377, %v1613
    %v2380 = vsel %vm1623, %v2362, %v2378
    %v2381 = vsel %vm1623, %v2363, %v2379
    %v2382 = vld [vmem:[%s13] sm:$0xff]
    %v2383 = vld [vmem:[%s13 + $0x8] sm:$0xff]
    %v2384 = vld [vmem:[%s13 + $0x10] sm:$0xff]
    %v2385 = vld [vmem:[%s13 + $0x18] sm:$0xff]
    %v2386 = vld [vmem:[%s13 + $0x20] sm:$0xff]
    %v2387 = vld [vmem:[%s13 + $0x28] sm:$0xff]
    %v2388 = vld [vmem:[%s13 + $0x30] sm:$0xff]
    %v2389 = vld [vmem:[%s13 + $0x38] sm:$0xff]
    %v2390 = vld [vmem:[%s13 + $0x40] sm:$0xff]
    %v2391 = vld [vmem:[%s13 + $0x48] sm:$0xff]
    %v2392 = vld [vmem:[%s13 + $0x50] sm:$0xff]
    %v2393 = vld [vmem:[%s13 + $0x58] sm:$0xff]
    %v2394 = vld [vmem:[%s13 + $0x60] sm:$0xff]
    %v2395 = vld [vmem:[%s13 + $0x68] sm:$0xff]
    %v2396 = vld [vmem:[%s13 + $0x70] sm:$0xff]
    %v2397 = vld [vmem:[%s13 + $0x78] sm:$0xff]
    %v2398 = vld [vmem:[%s13 + $0x80] sm:$0xff]
    %v2399 = vld [vmem:[%s13 + $0x88] sm:$0xff]
    %v2400 = vld [vmem:[%s13 + $0x90] sm:$0xff]
    %v2401 = vld [vmem:[%s13 + $0x98] sm:$0xff]
    %v2402 = vld [vmem:[%s13 + $0xa0] sm:$0xff]
    %v2403 = vld [vmem:[%s13 + $0xa8] sm:$0xff]
    %v2404 = vld [vmem:[%s13 + $0xb0] sm:$0xff]
    %v2405 = vld [vmem:[%s13 + $0xb8] sm:$0xff]
    %v2406 = vld [vmem:[%s13 + $0xc0] sm:$0xff]
    %v2407 = vld [vmem:[%s13 + $0xc8] sm:$0xff]
    %v2408 = vld [vmem:[%s13 + $0xd0] sm:$0xff]
    %v2409 = vld [vmem:[%s13 + $0xd8] sm:$0xff]
    %v2410 = vld [vmem:[%s13 + $0xe0] sm:$0xff]
    %v2411 = vld [vmem:[%s13 + $0xe8] sm:$0xff]
    %v2412 = vld [vmem:[%s13 + $0xf0] sm:$0xff]
    %v2413 = vld [vmem:[%s13 + $0xf8] sm:$0xff]
    %2414 = vmatprep.subr.mxu0 0.0
    %2415 = vmatpush1.msra.mxu0 %v2382
    %2416 = vmatprep.subr.mxu0 0.0
    %2417 = vmatpush1.msra.mxu0 %v2383
    %2418 = vmatprep.subr.mxu0 0.0
    %2419 = vmatpush1.msra.mxu0 %v2384
    %2420 = vmatprep.subr.mxu0 0.0
    %2421 = vmatpush1.msra.mxu0 %v2385
    %2422 = vmatprep.subr.mxu0 0.0
    %2423 = vmatpush1.msra.mxu0 %v2386
    %2424 = vmatprep.subr.mxu0 0.0
    %2425 = vmatpush1.msra.mxu0 %v2387
    %2426 = vmatprep.subr.mxu0 0.0
    %2427 = vmatpush1.msra.mxu0 %v2388
    %2428 = vmatprep.subr.mxu0 0.0
    %2429 = vmatpush1.msra.mxu0 %v2389
    %2430 = vmatprep.subr.mxu0 0.0
    %2431 = vmatpush1.msra.mxu0 %v2390
    %2432 = vmatprep.subr.mxu0 0.0
    %2433 = vmatpush1.msra.mxu0 %v2391
    %2434 = vmatprep.subr.mxu0 0.0
    %2435 = vmatpush1.msra.mxu0 %v2392
    %2436 = vmatprep.subr.mxu0 0.0
    %2437 = vmatpush1.msra.mxu0 %v2393
    %2438 = vmatprep.subr.mxu0 0.0
    %2439 = vmatpush1.msra.mxu0 %v2394
    %2440 = vmatprep.subr.mxu0 0.0
    %2441 = vmatpush1.msra.mxu0 %v2395
    %2442 = vmatprep.subr.mxu0 0.0
    %2443 = vmatpush1.msra.mxu0 %v2396
    %2444 = vmatprep.subr.mxu0 0.0
    %2445 = vmatpush1.msra.mxu0 %v2397
    %2446 = vmatprep.subr.mxu0 0.0
    %2447 = vmatpush1.msra.mxu0 %v2398
    %2448 = vmatprep.subr.mxu0 0.0
    %2449 = vmatpush1.msra.mxu0 %v2399
    %2450 = vmatprep.subr.mxu0 0.0
    %2451 = vmatpush1.msra.mxu0 %v2400
    %2452 = vmatprep.subr.mxu0 0.0
    %2453 = vmatpush1.msra.mxu0 %v2401
    %2454 = vmatprep.subr.mxu0 0.0
    %2455 = vmatpush1.msra.mxu0 %v2402
    %2456 = vmatprep.subr.mxu0 0.0
    %2457 = vmatpush1.msra.mxu0 %v2403
    %2458 = vmatprep.subr.mxu0 0.0
    %2459 = vmatpush1.msra.mxu0 %v2404
    %2460 = vmatprep.subr.mxu0 0.0
    %2461 = vmatpush1.msra.mxu0 %v2405
    %2462 = vmatprep.subr.mxu0 0.0
    %2463 = vmatpush1.msra.mxu0 %v2406
    %2464 = vmatprep.subr.mxu0 0.0
    %2465 = vmatpush1.msra.mxu0 %v2407
    %2466 = vmatprep.subr.mxu0 0.0
    %2467 = vmatpush1.msra.mxu0 %v2408
    %2468 = vmatprep.subr.mxu0 0.0
    %2469 = vmatpush1.msra.mxu0 %v2409
    %2470 = vmatprep.subr.mxu0 0.0
    %2471 = vmatpush1.msra.mxu0 %v2410
    %2472 = vmatprep.subr.mxu0 0.0
    %2473 = vmatpush1.msra.mxu0 %v2411
    %2474 = vmatprep.subr.mxu0 0.0
    %2475 = vmatpush1.msra.mxu0 %v2412
    %2476 = vmatprep.subr.mxu0 0.0
    %2477 = vmatpush1.msra.mxu0 %v2413
    %2478 = vmatprep.mubr.f32.mxu0 %v2381
    %2479 = vmatmul.mubr.f32.gmra.mrb[0].mxu0 %v2380
    %v2480 = vpop.f32.mrb[0].mxu0
    %v2481 = vadd.f32 0.0, %v2480
    %v2482 = vpop.f32.mrb[0].mxu0
    %2483 = vdwg.mxu0
    %v2484 = vmax.f32 %v2481, 0.0
    %v2485 = vld [vmem:[%s14] sm:$0xff]
    %v2486 = vld [vmem:[%s14 + $0x8] sm:$0xff]
    %v2487 = vld [vmem:[%s14 + $0x10] sm:$0xff]
    %v2488 = vld [vmem:[%s14 + $0x18] sm:$0xff]
    %vm2489 = vcmask 130048
    %v2491 = vsel %vm2489, %v2484, 0
    %2493 = vmatprep.subr.mxu0 %v2486
    %2494 = vmatpush1.msra.mxu0 %v2485
    %2495 = vmatprep.subr.mxu0 %v2488
    %2496 = vmatpush1.msra.mxu0 %v2487
    %2497 = vmatprep.subr.mxu0 0.0
    %2498 = vmatpush1.msra.mxu0 0.0
    %2499 = vmatprep.subr.mxu0 0.0
    %2500 = vmatpush1.msra.mxu0 0.0
    %2501 = vmatprep.subr.mxu0 0.0
    %2502 = vmatpush1.msra.mxu0 0.0
    %2503 = vmatprep.subr.mxu0 0.0
    %2504 = vmatpush1.msra.mxu0 0.0
    %2505 = vmatprep.subr.mxu0 0.0
    %2506 = vmatpush1.msra.mxu0 0.0
    %2507 = vmatprep.subr.mxu0 0.0
    %2508 = vmatpush1.msra.mxu0 0.0
    %2509 = vmatprep.subr.mxu0 0.0
    %2510 = vmatpush1.msra.mxu0 0.0
    %2511 = vmatprep.subr.mxu0 0.0
    %2512 = vmatpush1.msra.mxu0 0.0
    %2513 = vmatprep.subr.mxu0 0.0
    %2514 = vmatpush1.msra.mxu0 0.0
    %2515 = vmatprep.subr.mxu0 0.0
    %2516 = vmatpush1.msra.mxu0 0.0
    %2517 = vmatprep.subr.mxu0 0.0
    %2518 = vmatpush1.msra.mxu0 0.0
    %2519 = vmatprep.subr.mxu0 0.0
    %2520 = vmatpush1.msra.mxu0 0.0
    %2521 = vmatprep.subr.mxu0 0.0
    %2522 = vmatpush1.msra.mxu0 0.0
    %2523 = vmatprep.subr.mxu0 0.0
    %2524 = vmatpush1.msra.mxu0 0.0
    %2525 = vmatprep.subr.mxu0 0.0
    %2526 = vmatpush1.msra.mxu0 0.0
    %2527 = vmatprep.subr.mxu0 0.0
    %2528 = vmatpush1.msra.mxu0 0.0
    %2529 = vmatprep.subr.mxu0 0.0
    %2530 = vmatpush1.msra.mxu0 0.0
    %2531 = vmatprep.subr.mxu0 0.0
    %2532 = vmatpush1.msra.mxu0 0.0
    %2533 = vmatprep.subr.mxu0 0.0
    %2534 = vmatpush1.msra.mxu0 0.0
    %2535 = vmatprep.subr.mxu0 0.0
    %2536 = vmatpush1.msra.mxu0 0.0
    %2537 = vmatprep.subr.mxu0 0.0
    %2538 = vmatpush1.msra.mxu0 0.0
    %2539 = vmatprep.subr.mxu0 0.0
    %2540 = vmatpush1.msra.mxu0 0.0
    %2541 = vmatprep.subr.mxu0 0.0
    %2542 = vmatpush1.msra.mxu0 0.0
    %2543 = vmatprep.subr.mxu0 0.0
    %2544 = vmatpush1.msra.mxu0 0.0
    %2545 = vmatprep.subr.mxu0 0.0
    %2546 = vmatpush1.msra.mxu0 0.0
    %2547 = vmatprep.subr.mxu0 0.0
    %2548 = vmatpush1.msra.mxu0 0.0
    %2549 = vmatprep.subr.mxu0 0.0
    %2550 = vmatpush1.msra.mxu0 0.0
    %2551 = vmatprep.subr.mxu0 0.0
    %2552 = vmatpush1.msra.mxu0 0.0
    %2553 = vmatprep.subr.mxu0 0.0
    %2554 = vmatpush1.msra.mxu0 0.0
    %2555 = vmatprep.subr.mxu0 0.0
    %2556 = vmatpush1.msra.mxu0 0.0
    %2557 = vmatprep.mubr.f32.mxu0 0.0
    %2558 = vmatmul.mubr.f32.gmra.mrb[0].mxu0 %v2491
    %v2559 = vpop.f32.mrb[0].mxu0
    %v2560 = vadd.f32 0.0, %v2559
    %v2561 = vpop.f32.mrb[0].mxu0
    %v2562 = vadd.f32 0.0, %v2561
    %2563 = vdwg.mxu0
    %v2564 = vxor.u32 %v2560, 2147483648
    %v2565 = vxor.u32 %v2562, 2147483648
    %v2566 = vmul.f32 %v2564, 1.442695
    %v2567 = vpow.pop %v2566
    %v2568 = vmul.f32 %v2565, 1.442695
    %v2569 = vpow.pop %v2568
    %v2570 = vadd.f32 %v2567, 1.0
    %v2571 = vadd.f32 %v2569, 1.0
    %v2572 = vrcp.pop %v2570
    %v2573 = vmul.f32 1.0, %v2572
    %v2574 = vrcp.pop %v2571
    %v2575 = vmul.f32 1.0, %v2574
    %v2576 = vlaneseq
    %v2577 = vshrl.u32 %v2576, 7
    %v2578 = vsub.s32 0, %v2577
    %v2579 = vrot.slane %v2573, %v2578
    %v2580 = vlaneseq
    %v2581 = vshrl.u32 %v2580, 7
    %v2582 = vsub.s32 0, %v2581
    %v2583 = vrot.slane %v2575, %v2582
    %v2584 = vmul.f32 %v2340, %v2579
    %v2585 = vmul.f32 %v2341, %v2583
    %v2586 = vmul.f32 %v2342, %v2579
    %v2587 = vmul.f32 %v2343, %v2583
    %2588 = vst [vmem:[#allocation5 + $0x10] sm:$0xff] %v2584
    %2589 = vst [vmem:[#allocation5 + $0x18] sm:$0xff] %v2585
    %2590 = vst [vmem:[#allocation5 + $0x20] sm:$0xff] %v2586
    %2591 = vst [vmem:[#allocation5 + $0x28] sm:$0xff] %v2587
    %v2592 = vlaneseq
    %v2593 = vshrl.u32 %v2592, 7
    %v2594 = vsub.s32 1, %v2593
    %v2595 = vrot.slane %v2573, %v2594
    %v2596 = vlaneseq
    %v2597 = vshrl.u32 %v2596, 7
    %v2598 = vsub.s32 1, %v2597
    %v2599 = vrot.slane %v2575, %v2598
    %v2600 = vmul.f32 %v2344, %v2595
    %v2601 = vmul.f32 %v2345, %v2599
    %v2602 = vmul.f32 %v2346, %v2595
    %v2603 = vmul.f32 %v2347, %v2599
    %2604 = vst [vmem:[%s97 + $0x10] sm:$0xff] %v2600
    %2605 = vst [vmem:[%s97 + $0x18] sm:$0xff] %v2601
    %2606 = vst [vmem:[%s97 + $0x20] sm:$0xff] %v2602
    %2607 = vst [vmem:[%s97 + $0x28] sm:$0xff] %v2603
    %v2608 = vld [vmem:[#allocation5] sm:$0x80]
    %v2609 = vld [vmem:[#allocation5 + $0x8] sm:$0x80]
    %v2610 = vld [vmem:[#allocation5 + $0x10] sm:$0xff]
    %v2611 = vld [vmem:[#allocation5 + $0x18] sm:$0xff]
    %v2612 = vld [vmem:[#allocation5 + $0x20] sm:$0x7f]
    %v2613 = vld [vmem:[#allocation5 + $0x28] sm:$0x7f]
    %v2620 = vrot.slane %v2608, 7
    %v2621 = vrot.slane %v2610, 7
    %v2622 = vsel %vm1623, %v2620, %v2621
    %v2623 = vrot.slane %v2609, 7
    %v2624 = vrot.slane %v2611, 7
    %v2625 = vsel %vm1623, %v2623, %v2624
    %v2626 = vrot.slane %v2612, 7
    %v2627 = vsel %vm1623, %v2621, %v2626
    %v2628 = vrot.slane %v2613, 7
    %v2629 = vsel %vm1623, %v2624, %v2628
    %2634 = vst [vmem:[#allocation7] sm:$0xff] %v2622
    %2635 = vst [vmem:[#allocation7 + $0x8] sm:$0xff] %v2625
    %2636 = vst [vmem:[#allocation7 + $0x30] sm:$0xff] %v2627
    %2637 = vst [vmem:[#allocation7 + $0x38] sm:$0xff] %v2629
    %v2638 = vld [vmem:[#allocation5 + $0x10] sm:$0xff]
    %v2639 = vld [vmem:[#allocation5 + $0x18] sm:$0xff]
    %v2640 = vld [vmem:[#allocation5 + $0x20] sm:$0xff]
    %v2641 = vld [vmem:[#allocation5 + $0x28] sm:$0xff]
    %2642 = vst [vmem:[#allocation7 + $0x10] sm:$0xff] %v2638
    %2643 = vst [vmem:[#allocation7 + $0x18] sm:$0xff] %v2639
    %2644 = vst [vmem:[#allocation7 + $0x40] sm:$0xff] %v2640
    %2645 = vst [vmem:[#allocation7 + $0x48] sm:$0xff] %v2641
    %v2646 = vld [vmem:[#allocation5 + $0x10] sm:$0xfe]
    %v2647 = vld [vmem:[#allocation5 + $0x18] sm:$0xfe]
    %v2648 = vld [vmem:[#allocation5 + $0x20] sm:$0xff]
    %v2649 = vld [vmem:[#allocation5 + $0x28] sm:$0xff]
    %v2650 = vld [vmem:[#allocation5 + $0x30] sm:$0x1]
    %v2651 = vld [vmem:[#allocation5 + $0x38] sm:$0x1]
    %vm2658 = vcmask 1046528
    %v2659 = vrot.slane %v2646, 1
    %v2660 = vrot.slane %v2648, 1
    %v2661 = vsel %vm2658, %v2659, %v2660
    %v2662 = vrot.slane %v2647, 1
    %v2663 = vrot.slane %v2649, 1
    %v2664 = vsel %vm2658, %v2662, %v2663
    %v2665 = vrot.slane %v2650, 1
    %v2666 = vsel %vm2658, %v2660, %v2665
    %v2667 = vrot.slane %v2651, 1
    %v2668 = vsel %vm2658, %v2663, %v2667
    %2673 = vst [vmem:[#allocation7 + $0x20] sm:$0xff] %v2661
    %2674 = vst [vmem:[#allocation7 + $0x28] sm:$0xff] %v2664
    %2675 = vst [vmem:[#allocation7 + $0x50] sm:$0xff] %v2666
    %2676 = vst [vmem:[#allocation7 + $0x58] sm:$0xff] %v2668
    %v2677 = vld [vmem:[%s97] sm:$0x80]
    %v2678 = vld [vmem:[%s97 + $0x8] sm:$0x80]
    %v2679 = vld [vmem:[%s97 + $0x10] sm:$0xff]
    %v2680 = vld [vmem:[%s97 + $0x18] sm:$0xff]
    %v2681 = vld [vmem:[%s97 + $0x20] sm:$0x7f]
    %v2682 = vld [vmem:[%s97 + $0x28] sm:$0x7f]
    %v2689 = vrot.slane %v2677, 7
    %v2690 = vrot.slane %v2679, 7
    %v2691 = vsel %vm1623, %v2689, %v2690
    %v2692 = vrot.slane %v2678, 7
    %v2693 = vrot.slane %v2680, 7
    %v2694 = vsel %vm1623, %v2692, %v2693
    %v2695 = vrot.slane %v2681, 7
    %v2696 = vsel %vm1623, %v2690, %v2695
    %v2697 = vrot.slane %v2682, 7
    %v2698 = vsel %vm1623, %v2693, %v2697
    %2703 = vst [vmem:[#allocation7 + $0x60] sm:$0xff] %v2691
    %2704 = vst [vmem:[#allocation7 + $0x68] sm:$0xff] %v2694
    %2705 = vst [vmem:[#allocation7 + $0x90] sm:$0xff] %v2696
    %2706 = vst [vmem:[#allocation7 + $0x98] sm:$0xff] %v2698
    %v2707 = vld [vmem:[%s97 + $0x10] sm:$0xff]
    %v2708 = vld [vmem:[%s97 + $0x18] sm:$0xff]
    %v2709 = vld [vmem:[%s97 + $0x20] sm:$0xff]
    %v2710 = vld [vmem:[%s97 + $0x28] sm:$0xff]
    %2711 = vst [vmem:[#allocation7 + $0x70] sm:$0xff] %v2707
    %2712 = vst [vmem:[#allocation7 + $0x78] sm:$0xff] %v2708
    %2713 = vst [vmem:[#allocation7 + $0xa0] sm:$0xff] %v2709
    %2714 = vst [vmem:[#allocation7 + $0xa8] sm:$0xff] %v2710
    %v2715 = vld [vmem:[%s97 + $0x10] sm:$0xfe]
    %v2716 = vld [vmem:[%s97 + $0x18] sm:$0xfe]
    %v2717 = vld [vmem:[%s97 + $0x20] sm:$0xff]
    %v2718 = vld [vmem:[%s97 + $0x28] sm:$0xff]
    %v2719 = vld [vmem:[%s97 + $0x30] sm:$0x1]
    %v2720 = vld [vmem:[%s97 + $0x38] sm:$0x1]
    %v2727 = vrot.slane %v2715, 1
    %v2728 = vrot.slane %v2717, 1
    %v2729 = vsel %vm2658, %v2727, %v2728
    %v2730 = vrot.slane %v2716, 1
    %v2731 = vrot.slane %v2718, 1
    %v2732 = vsel %vm2658, %v2730, %v2731
    %v2733 = vrot.slane %v2719, 1
    %v2734 = vsel %vm2658, %v2728, %v2733
    %v2735 = vrot.slane %v2720, 1
    %v2736 = vsel %vm2658, %v2731, %v2735
    %2741 = vst [vmem:[#allocation7 + $0x80] sm:$0xff] %v2729
    %2742 = vst [vmem:[#allocation7 + $0x88] sm:$0xff] %v2732
    %2743 = vst [vmem:[#allocation7 + $0xb0] sm:$0xff] %v2734
    %2744 = vst [vmem:[#allocation7 + $0xb8] sm:$0xff] %v2736
    %s2745 = smul.u32 768, 1
    %s2746 = sshll.u32 %s2745, 4
    %2747 = dma.done %s76, %s2746
    %v2748 = vld [vmem:[#allocation7] sm:$0xff]
    %v2749 = vld [vmem:[#allocation7 + $0x8] sm:$0xff]
    %v2750 = vld [vmem:[#allocation7 + $0x10] sm:$0xff]
    %v2751 = vld [vmem:[#allocation7 + $0x18] sm:$0xff]
    %v2752 = vld [vmem:[#allocation7 + $0x20] sm:$0xff]
    %v2753 = vld [vmem:[#allocation7 + $0x28] sm:$0xff]
    %v2754 = vld [vmem:[#allocation7 + $0x30] sm:$0xff]
    %v2755 = vld [vmem:[#allocation7 + $0x38] sm:$0xff]
    %v2756 = vld [vmem:[#allocation7 + $0x40] sm:$0xff]
    %v2757 = vld [vmem:[#allocation7 + $0x48] sm:$0xff]
    %v2758 = vld [vmem:[#allocation7 + $0x50] sm:$0xff]
    %v2759 = vld [vmem:[#allocation7 + $0x58] sm:$0xff]
    %v2760 = vld [vmem:[#allocation7 + $0x60] sm:$0xff]
    %v2761 = vld [vmem:[#allocation7 + $0x68] sm:$0xff]
    %v2762 = vld [vmem:[#allocation7 + $0x70] sm:$0xff]
    %v2763 = vld [vmem:[#allocation7 + $0x78] sm:$0xff]
    %v2764 = vld [vmem:[#allocation7 + $0x80] sm:$0xff]
    %v2765 = vld [vmem:[#allocation7 + $0x88] sm:$0xff]
    %v2766 = vld [vmem:[#allocation7 + $0x90] sm:$0xff]
    %v2767 = vld [vmem:[#allocation7 + $0x98] sm:$0xff]
    %v2768 = vld [vmem:[#allocation7 + $0xa0] sm:$0xff]
    %v2769 = vld [vmem:[#allocation7 + $0xa8] sm:$0xff]
    %v2770 = vld [vmem:[#allocation7 + $0xb0] sm:$0xff]
    %v2771 = vld [vmem:[#allocation7 + $0xb8] sm:$0xff]
    %v2772 = vld [vmem:[#allocation3] sm:$0xff]
    %v2773 = vld [vmem:[#allocation3 + $0x8] sm:$0xff]
    %v2774 = vld [vmem:[#allocation3 + $0x10] sm:$0xff]
    %v2775 = vld [vmem:[#allocation3 + $0x18] sm:$0xff]
    %v2776 = vld [vmem:[#allocation3 + $0x20] sm:$0xff]
    %v2777 = vld [vmem:[#allocation3 + $0x28] sm:$0xff]
    %v2778 = vld [vmem:[#allocation3 + $0x30] sm:$0xff]
    %v2779 = vld [vmem:[#allocation3 + $0x38] sm:$0xff]
    %v2780 = vld [vmem:[#allocation3 + $0x40] sm:$0xff]
    %v2781 = vld [vmem:[#allocation3 + $0x48] sm:$0xff]
    %v2782 = vld [vmem:[#allocation3 + $0x50] sm:$0xff]
    %v2783 = vld [vmem:[#allocation3 + $0x58] sm:$0xff]
    %v2784 = vld [vmem:[#allocation3 + $0x60] sm:$0xff]
    %v2785 = vld [vmem:[#allocation3 + $0x68] sm:$0xff]
    %v2786 = vld [vmem:[#allocation3 + $0x70] sm:$0xff]
    %v2787 = vld [vmem:[#allocation3 + $0x78] sm:$0xff]
    %v2788 = vld [vmem:[#allocation3 + $0x80] sm:$0xff]
    %v2789 = vld [vmem:[#allocation3 + $0x88] sm:$0xff]
    %v2790 = vld [vmem:[#allocation3 + $0x90] sm:$0xff]
    %v2791 = vld [vmem:[#allocation3 + $0x98] sm:$0xff]
    %v2792 = vld [vmem:[#allocation3 + $0xa0] sm:$0xff]
    %v2793 = vld [vmem:[#allocation3 + $0xa8] sm:$0xff]
    %v2794 = vld [vmem:[#allocation3 + $0xb0] sm:$0xff]
    %v2795 = vld [vmem:[#allocation3 + $0xb8] sm:$0xff]
    %v2796 = vld [vmem:[#allocation3 + $0xc0] sm:$0xff]
    %v2797 = vld [vmem:[#allocation3 + $0xc8] sm:$0xff]
    %v2798 = vld [vmem:[#allocation3 + $0xd0] sm:$0xff]
    %v2799 = vld [vmem:[#allocation3 + $0xd8] sm:$0xff]
    %v2800 = vld [vmem:[#allocation3 + $0xe0] sm:$0xff]
    %v2801 = vld [vmem:[#allocation3 + $0xe8] sm:$0xff]
    %v2802 = vld [vmem:[#allocation3 + $0xf0] sm:$0xff]
    %v2803 = vld [vmem:[#allocation3 + $0xf8] sm:$0xff]
    %v2804 = vld [vmem:[#allocation3 + $0x100] sm:$0xff]
    %v2805 = vld [vmem:[#allocation3 + $0x108] sm:$0xff]
    %v2806 = vld [vmem:[#allocation3 + $0x110] sm:$0xff]
    %v2807 = vld [vmem:[#allocation3 + $0x118] sm:$0xff]
    %v2808 = vld [vmem:[#allocation3 + $0x120] sm:$0xff]
    %v2809 = vld [vmem:[#allocation3 + $0x128] sm:$0xff]
    %v2810 = vld [vmem:[#allocation3 + $0x130] sm:$0xff]
    %v2811 = vld [vmem:[#allocation3 + $0x138] sm:$0xff]
    %v2812 = vld [vmem:[#allocation3 + $0x140] sm:$0xff]
    %v2813 = vld [vmem:[#allocation3 + $0x148] sm:$0xff]
    %v2814 = vld [vmem:[#allocation3 + $0x150] sm:$0xff]
    %v2815 = vld [vmem:[#allocation3 + $0x158] sm:$0xff]
    %v2816 = vld [vmem:[#allocation3 + $0x160] sm:$0xff]
    %v2817 = vld [vmem:[#allocation3 + $0x168] sm:$0xff]
    %v2818 = vld [vmem:[#allocation3 + $0x170] sm:$0xff]
    %v2819 = vld [vmem:[#allocation3 + $0x178] sm:$0xff]
    %v2820 = vld [vmem:[#allocation3 + $0x180] sm:$0xff]
    %v2821 = vld [vmem:[#allocation3 + $0x188] sm:$0xff]
    %v2822 = vld [vmem:[#allocation3 + $0x190] sm:$0xff]
    %v2823 = vld [vmem:[#allocation3 + $0x198] sm:$0xff]
    %v2824 = vld [vmem:[#allocation3 + $0x1a0] sm:$0xff]
    %v2825 = vld [vmem:[#allocation3 + $0x1a8] sm:$0xff]
    %v2826 = vld [vmem:[#allocation3 + $0x1b0] sm:$0xff]
    %v2827 = vld [vmem:[#allocation3 + $0x1b8] sm:$0xff]
    %v2828 = vld [vmem:[#allocation3 + $0x1c0] sm:$0xff]
    %v2829 = vld [vmem:[#allocation3 + $0x1c8] sm:$0xff]
    %v2830 = vld [vmem:[#allocation3 + $0x1d0] sm:$0xff]
    %v2831 = vld [vmem:[#allocation3 + $0x1d8] sm:$0xff]
    %v2832 = vld [vmem:[#allocation3 + $0x1e0] sm:$0xff]
    %v2833 = vld [vmem:[#allocation3 + $0x1e8] sm:$0xff]
    %v2834 = vld [vmem:[#allocation3 + $0x1f0] sm:$0xff]
    %v2835 = vld [vmem:[#allocation3 + $0x1f8] sm:$0xff]
    %v2836 = vld [vmem:[#allocation3 + $0x200] sm:$0xff]
    %v2837 = vld [vmem:[#allocation3 + $0x208] sm:$0xff]
    %v2838 = vld [vmem:[#allocation3 + $0x210] sm:$0xff]
    %v2839 = vld [vmem:[#allocation3 + $0x218] sm:$0xff]
    %v2840 = vld [vmem:[#allocation3 + $0x220] sm:$0xff]
    %v2841 = vld [vmem:[#allocation3 + $0x228] sm:$0xff]
    %v2842 = vld [vmem:[#allocation3 + $0x230] sm:$0xff]
    %v2843 = vld [vmem:[#allocation3 + $0x238] sm:$0xff]
    %v2844 = vld [vmem:[#allocation3 + $0x240] sm:$0xff]
    %v2845 = vld [vmem:[#allocation3 + $0x248] sm:$0xff]
    %v2846 = vld [vmem:[#allocation3 + $0x250] sm:$0xff]
    %v2847 = vld [vmem:[#allocation3 + $0x258] sm:$0xff]
    %v2848 = vld [vmem:[#allocation3 + $0x260] sm:$0xff]
    %v2849 = vld [vmem:[#allocation3 + $0x268] sm:$0xff]
    %v2850 = vld [vmem:[#allocation3 + $0x270] sm:$0xff]
    %v2851 = vld [vmem:[#allocation3 + $0x278] sm:$0xff]
    %v2852 = vld [vmem:[#allocation3 + $0x280] sm:$0xff]
    %v2853 = vld [vmem:[#allocation3 + $0x288] sm:$0xff]
    %v2854 = vld [vmem:[#allocation3 + $0x290] sm:$0xff]
    %v2855 = vld [vmem:[#allocation3 + $0x298] sm:$0xff]
    %v2856 = vld [vmem:[#allocation3 + $0x2a0] sm:$0xff]
    %v2857 = vld [vmem:[#allocation3 + $0x2a8] sm:$0xff]
    %v2858 = vld [vmem:[#allocation3 + $0x2b0] sm:$0xff]
    %v2859 = vld [vmem:[#allocation3 + $0x2b8] sm:$0xff]
    %v2860 = vld [vmem:[#allocation3 + $0x2c0] sm:$0xff]
    %v2861 = vld [vmem:[#allocation3 + $0x2c8] sm:$0xff]
    %v2862 = vld [vmem:[#allocation3 + $0x2d0] sm:$0xff]
    %v2863 = vld [vmem:[#allocation3 + $0x2d8] sm:$0xff]
    %v2864 = vld [vmem:[#allocation3 + $0x2e0] sm:$0xff]
    %v2865 = vld [vmem:[#allocation3 + $0x2e8] sm:$0xff]
    %v2866 = vld [vmem:[#allocation3 + $0x2f0] sm:$0xff]
    %v2867 = vld [vmem:[#allocation3 + $0x2f8] sm:$0xff]
    %2868 = vmatprep.subr.mxu0 0.0
    %2869 = vmatpush1.msra.mxu0 %v2772
    %2870 = vmatprep.subr.mxu0 0.0
    %2871 = vmatpush1.msra.mxu0 %v2773
    %2872 = vmatprep.subr.mxu0 0.0
    %2873 = vmatpush1.msra.mxu0 %v2774
    %2874 = vmatprep.subr.mxu0 0.0
    %2875 = vmatpush1.msra.mxu0 %v2775
    %2876 = vmatprep.subr.mxu0 0.0
    %2877 = vmatpush1.msra.mxu0 %v2776
    %2878 = vmatprep.subr.mxu0 0.0
    %2879 = vmatpush1.msra.mxu0 %v2777
    %2880 = vmatprep.subr.mxu0 0.0
    %2881 = vmatpush1.msra.mxu0 %v2778
    %2882 = vmatprep.subr.mxu0 0.0
    %2883 = vmatpush1.msra.mxu0 %v2779
    %2884 = vmatprep.subr.mxu0 0.0
    %2885 = vmatpush1.msra.mxu0 %v2780
    %2886 = vmatprep.subr.mxu0 0.0
    %2887 = vmatpush1.msra.mxu0 %v2781
    %2888 = vmatprep.subr.mxu0 0.0
    %2889 = vmatpush1.msra.mxu0 %v2782
    %2890 = vmatprep.subr.mxu0 0.0
    %2891 = vmatpush1.msra.mxu0 %v2783
    %2892 = vmatprep.subr.mxu0 0.0
    %2893 = vmatpush1.msra.mxu0 %v2784
    %2894 = vmatprep.subr.mxu0 0.0
    %2895 = vmatpush1.msra.mxu0 %v2785
    %2896 = vmatprep.subr.mxu0 0.0
    %2897 = vmatpush1.msra.mxu0 %v2786
    %2898 = vmatprep.subr.mxu0 0.0
    %2899 = vmatpush1.msra.mxu0 %v2787
    %2900 = vmatprep.subr.mxu0 0.0
    %2901 = vmatpush1.msra.mxu0 %v2788
    %2902 = vmatprep.subr.mxu0 0.0
    %2903 = vmatpush1.msra.mxu0 %v2789
    %2904 = vmatprep.subr.mxu0 0.0
    %2905 = vmatpush1.msra.mxu0 %v2790
    %2906 = vmatprep.subr.mxu0 0.0
    %2907 = vmatpush1.msra.mxu0 %v2791
    %2908 = vmatprep.subr.mxu0 0.0
    %2909 = vmatpush1.msra.mxu0 %v2792
    %2910 = vmatprep.subr.mxu0 0.0
    %2911 = vmatpush1.msra.mxu0 %v2793
    %2912 = vmatprep.subr.mxu0 0.0
    %2913 = vmatpush1.msra.mxu0 %v2794
    %2914 = vmatprep.subr.mxu0 0.0
    %2915 = vmatpush1.msra.mxu0 %v2795
    %2916 = vmatprep.subr.mxu0 0.0
    %2917 = vmatpush1.msra.mxu0 %v2796
    %2918 = vmatprep.subr.mxu0 0.0
    %2919 = vmatpush1.msra.mxu0 %v2797
    %2920 = vmatprep.subr.mxu0 0.0
    %2921 = vmatpush1.msra.mxu0 %v2798
    %2922 = vmatprep.subr.mxu0 0.0
    %2923 = vmatpush1.msra.mxu0 %v2799
    %2924 = vmatprep.subr.mxu0 0.0
    %2925 = vmatpush1.msra.mxu0 %v2800
    %2926 = vmatprep.subr.mxu0 0.0
    %2927 = vmatpush1.msra.mxu0 %v2801
    %2928 = vmatprep.subr.mxu0 0.0
    %2929 = vmatpush1.msra.mxu0 %v2802
    %2930 = vmatprep.subr.mxu0 0.0
    %2931 = vmatpush1.msra.mxu0 %v2803
    %2932 = vmatprep.mubr.f32.mxu0 %v2749
    %2933 = vmatmul.mubr.f32.gmra.mrb[0].mxu0 %v2748
    %v2934 = vpop.f32.mrb[0].mxu0
    %v2935 = vadd.f32 0.0, %v2934
    %v2936 = vpop.f32.mrb[0].mxu0
    %2937 = vmatprep.mubr.f32.mxu0 %v2755
    %2938 = vmatmul.mubr.f32.gmra.mrb[0].mxu0 %v2754
    %v2939 = vpop.f32.mrb[0].mxu0
    %v2940 = vadd.f32 0.0, %v2939
    %v2941 = vpop.f32.mrb[0].mxu0
    %2942 = vmatprep.mubr.f32.mxu0 %v2761
    %2943 = vmatmul.mubr.f32.gmra.mrb[0].mxu0 %v2760
    %v2944 = vpop.f32.mrb[0].mxu0
    %v2945 = vadd.f32 0.0, %v2944
    %v2946 = vpop.f32.mrb[0].mxu0
    %2947 = vmatprep.mubr.f32.mxu0 %v2767
    %2948 = vmatmul.mubr.f32.gmra.mrb[0].mxu0 %v2766
    %v2949 = vpop.f32.mrb[0].mxu0
    %v2950 = vadd.f32 0.0, %v2949
    %v2951 = vpop.f32.mrb[0].mxu0
    %2952 = vdwg.mxu0
    %2953 = vmatprep.subr.mxu0 0.0
    %2954 = vmatpush1.msra.mxu0 %v2804
    %2955 = vmatprep.subr.mxu0 0.0
    %2956 = vmatpush1.msra.mxu0 %v2805
    %2957 = vmatprep.subr.mxu0 0.0
    %2958 = vmatpush1.msra.mxu0 %v2806
    %2959 = vmatprep.subr.mxu0 0.0
    %2960 = vmatpush1.msra.mxu0 %v2807
    %2961 = vmatprep.subr.mxu0 0.0
    %2962 = vmatpush1.msra.mxu0 %v2808
    %2963 = vmatprep.subr.mxu0 0.0
    %2964 = vmatpush1.msra.mxu0 %v2809
    %2965 = vmatprep.subr.mxu0 0.0
    %2966 = vmatpush1.msra.mxu0 %v2810
    %2967 = vmatprep.subr.mxu0 0.0
    %2968 = vmatpush1.msra.mxu0 %v2811
    %2969 = vmatprep.subr.mxu0 0.0
    %2970 = vmatpush1.msra.mxu0 %v2812
    %2971 = vmatprep.subr.mxu0 0.0
    %2972 = vmatpush1.msra.mxu0 %v2813
    %2973 = vmatprep.subr.mxu0 0.0
    %2974 = vmatpush1.msra.mxu0 %v2814
    %2975 = vmatprep.subr.mxu0 0.0
    %2976 = vmatpush1.msra.mxu0 %v2815
    %2977 = vmatprep.subr.mxu0 0.0
    %2978 = vmatpush1.msra.mxu0 %v2816
    %2979 = vmatprep.subr.mxu0 0.0
    %2980 = vmatpush1.msra.mxu0 %v2817
    %2981 = vmatprep.subr.mxu0 0.0
    %2982 = vmatpush1.msra.mxu0 %v2818
    %2983 = vmatprep.subr.mxu0 0.0
    %2984 = vmatpush1.msra.mxu0 %v2819
    %2985 = vmatprep.subr.mxu0 0.0
    %2986 = vmatpush1.msra.mxu0 %v2820
    %2987 = vmatprep.subr.mxu0 0.0
    %2988 = vmatpush1.msra.mxu0 %v2821
    %2989 = vmatprep.subr.mxu0 0.0
    %2990 = vmatpush1.msra.mxu0 %v2822
    %2991 = vmatprep.subr.mxu0 0.0
    %2992 = vmatpush1.msra.mxu0 %v2823
    %2993 = vmatprep.subr.mxu0 0.0
    %2994 = vmatpush1.msra.mxu0 %v2824
    %2995 = vmatprep.subr.mxu0 0.0
    %2996 = vmatpush1.msra.mxu0 %v2825
    %2997 = vmatprep.subr.mxu0 0.0
    %2998 = vmatpush1.msra.mxu0 %v2826
    %2999 = vmatprep.subr.mxu0 0.0
    %3000 = vmatpush1.msra.mxu0 %v2827
    %3001 = vmatprep.subr.mxu0 0.0
    %3002 = vmatpush1.msra.mxu0 %v2828
    %3003 = vmatprep.subr.mxu0 0.0
    %3004 = vmatpush1.msra.mxu0 %v2829
    %3005 = vmatprep.subr.mxu0 0.0
    %3006 = vmatpush1.msra.mxu0 %v2830
    %3007 = vmatprep.subr.mxu0 0.0
    %3008 = vmatpush1.msra.mxu0 %v2831
    %3009 = vmatprep.subr.mxu0 0.0
    %3010 = vmatpush1.msra.mxu0 %v2832
    %3011 = vmatprep.subr.mxu0 0.0
    %3012 = vmatpush1.msra.mxu0 %v2833
    %3013 = vmatprep.subr.mxu0 0.0
    %3014 = vmatpush1.msra.mxu0 %v2834
    %3015 = vmatprep.subr.mxu0 0.0
    %3016 = vmatpush1.msra.mxu0 %v2835
    %3017 = vmatprep.mubr.f32.mxu0 %v2751
    %3018 = vmatmul.mubr.f32.gmra.mrb[0].mxu0 %v2750
    %v3019 = vpop.f32.mrb[0].mxu0
    %v3020 = vadd.f32 %v2935, %v3019
    %v3021 = vpop.f32.mrb[0].mxu0
    %3022 = vmatprep.mubr.f32.mxu0 %v2757
    %3023 = vmatmul.mubr.f32.gmra.mrb[0].mxu0 %v2756
    %v3024 = vpop.f32.mrb[0].mxu0
    %v3025 = vadd.f32 %v2940, %v3024
    %v3026 = vpop.f32.mrb[0].mxu0
    %3027 = vmatprep.mubr.f32.mxu0 %v2763
    %3028 = vmatmul.mubr.f32.gmra.mrb[0].mxu0 %v2762
    %v3029 = vpop.f32.mrb[0].mxu0
    %v3030 = vadd.f32 %v2945, %v3029
    %v3031 = vpop.f32.mrb[0].mxu0
    %3032 = vmatprep.mubr.f32.mxu0 %v2769
    %3033 = vmatmul.mubr.f32.gmra.mrb[0].mxu0 %v2768
    %v3034 = vpop.f32.mrb[0].mxu0
    %v3035 = vadd.f32 %v2950, %v3034
    %v3036 = vpop.f32.mrb[0].mxu0
    %3037 = vdwg.mxu0
    %3038 = vmatprep.subr.mxu0 0.0
    %3039 = vmatpush1.msra.mxu0 %v2836
    %3040 = vmatprep.subr.mxu0 0.0
    %3041 = vmatpush1.msra.mxu0 %v2837
    %3042 = vmatprep.subr.mxu0 0.0
    %3043 = vmatpush1.msra.mxu0 %v2838
    %3044 = vmatprep.subr.mxu0 0.0
    %3045 = vmatpush1.msra.mxu0 %v2839
    %3046 = vmatprep.subr.mxu0 0.0
    %3047 = vmatpush1.msra.mxu0 %v2840
    %3048 = vmatprep.subr.mxu0 0.0
    %3049 = vmatpush1.msra.mxu0 %v2841
    %3050 = vmatprep.subr.mxu0 0.0
    %3051 = vmatpush1.msra.mxu0 %v2842
    %3052 = vmatprep.subr.mxu0 0.0
    %3053 = vmatpush1.msra.mxu0 %v2843
    %3054 = vmatprep.subr.mxu0 0.0
    %3055 = vmatpush1.msra.mxu0 %v2844
    %3056 = vmatprep.subr.mxu0 0.0
    %3057 = vmatpush1.msra.mxu0 %v2845
    %3058 = vmatprep.subr.mxu0 0.0
    %3059 = vmatpush1.msra.mxu0 %v2846
    %3060 = vmatprep.subr.mxu0 0.0
    %3061 = vmatpush1.msra.mxu0 %v2847
    %3062 = vmatprep.subr.mxu0 0.0
    %3063 = vmatpush1.msra.mxu0 %v2848
    %3064 = vmatprep.subr.mxu0 0.0
    %3065 = vmatpush1.msra.mxu0 %v2849
    %3066 = vmatprep.subr.mxu0 0.0
    %3067 = vmatpush1.msra.mxu0 %v2850
    %3068 = vmatprep.subr.mxu0 0.0
    %3069 = vmatpush1.msra.mxu0 %v2851
    %3070 = vmatprep.subr.mxu0 0.0
    %3071 = vmatpush1.msra.mxu0 %v2852
    %3072 = vmatprep.subr.mxu0 0.0
    %3073 = vmatpush1.msra.mxu0 %v2853
    %3074 = vmatprep.subr.mxu0 0.0
    %3075 = vmatpush1.msra.mxu0 %v2854
    %3076 = vmatprep.subr.mxu0 0.0
    %3077 = vmatpush1.msra.mxu0 %v2855
    %3078 = vmatprep.subr.mxu0 0.0
    %3079 = vmatpush1.msra.mxu0 %v2856
    %3080 = vmatprep.subr.mxu0 0.0
    %3081 = vmatpush1.msra.mxu0 %v2857
    %3082 = vmatprep.subr.mxu0 0.0
    %3083 = vmatpush1.msra.mxu0 %v2858
    %3084 = vmatprep.subr.mxu0 0.0
    %3085 = vmatpush1.msra.mxu0 %v2859
    %3086 = vmatprep.subr.mxu0 0.0
    %3087 = vmatpush1.msra.mxu0 %v2860
    %3088 = vmatprep.subr.mxu0 0.0
    %3089 = vmatpush1.msra.mxu0 %v2861
    %3090 = vmatprep.subr.mxu0 0.0
    %3091 = vmatpush1.msra.mxu0 %v2862
    %3092 = vmatprep.subr.mxu0 0.0
    %3093 = vmatpush1.msra.mxu0 %v2863
    %3094 = vmatprep.subr.mxu0 0.0
    %3095 = vmatpush1.msra.mxu0 %v2864
    %3096 = vmatprep.subr.mxu0 0.0
    %3097 = vmatpush1.msra.mxu0 %v2865
    %3098 = vmatprep.subr.mxu0 0.0
    %3099 = vmatpush1.msra.mxu0 %v2866
    %3100 = vmatprep.subr.mxu0 0.0
    %3101 = vmatpush1.msra.mxu0 %v2867
    %3102 = vmatprep.mubr.f32.mxu0 %v2753
    %3103 = vmatmul.mubr.f32.gmra.mrb[0].mxu0 %v2752
    %v3104 = vpop.f32.mrb[0].mxu0
    %v3105 = vadd.f32 %v3020, %v3104
    %v3106 = vpop.f32.mrb[0].mxu0
    %3107 = vmatprep.mubr.f32.mxu0 %v2759
    %3108 = vmatmul.mubr.f32.gmra.mrb[0].mxu0 %v2758
    %v3109 = vpop.f32.mrb[0].mxu0
    %v3110 = vadd.f32 %v3025, %v3109
    %v3111 = vpop.f32.mrb[0].mxu0
    %3112 = vmatprep.mubr.f32.mxu0 %v2765
    %3113 = vmatmul.mubr.f32.gmra.mrb[0].mxu0 %v2764
    %v3114 = vpop.f32.mrb[0].mxu0
    %v3115 = vadd.f32 %v3030, %v3114
    %v3116 = vpop.f32.mrb[0].mxu0
    %3117 = vmatprep.mubr.f32.mxu0 %v2771
    %3118 = vmatmul.mubr.f32.gmra.mrb[0].mxu0 %v2770
    %v3119 = vpop.f32.mrb[0].mxu0
    %v3120 = vadd.f32 %v3035, %v3119
    %v3121 = vpop.f32.mrb[0].mxu0
    %3122 = vdwg.mxu0
    %v3123 = vld [vmem:[%s16] sm:$0x1]
    %v3125 = vlaneseq
    %v3126 = vshrl.u32 %v3125, 7
    %v3127 = vsub.s32 0, %v3126
    %v3128 = vrot.slane %v3123, %v3127
    %v3130 = vmul.f32 %v3105, %v3128
    %v3131 = vmul.f32 %v3110, %v3128
    %v3132 = vmul.f32 %v3115, %v3128
    %v3133 = vmul.f32 %v3120, %v3128
    %v3134 = vld [vmem:[%s17] sm:$0x1]
    %v3136 = vlaneseq
    %v3137 = vshrl.u32 %v3136, 7
    %v3138 = vsub.s32 0, %v3137
    %v3139 = vrot.slane %v3134, %v3138
    %v3141 = vadd.f32 %v3130, %v3139
    %v3142 = vadd.f32 %v3131, %v3139
    %v3143 = vadd.f32 %v3132, %v3139
    %v3144 = vadd.f32 %v3133, %v3139
    %v3145 = vmax.f32 %v3141, 0.0
    %v3146 = vmax.f32 %v3142, 0.0
    %v3147 = vmax.f32 %v3143, 0.0
    %v3148 = vmax.f32 %v3144, 0.0
    %v3149 = vadd.f32 %v3145, %v3146
    %v3150 = vrot.slane %v3149, 4
    %v3151 = vadd.f32 %v3149, %v3150
    %v3152 = vrot.slane %v3151, 2
    %v3153 = vadd.f32 %v3151, %v3152
    %v3154 = vrot.slane %v3153, 1
    %v3155 = vadd.f32 %v3153, %v3154
    %v3156 = vmul.f32 %v3155, %v1613
    %v3157 = vadd.f32 %v3147, %v3148
    %v3158 = vrot.slane %v3157, 4
    %v3159 = vadd.f32 %v3157, %v3158
    %v3160 = vrot.slane %v3159, 2
    %v3161 = vadd.f32 %v3159, %v3160
    %v3162 = vrot.slane %v3161, 1
    %v3163 = vadd.f32 %v3161, %v3162
    %v3164 = vmul.f32 %v3163, %v1613
    %v3165 = vsel %vm1623, %v3156, %v3164
    %v3166 = vld [vmem:[%s18] sm:$0xff]
    %v3167 = vld [vmem:[%s19] sm:$0xff]
    %v3168 = vld [vmem:[%s19 + $0x8] sm:$0xff]
    %v3169 = vld [vmem:[%s19 + $0x10] sm:$0xff]
    %v3170 = vld [vmem:[%s19 + $0x18] sm:$0xff]
    %v3171 = vld [vmem:[%s19 + $0x20] sm:$0xff]
    %v3172 = vld [vmem:[%s19 + $0x28] sm:$0xff]
    %v3173 = vld [vmem:[%s19 + $0x30] sm:$0xff]
    %v3174 = vld [vmem:[%s19 + $0x38] sm:$0xff]
    %v3175 = vld [vmem:[%s19 + $0x40] sm:$0xff]
    %v3176 = vld [vmem:[%s19 + $0x48] sm:$0xff]
    %v3177 = vld [vmem:[%s19 + $0x50] sm:$0xff]
    %v3178 = vld [vmem:[%s19 + $0x58] sm:$0xff]
    %v3179 = vld [vmem:[%s19 + $0x60] sm:$0xff]
    %v3180 = vld [vmem:[%s19 + $0x68] sm:$0xff]
    %v3181 = vld [vmem:[%s19 + $0x70] sm:$0xff]
    %v3182 = vld [vmem:[%s19 + $0x78] sm:$0xff]
    %3183 = vmatprep.subr.mxu0 0.0
    %3184 = vmatpush1.msra.mxu0 %v3167
    %3185 = vmatprep.subr.mxu0 0.0
    %3186 = vmatpush1.msra.mxu0 %v3168
    %3187 = vmatprep.subr.mxu0 0.0
    %3188 = vmatpush1.msra.mxu0 %v3169
    %3189 = vmatprep.subr.mxu0 0.0
    %3190 = vmatpush1.msra.mxu0 %v3170
    %3191 = vmatprep.subr.mxu0 0.0
    %3192 = vmatpush1.msra.mxu0 %v3171
    %3193 = vmatprep.subr.mxu0 0.0
    %3194 = vmatpush1.msra.mxu0 %v3172
    %3195 = vmatprep.subr.mxu0 0.0
    %3196 = vmatpush1.msra.mxu0 %v3173
    %3197 = vmatprep.subr.mxu0 0.0
    %3198 = vmatpush1.msra.mxu0 %v3174
    %3199 = vmatprep.subr.mxu0 0.0
    %3200 = vmatpush1.msra.mxu0 %v3175
    %3201 = vmatprep.subr.mxu0 0.0
    %3202 = vmatpush1.msra.mxu0 %v3176
    %3203 = vmatprep.subr.mxu0 0.0
    %3204 = vmatpush1.msra.mxu0 %v3177
    %3205 = vmatprep.subr.mxu0 0.0
    %3206 = vmatpush1.msra.mxu0 %v3178
    %3207 = vmatprep.subr.mxu0 0.0
    %3208 = vmatpush1.msra.mxu0 %v3179
    %3209 = vmatprep.subr.mxu0 0.0
    %3210 = vmatpush1.msra.mxu0 %v3180
    %3211 = vmatprep.subr.mxu0 0.0
    %3212 = vmatpush1.msra.mxu0 %v3181
    %3213 = vmatprep.subr.mxu0 0.0
    %3214 = vmatpush1.msra.mxu0 %v3182
    %3215 = vmatprep.subr.mxu0 0.0
    %3216 = vmatpush1.msra.mxu0 0.0
    %3217 = vmatprep.subr.mxu0 0.0
    %3218 = vmatpush1.msra.mxu0 0.0
    %3219 = vmatprep.subr.mxu0 0.0
    %3220 = vmatpush1.msra.mxu0 0.0
    %3221 = vmatprep.subr.mxu0 0.0
    %3222 = vmatpush1.msra.mxu0 0.0
    %3223 = vmatprep.subr.mxu0 0.0
    %3224 = vmatpush1.msra.mxu0 0.0
    %3225 = vmatprep.subr.mxu0 0.0
    %3226 = vmatpush1.msra.mxu0 0.0
    %3227 = vmatprep.subr.mxu0 0.0
    %3228 = vmatpush1.msra.mxu0 0.0
    %3229 = vmatprep.subr.mxu0 0.0
    %3230 = vmatpush1.msra.mxu0 0.0
    %3231 = vmatprep.subr.mxu0 0.0
    %3232 = vmatpush1.msra.mxu0 0.0
    %3233 = vmatprep.subr.mxu0 0.0
    %3234 = vmatpush1.msra.mxu0 0.0
    %3235 = vmatprep.subr.mxu0 0.0
    %3236 = vmatpush1.msra.mxu0 0.0
    %3237 = vmatprep.subr.mxu0 0.0
    %3238 = vmatpush1.msra.mxu0 0.0
    %3239 = vmatprep.subr.mxu0 0.0
    %3240 = vmatpush1.msra.mxu0 0.0
    %3241 = vmatprep.subr.mxu0 0.0
    %3242 = vmatpush1.msra.mxu0 0.0
    %3243 = vmatprep.subr.mxu0 0.0
    %3244 = vmatpush1.msra.mxu0 0.0
    %3245 = vmatprep.subr.mxu0 0.0
    %3246 = vmatpush1.msra.mxu0 0.0
    %3247 = vmatprep.mubr.f32.mxu0 0.0
    %3248 = vmatmul.mubr.f32.gmra.mrb[0].mxu0 %v3165
    %v3249 = vpop.f32.mrb[0].mxu0
    %v3250 = vadd.f32 0.0, %v3249
    %v3251 = vpop.f32.mrb[0].mxu0
    %3252 = vdwg.mxu0
    %v3254 = vrot.slane %v1473, 6
    %3255 = vrot.lane.b32.xlu0 %v3254, 104
    %v3256 = vpop.permute.xlu0 %3255
    %v3257 = vsel %vm1713, %v3256, 0
    %3259 = vmatprep.subr.mxu0 0.0
    %3260 = vmatpush1.msra.mxu0 %v3166
    %3261 = vmatprep.subr.mxu0 0.0
    %3262 = vmatpush1.msra.mxu0 0.0
    %3263 = vmatprep.subr.mxu0 0.0
    %3264 = vmatpush1.msra.mxu0 0.0
    %3265 = vmatprep.subr.mxu0 0.0
    %3266 = vmatpush1.msra.mxu0 0.0
    %3267 = vmatprep.subr.mxu0 0.0
    %3268 = vmatpush1.msra.mxu0 0.0
    %3269 = vmatprep.subr.mxu0 0.0
    %3270 = vmatpush1.msra.mxu0 0.0
    %3271 = vmatprep.subr.mxu0 0.0
    %3272 = vmatpush1.msra.mxu0 0.0
    %3273 = vmatprep.subr.mxu0 0.0
    %3274 = vmatpush1.msra.mxu0 0.0
    %3275 = vmatprep.subr.mxu0 0.0
    %3276 = vmatpush1.msra.mxu0 0.0
    %3277 = vmatprep.subr.mxu0 0.0
    %3278 = vmatpush1.msra.mxu0 0.0
    %3279 = vmatprep.subr.mxu0 0.0
    %3280 = vmatpush1.msra.mxu0 0.0
    %3281 = vmatprep.subr.mxu0 0.0
    %3282 = vmatpush1.msra.mxu0 0.0
    %3283 = vmatprep.subr.mxu0 0.0
    %3284 = vmatpush1.msra.mxu0 0.0
    %3285 = vmatprep.subr.mxu0 0.0
    %3286 = vmatpush1.msra.mxu0 0.0
    %3287 = vmatprep.subr.mxu0 0.0
    %3288 = vmatpush1.msra.mxu0 0.0
    %3289 = vmatprep.subr.mxu0 0.0
    %3290 = vmatpush1.msra.mxu0 0.0
    %3291 = vmatprep.subr.mxu0 0.0
    %3292 = vmatpush1.msra.mxu0 0.0
    %3293 = vmatprep.subr.mxu0 0.0
    %3294 = vmatpush1.msra.mxu0 0.0
    %3295 = vmatprep.subr.mxu0 0.0
    %3296 = vmatpush1.msra.mxu0 0.0
    %3297 = vmatprep.subr.mxu0 0.0
    %3298 = vmatpush1.msra.mxu0 0.0
    %3299 = vmatprep.subr.mxu0 0.0
    %3300 = vmatpush1.msra.mxu0 0.0
    %3301 = vmatprep.subr.mxu0 0.0
    %3302 = vmatpush1.msra.mxu0 0.0
    %3303 = vmatprep.subr.mxu0 0.0
    %3304 = vmatpush1.msra.mxu0 0.0
    %3305 = vmatprep.subr.mxu0 0.0
    %3306 = vmatpush1.msra.mxu0 0.0
    %3307 = vmatprep.subr.mxu0 0.0
    %3308 = vmatpush1.msra.mxu0 0.0
    %3309 = vmatprep.subr.mxu0 0.0
    %3310 = vmatpush1.msra.mxu0 0.0
    %3311 = vmatprep.subr.mxu0 0.0
    %3312 = vmatpush1.msra.mxu0 0.0
    %3313 = vmatprep.subr.mxu0 0.0
    %3314 = vmatpush1.msra.mxu0 0.0
    %3315 = vmatprep.subr.mxu0 0.0
    %3316 = vmatpush1.msra.mxu0 0.0
    %3317 = vmatprep.subr.mxu0 0.0
    %3318 = vmatpush1.msra.mxu0 0.0
    %3319 = vmatprep.subr.mxu0 0.0
    %3320 = vmatpush1.msra.mxu0 0.0
    %3321 = vmatprep.subr.mxu0 0.0
    %3322 = vmatpush1.msra.mxu0 0.0
    %3323 = vmatprep.mubr.f32.mxu0 0.0
    %3324 = vmatmul.mubr.f32.gmra.mrb[0].mxu0 %v3257
    %v3325 = vpop.f32.mrb[0].mxu0
    %v3326 = vadd.f32 %v3250, %v3325
    %v3327 = vpop.f32.mrb[0].mxu0
    %3328 = vdwg.mxu0
    %v3329 = vld [vmem:[%s20] sm:$0x1]
    %v3331 = vlaneseq
    %v3332 = vshrl.u32 %v3331, 7
    %v3333 = vsub.s32 0, %v3332
    %v3334 = vrot.slane %v3329, %v3333
    %v3336 = vadd.f32 %v3326, %v3334
    %vm3337 = vcmask 17408
    %3338 = vst.msk [vmem:[#allocation9] sm:$0x3] %vm3337, %v3336
    // Predicated region
    $region86: #{tpu_custom_call.1} parent=1 // pred_check
      _
    $region87: #{tpu_custom_call.1} parent=1 // pred_check_branch
      %3340 = sbr.rel (0) target = $region89
    $region88: #{tpu_custom_call.1} parent=1 // pred_region
      %s3342 = ssub.s32 32, 32
      %3343 = vsyncadd [#allocation10], %s3342
      %s3345 = sshll.u32 [#allocation9], 4
      %s3346 = int_to_ptr.vmem [resolvable:$true] %s3345
      %3348 = dma.vmem_to_hbm [thread:$0]  %s3346, 32, %s21, [#allocation10]
    $region89: #{tpu_custom_call.1} parent=1 // pred_fallthru
      _
    // Predicated region
    $region90: #{tpu_custom_call.1} parent=1 // pred_check
      _
    $region91: #{tpu_custom_call.1} parent=1 // pred_check_branch
      %3350 = sbr.rel (0) target = $region93
    $region92: #{tpu_custom_call.1} parent=1 // pred_region
      %3351 = dma.done [#allocation10], 32
    $region93: #{tpu_custom_call.1} parent=1 // pred_fallthru
      _
    %3352 = vsyncpa [#allocation10], 1
  %3353 = vsyncmov [#allocation8]
  %s3354 = vpop.sfrf %3353
  %p3355 = scmp.eq.s32.totalorder %s3354, 0
  %p3356 = pneg %p3355
  %3358 = shalt.err (%p3356)
  %s3359 = scalar_lea.sflag [#allocation8], 1
  %3360 = vsyncmov %s3359
  %s3361 = vpop.sfrf %3360
  %p3362 = scmp.eq.s32.totalorder %s3361, 0
  %p3363 = pneg %p3362
  %3365 = shalt.err (%p3363)

</llo_original>
